<compile_context>
chip_gen: v6e
topology: v6e:2x2x1
jax: 0.10.0
libtpu: 0.0.40
codegen_flags: <defaults>
</compile_context>

<pallas_src>
import jax
import jax.numpy as jnp
from jax.experimental import pallas as pl
from jax.experimental.pallas import tpu as pltpu

# ----- static configuration (StarNet constructor args, small test sizes) -----
B = 2              # batch
L = 64             # num_fluxes
C1, C2 = 4, 16     # num_filters
K = 8              # filter_length
P = 4              # pool_length
H1, H2 = 64, 32    # num_hidden
NL = 3             # num_labels

L1 = L - K + 1                 # conv1 output length (valid)  -> 57
L2 = L1 - K + 1                # conv2 output length (valid)  -> 50
LP = (L2 - P) // P + 1         # maxpool(P, P) output length  -> 12
FLAT = C2 * LP                 # flattened feature size       -> 192

L1P = 64                       # conv1 positions computed (L1=57 padded to 64)
XBIAS = L1P                    # row of the x slab that holds the constant 1.0
LX = L1P + 8                   # 72 = 64 flux rows + bias row + zero pad
QP = 16                        # h1 rows per channel per conv2 matmul (15 used)
GJ = 2                         # pool groups covered per conv2 RHS
NJ = LP // GJ                  # 6 conv2 RHS assemblies per grid step
DT = GJ * P                    # 8 conv2 output positions per RHS
KC2 = C1 * QP + 8              # 72 = conv2 contraction (64 h1 rows + bias rows)
FLATP = FLAT + 8               # 200 = pool rows + bias rows
NLP = 8                        # num_labels padded to one sublane tile
TB = 128                       # batch tile = lane width (256 also OK v6e/v7x)


def starnet_kernel(x_ref, w1b_ref, w2b_ref, wfc1_ref, wfc2_ref, bfc2_ref,
                   wout_ref, bout_ref, out_ref, h1_scr, pool_scr):
    # x_ref   : (LX, TB)        x_ref[t, b] = flux t of sample b; row XBIAS = 1
    # w1b_ref : (C1*L1P, LX)    banded conv1 weights, bias folded into col XBIAS
    # w2b_ref : (DT*C2, KC2)    banded conv2 weights, bias folded into col C1*QP
    # scratch : h1_scr (C1*L1P, TB), pool_scr (FLATP, TB)

    ones_row = (jax.lax.broadcasted_iota(jnp.int32, (8, TB), 0) == 0
                ).astype(jnp.float32)                        # row 0 = 1, rest 0

    # ---- conv1 + ReLU: one banded MXU matmul per output channel ----
    xv = x_ref[...]                                          # (LX, TB)
    for c1 in range(C1):
        z1 = jnp.dot(w1b_ref[pl.ds(c1 * L1P, L1P), :], xv,
                     preferred_element_type=jnp.float32)     # (L1P, TB)
        h1_scr[pl.ds(c1 * L1P, L1P), :] = jnp.maximum(z1, 0.0)

    # ---- conv2 + ReLU + maxpool(P,P): banded MXU matmuls ----
    # Each RHS covers DT=8 consecutive conv2 positions (= 2 pool windows): it
    # stacks QP=16 consecutive h1 rows per input channel plus a ones block for
    # the bias.  All sublane offsets are multiples of 8 (no shifted loads).
    for jp in range(NJ):
        rhs = jnp.concatenate(
            [h1_scr[pl.ds(c1 * L1P + DT * jp, QP), :] for c1 in range(C1)]
            + [ones_row], axis=0)                            # (KC2, TB)
        for g in range(GJ):
            z = jnp.maximum(
                jnp.dot(w2b_ref[pl.ds((g * P) * C2, P * C2), :], rhs,
                        preferred_element_type=jnp.float32), 0.0)   # (P*C2, TB)
            m = z[0:C2]
            for p in range(1, P):                            # max over pool window
                m = jnp.maximum(m, z[p * C2:(p + 1) * C2])
            pool_scr[pl.ds((GJ * jp + g) * C2, C2), :] = m   # row = j*C2 + c2
    pool_scr[pl.ds(FLAT, 8), :] = ones_row                   # fc1 bias rows

    # ---- fused pool->fc1, fc2, output head: lane-dense MXU matmuls ----
    a3 = jnp.maximum(jnp.dot(wfc1_ref[...], pool_scr[...],
                             preferred_element_type=jnp.float32), 0.0)   # (H1,TB)
    a4 = jnp.maximum(jnp.dot(wfc2_ref[...], a3,
                             preferred_element_type=jnp.float32)
                     + bfc2_ref[...], 0.0)                               # (H2,TB)
    out_ref[...] = (jnp.dot(wout_ref[...], a4,
                            preferred_element_type=jnp.float32)
                    + bout_ref[...])                                     # (NLP,TB)


def _banded(weights, n_pos, n_cols, k):
    """band[..., t, q] = weights[..., q - t] if 0 <= q - t < k else 0."""
    off = jnp.arange(n_cols)[None, :] - jnp.arange(n_pos)[:, None]
    valid = (off >= 0) & (off < k)
    gathered = weights[..., jnp.clip(off, 0, k - 1)]
    return jnp.where(valid, gathered, 0.0)


def starnet_forward(x, params):
    (w1, b1, w2, b2, wfc1, bfc1, wfc2, bfc2, wout, bout) = params
    x2d = x[:, 0, :].astype(jnp.float32)                     # (B, L)
    bsz = x2d.shape[0]
    bpad = TB * ((bsz + TB - 1) // TB)

    # Input slab: flux position on sublanes, batch on lanes; row XBIAS = 1.0
    # feeds the folded conv1 bias, remaining pad rows are 0.
    xp = jnp.pad(x2d, ((0, bpad - bsz), (0, LX - L)))
    xp = xp.at[:, XBIAS].set(1.0)
    xt = xp.T                                                 # (LX, bpad)

    # conv1 -> banded (C1*L1P, LX) weight; bias folded into column XBIAS.
    w1f = w1[:, 0, :].astype(jnp.float32)                     # (C1, K)
    w1band = _banded(w1f, L1P, LX, K)                         # (C1, L1P, LX)
    w1band = w1band.at[:, :, XBIAS].set(b1.astype(jnp.float32)[:, None])
    w1big = w1band.reshape(C1 * L1P, LX)

    # conv2 -> banded (DT*C2, KC2) weight over DT=8 output positions; columns
    # are (c1, q in [0,QP)) plus a bias column at C1*QP, then zero pad.
    w2band = _banded(w2.astype(jnp.float32), DT, QP, K)       # (C2, C1, DT, QP)
    w2band = jnp.transpose(w2band, (2, 0, 1, 3)).reshape(DT * C2, C1 * QP)
    b2rep = jnp.tile(b2.astype(jnp.float32), DT)[:, None]     # (DT*C2, 1)
    w2big = jnp.concatenate(
        [w2band, b2rep,
         jnp.zeros((DT * C2, KC2 - C1 * QP - 1), jnp.float32)], axis=1)

    # fc1: permute PyTorch flatten order (c2*LP + j) -> kernel row (j*C2 + c2);
    # bias folded into column FLAT (the pool-scratch ones row).
    wfc1_perm = jnp.transpose(
        wfc1.astype(jnp.float32).reshape(H1, C2, LP), (0, 2, 1)).reshape(H1, FLAT)
    wfc1p = jnp.concatenate(
        [wfc1_perm, bfc1.astype(jnp.float32)[:, None],
         jnp.zeros((H1, FLATP - FLAT - 1), jnp.float32)], axis=1)   # (H1, FLATP)

    wfc2_m = wfc2.astype(jnp.float32)                         # (H2, H1)
    bfc2_c = bfc2.astype(jnp.float32).reshape(H2, 1)
    wout_p = jnp.pad(wout.astype(jnp.float32), ((0, NLP - NL), (0, 0)))
    bout_p = jnp.pad(bout.astype(jnp.float32), (0, NLP - NL)).reshape(NLP, 1)

    out_t = pl.pallas_call(
        starnet_kernel,
        out_shape=jax.ShapeDtypeStruct((NLP, bpad), jnp.float32),
        grid=(bpad // TB,),
        in_specs=[
            pl.BlockSpec((LX, TB), lambda i: (0, i)),             # x slab
            pl.BlockSpec((C1 * L1P, LX), lambda i: (0, 0)),       # conv1 band
            pl.BlockSpec((DT * C2, KC2), lambda i: (0, 0)),       # conv2 band
            pl.BlockSpec((H1, FLATP), lambda i: (0, 0)),          # fc1 (+bias col)
            pl.BlockSpec((H2, H1), lambda i: (0, 0)),             # fc2
            pl.BlockSpec((H2, 1), lambda i: (0, 0)),              # fc2 bias
            pl.BlockSpec((NLP, H2), lambda i: (0, 0)),            # out (padded)
            pl.BlockSpec((NLP, 1), lambda i: (0, 0)),             # out bias
        ],
        out_specs=pl.BlockSpec((NLP, TB), lambda i: (0, i)),
        scratch_shapes=[pltpu.VMEM((C1 * L1P, TB), jnp.float32),   # h1
                        pltpu.VMEM((FLATP, TB), jnp.float32)],     # pooled
        compiler_params=pltpu.CompilerParams(
            dimension_semantics=("parallel",)),
    )(xt, w1big, w2big, wfc1p, wfc2_m, bfc2_c, wout_p, bout_p)

    return out_t[:NL, :bsz].T                                 # (B, NL)


def starnet_reference(x, params):
    """Pure-JAX reference mirroring the PyTorch forward semantics."""
    (w1, b1, w2, b2, wfc1, bfc1, wfc2, bfc2, wout, bout) = params
    bsz = x.shape[0]
    x0 = x[:, 0, :]
    p1 = jnp.stack([x0[:, k:k + L1] for k in range(K)], axis=-1)      # (B,L1,K)
    h1 = jax.nn.relu(jnp.einsum('blk,ok->bol', p1, w1[:, 0, :])
                     + b1[None, :, None])                             # (B,C1,L1)
    p2 = jnp.stack([h1[:, :, k:k + L2] for k in range(K)], axis=-1)   # (B,C1,L2,K)
    h2 = jax.nn.relu(jnp.einsum('bclk,ock->bol', p2, w2)
                     + b2[None, :, None])                             # (B,C2,L2)
    pooled = jnp.max(h2[:, :, :LP * P].reshape(bsz, C2, LP, P), axis=-1)
    flat = pooled.reshape(bsz, FLAT)
    h3 = jax.nn.relu(flat @ wfc1.T + bfc1)
    h4 = jax.nn.relu(h3 @ wfc2.T + bfc2)
    return h4 @ wout.T + bout


if __name__ == "__main__":
    key = jax.random.PRNGKey(0)
    keys = jax.random.split(key, 11)

    def init(k, shape, scale):
        return (scale * jax.random.normal(k, shape)).astype(jnp.float32)

    w1 = init(keys[0], (C1, 1, K), 0.2)
    b1 = init(keys[1], (C1,), 0.1)
    w2 = init(keys[2], (C2, C1, K), 0.2)
    b2 = init(keys[3], (C2,), 0.1)
    wfc1 = init(keys[4], (H1, FLAT), 0.05)
    bfc1 = init(keys[5], (H1,), 0.05)
    wfc2 = init(keys[6], (H2, H1), 0.1)
    bfc2 = init(keys[7], (H2,), 0.05)
    wout = init(keys[8], (NL, H2), 0.1)
    bout = init(keys[9], (NL,), 0.05)
    params = (w1, b1, w2, b2, wfc1, bfc1, wfc2, bfc2, wout, bout)

    x = init(keys[10], (B, 1, L), 1.0)   # (batch, 1 channel, num_fluxes)

    out = jax.jit(starnet_forward)(x, params)
    out = jax.block_until_ready(out)

    ref = starnet_reference(x, params)
    assert out.shape == (B, NL), out.shape
    if not jnp.allclose(out, ref, atol=1e-2, rtol=1e-2):
        raise AssertionError(f"Pallas/ref mismatch:\n{out}\nvs\n{ref}")
    print("KERNEL_OK")
</pallas_src>

<mosaic_0001>
module attributes {stable_mosaic.version = 11 : i64} {
  func.func @starnet_kernel(%arg0: i32, %arg1: memref<72x128xf32, #tpu.memory_space<vmem>>, %arg2: memref<256x72xf32, #tpu.memory_space<vmem>>, %arg3: memref<128x72xf32, #tpu.memory_space<vmem>>, %arg4: memref<64x200xf32, #tpu.memory_space<vmem>>, %arg5: memref<32x64xf32, #tpu.memory_space<vmem>>, %arg6: memref<32x1xf32, #tpu.memory_space<vmem>>, %arg7: memref<8x32xf32, #tpu.memory_space<vmem>>, %arg8: memref<8x1xf32, #tpu.memory_space<vmem>>, %arg9: memref<8x128xf32, #tpu.memory_space<vmem>>, %arg10: memref<256x128xf32, #tpu.memory_space<vmem>>, %arg11: memref<200x128xf32, #tpu.memory_space<vmem>>) attributes {dimension_semantics = [#tpu.dimension_semantics<parallel>], iteration_bounds = array<i64: 1>, scalar_prefetch = 0 : i64, scratch_operands = 2 : i64, tpu.core_type = #tpu.core_type<tc>, window_params = [{transform_indices = @transform_0, window_bounds = array<i64: 72, 128>}, {pipeline_mode = #tpu.pipeline_mode<synchronous>, transform_indices = @transform_1, window_bounds = array<i64: 256, 72>}, {pipeline_mode = #tpu.pipeline_mode<synchronous>, transform_indices = @transform_2, window_bounds = array<i64: 128, 72>}, {pipeline_mode = #tpu.pipeline_mode<synchronous>, transform_indices = @transform_3, window_bounds = array<i64: 64, 200>}, {pipeline_mode = #tpu.pipeline_mode<synchronous>, transform_indices = @transform_4, window_bounds = array<i64: 32, 64>}, {pipeline_mode = #tpu.pipeline_mode<synchronous>, transform_indices = @transform_5, window_bounds = array<i64: 32, 1>}, {pipeline_mode = #tpu.pipeline_mode<synchronous>, transform_indices = @transform_6, window_bounds = array<i64: 8, 32>}, {pipeline_mode = #tpu.pipeline_mode<synchronous>, transform_indices = @transform_7, window_bounds = array<i64: 8, 1>}, {transform_indices = @transform_8, window_bounds = array<i64: 8, 128>}]} {
    %0 = tpu.iota {dimensions = array<i32: 0>} : vector<8x128xi32>
    %c0_i32 = arith.constant 0 : i32
    %1 = vector.broadcast %c0_i32 : i32 to vector<8x128xi32>
    %2 = arith.cmpi eq, %0, %1 : vector<8x128xi32>
    %3 = arith.extui %2 : vector<8x128xi1> to vector<8x128xi32>
    %4 = arith.sitofp %3 : vector<8x128xi32> to vector<8x128xf32>
    %c0 = arith.constant 0 : index
    %c0_0 = arith.constant 0 : index
    %5 = vector.load %arg1[%c0, %c0_0] : memref<72x128xf32, #tpu.memory_space<vmem>>, vector<72x128xf32>
    %c0_1 = arith.constant 0 : index
    %c0_2 = arith.constant 0 : index
    %6 = vector.load %arg2[%c0_1, %c0_2] : memref<256x72xf32, #tpu.memory_space<vmem>>, vector<64x72xf32>
    %cst = arith.constant dense<0.000000e+00> : vector<64x128xf32>
    %7 = tpu.matmul %6, %5, %cst {dimension_numbers = #tpu.dot_dimension_numbers<[1], [0], [0], [1], [0, 0, 1, 1], [], []>} : vector<64x72xf32>, vector<72x128xf32>, vector<64x128xf32> -> vector<64x128xf32>
    %cst_3 = arith.constant 0.000000e+00 : f32
    %8 = vector.broadcast %cst_3 : f32 to vector<64x128xf32>
    %9 = arith.maximumf %7, %8 : vector<64x128xf32>
    %c0_4 = arith.constant 0 : index
    %c0_5 = arith.constant 0 : index
    %10 = vector.load %arg10[%c0_4, %c0_5] : memref<256x128xf32, #tpu.memory_space<vmem>>, vector<64x128xf32>
    tpu.vector_store %arg10[%c0_4, %c0_5], %9 {strides = array<i32>} : memref<256x128xf32, #tpu.memory_space<vmem>>, vector<64x128xf32>,
    %c64 = arith.constant 64 : index
    %c0_6 = arith.constant 0 : index
    %11 = vector.load %arg2[%c64, %c0_6] : memref<256x72xf32, #tpu.memory_space<vmem>>, vector<64x72xf32>
    %cst_7 = arith.constant dense<0.000000e+00> : vector<64x128xf32>
    %12 = tpu.matmul %11, %5, %cst_7 {dimension_numbers = #tpu.dot_dimension_numbers<[1], [0], [0], [1], [0, 0, 1, 1], [], []>} : vector<64x72xf32>, vector<72x128xf32>, vector<64x128xf32> -> vector<64x128xf32>
    %cst_8 = arith.constant 0.000000e+00 : f32
    %13 = vector.broadcast %cst_8 : f32 to vector<64x128xf32>
    %14 = arith.maximumf %12, %13 : vector<64x128xf32>
    %c64_9 = arith.constant 64 : index
    %c0_10 = arith.constant 0 : index
    %15 = vector.load %arg10[%c64_9, %c0_10] : memref<256x128xf32, #tpu.memory_space<vmem>>, vector<64x128xf32>
    tpu.vector_store %arg10[%c64_9, %c0_10], %14 {strides = array<i32>} : memref<256x128xf32, #tpu.memory_space<vmem>>, vector<64x128xf32>,
    %c128 = arith.constant 128 : index
    %c0_11 = arith.constant 0 : index
    %16 = vector.load %arg2[%c128, %c0_11] : memref<256x72xf32, #tpu.memory_space<vmem>>, vector<64x72xf32>
    %cst_12 = arith.constant dense<0.000000e+00> : vector<64x128xf32>
    %17 = tpu.matmul %16, %5, %cst_12 {dimension_numbers = #tpu.dot_dimension_numbers<[1], [0], [0], [1], [0, 0, 1, 1], [], []>} : vector<64x72xf32>, vector<72x128xf32>, vector<64x128xf32> -> vector<64x128xf32>
    %cst_13 = arith.constant 0.000000e+00 : f32
    %18 = vector.broadcast %cst_13 : f32 to vector<64x128xf32>
    %19 = arith.maximumf %17, %18 : vector<64x128xf32>
    %c128_14 = arith.constant 128 : index
    %c0_15 = arith.constant 0 : index
    %20 = vector.load %arg10[%c128_14, %c0_15] : memref<256x128xf32, #tpu.memory_space<vmem>>, vector<64x128xf32>
    tpu.vector_store %arg10[%c128_14, %c0_15], %19 {strides = array<i32>} : memref<256x128xf32, #tpu.memory_space<vmem>>, vector<64x128xf32>,
    %c192 = arith.constant 192 : index
    %c0_16 = arith.constant 0 : index
    %21 = vector.load %arg2[%c192, %c0_16] : memref<256x72xf32, #tpu.memory_space<vmem>>, vector<64x72xf32>
    %cst_17 = arith.constant dense<0.000000e+00> : vector<64x128xf32>
    %22 = tpu.matmul %21, %5, %cst_17 {dimension_numbers = #tpu.dot_dimension_numbers<[1], [0], [0], [1], [0, 0, 1, 1], [], []>} : vector<64x72xf32>, vector<72x128xf32>, vector<64x128xf32> -> vector<64x128xf32>
    %cst_18 = arith.constant 0.000000e+00 : f32
    %23 = vector.broadcast %cst_18 : f32 to vector<64x128xf32>
    %24 = arith.maximumf %22, %23 : vector<64x128xf32>
    %c192_19 = arith.constant 192 : index
    %c0_20 = arith.constant 0 : index
    %25 = vector.load %arg10[%c192_19, %c0_20] : memref<256x128xf32, #tpu.memory_space<vmem>>, vector<64x128xf32>
    tpu.vector_store %arg10[%c192_19, %c0_20], %24 {strides = array<i32>} : memref<256x128xf32, #tpu.memory_space<vmem>>, vector<64x128xf32>,
    %c0_21 = arith.constant 0 : index
    %c0_22 = arith.constant 0 : index
    %26 = vector.load %arg10[%c0_21, %c0_22] : memref<256x128xf32, #tpu.memory_space<vmem>>, vector<16x128xf32>
    %c64_23 = arith.constant 64 : index
    %c0_24 = arith.constant 0 : index
    %27 = vector.load %arg10[%c64_23, %c0_24] : memref<256x128xf32, #tpu.memory_space<vmem>>, vector<16x128xf32>
    %c128_25 = arith.constant 128 : index
    %c0_26 = arith.constant 0 : index
    %28 = vector.load %arg10[%c128_25, %c0_26] : memref<256x128xf32, #tpu.memory_space<vmem>>, vector<16x128xf32>
    %c192_27 = arith.constant 192 : index
    %c0_28 = arith.constant 0 : index
    %29 = vector.load %arg10[%c192_27, %c0_28] : memref<256x128xf32, #tpu.memory_space<vmem>>, vector<16x128xf32>
    %30 = tpu.concatenate %26, %27, %28, %29, %4 in 0 : vector<16x128xf32>, vector<16x128xf32>, vector<16x128xf32>, vector<16x128xf32>, vector<8x128xf32> -> vector<72x128xf32>
    %c0_29 = arith.constant 0 : index
    %c0_30 = arith.constant 0 : index
    %31 = vector.load %arg3[%c0_29, %c0_30] : memref<128x72xf32, #tpu.memory_space<vmem>>, vector<64x72xf32>
    %cst_31 = arith.constant dense<0.000000e+00> : vector<64x128xf32>
    %32 = tpu.matmul %31, %30, %cst_31 {dimension_numbers = #tpu.dot_dimension_numbers<[1], [0], [0], [1], [0, 0, 1, 1], [], []>} : vector<64x72xf32>, vector<72x128xf32>, vector<64x128xf32> -> vector<64x128xf32>
    %cst_32 = arith.constant 0.000000e+00 : f32
    %33 = vector.broadcast %cst_32 : f32 to vector<64x128xf32>
    %34 = arith.maximumf %32, %33 : vector<64x128xf32>
    %35 = vector.extract_strided_slice %34 {offsets = [0, 0], sizes = [16, 128], strides = [1, 1]} : vector<64x128xf32> to vector<16x128xf32>
    %36 = vector.extract_strided_slice %34 {offsets = [16, 0], sizes = [16, 128], strides = [1, 1]} : vector<64x128xf32> to vector<16x128xf32>
    %37 = arith.maximumf %35, %36 : vector<16x128xf32>
    %38 = vector.extract_strided_slice %34 {offsets = [32, 0], sizes = [16, 128], strides = [1, 1]} : vector<64x128xf32> to vector<16x128xf32>
    %39 = arith.maximumf %37, %38 : vector<16x128xf32>
    %40 = vector.extract_strided_slice %34 {offsets = [48, 0], sizes = [16, 128], strides = [1, 1]} : vector<64x128xf32> to vector<16x128xf32>
    %41 = arith.maximumf %39, %40 : vector<16x128xf32>
    %c0_33 = arith.constant 0 : index
    %c0_34 = arith.constant 0 : index
    %42 = vector.load %arg11[%c0_33, %c0_34] : memref<200x128xf32, #tpu.memory_space<vmem>>, vector<16x128xf32>
    tpu.vector_store %arg11[%c0_33, %c0_34], %41 {strides = array<i32>} : memref<200x128xf32, #tpu.memory_space<vmem>>, vector<16x128xf32>,
    %c64_35 = arith.constant 64 : index
    %c0_36 = arith.constant 0 : index
    %43 = vector.load %arg3[%c64_35, %c0_36] : memref<128x72xf32, #tpu.memory_space<vmem>>, vector<64x72xf32>
    %cst_37 = arith.constant dense<0.000000e+00> : vector<64x128xf32>
    %44 = tpu.matmul %43, %30, %cst_37 {dimension_numbers = #tpu.dot_dimension_numbers<[1], [0], [0], [1], [0, 0, 1, 1], [], []>} : vector<64x72xf32>, vector<72x128xf32>, vector<64x128xf32> -> vector<64x128xf32>
    %cst_38 = arith.constant 0.000000e+00 : f32
    %45 = vector.broadcast %cst_38 : f32 to vector<64x128xf32>
    %46 = arith.maximumf %44, %45 : vector<64x128xf32>
    %47 = vector.extract_strided_slice %46 {offsets = [0, 0], sizes = [16, 128], strides = [1, 1]} : vector<64x128xf32> to vector<16x128xf32>
    %48 = vector.extract_strided_slice %46 {offsets = [16, 0], sizes = [16, 128], strides = [1, 1]} : vector<64x128xf32> to vector<16x128xf32>
    %49 = arith.maximumf %47, %48 : vector<16x128xf32>
    %50 = vector.extract_strided_slice %46 {offsets = [32, 0], sizes = [16, 128], strides = [1, 1]} : vector<64x128xf32> to vector<16x128xf32>
    %51 = arith.maximumf %49, %50 : vector<16x128xf32>
    %52 = vector.extract_strided_slice %46 {offsets = [48, 0], sizes = [16, 128], strides = [1, 1]} : vector<64x128xf32> to vector<16x128xf32>
    %53 = arith.maximumf %51, %52 : vector<16x128xf32>
    %c16 = arith.constant 16 : index
    %c0_39 = arith.constant 0 : index
    %54 = vector.load %arg11[%c16, %c0_39] : memref<200x128xf32, #tpu.memory_space<vmem>>, vector<16x128xf32>
    tpu.vector_store %arg11[%c16, %c0_39], %53 {strides = array<i32>} : memref<200x128xf32, #tpu.memory_space<vmem>>, vector<16x128xf32>,
    %c8 = arith.constant 8 : index
    %c0_40 = arith.constant 0 : index
    %55 = vector.load %arg10[%c8, %c0_40] : memref<256x128xf32, #tpu.memory_space<vmem>>, vector<16x128xf32>
    %c72 = arith.constant 72 : index
    %c0_41 = arith.constant 0 : index
    %56 = vector.load %arg10[%c72, %c0_41] : memref<256x128xf32, #tpu.memory_space<vmem>>, vector<16x128xf32>
    %c136 = arith.constant 136 : index
    %c0_42 = arith.constant 0 : index
    %57 = vector.load %arg10[%c136, %c0_42] : memref<256x128xf32, #tpu.memory_space<vmem>>, vector<16x128xf32>
    %c200 = arith.constant 200 : index
    %c0_43 = arith.constant 0 : index
    %58 = vector.load %arg10[%c200, %c0_43] : memref<256x128xf32, #tpu.memory_space<vmem>>, vector<16x128xf32>
    %59 = tpu.concatenate %55, %56, %57, %58, %4 in 0 : vector<16x128xf32>, vector<16x128xf32>, vector<16x128xf32>, vector<16x128xf32>, vector<8x128xf32> -> vector<72x128xf32>
    %c0_44 = arith.constant 0 : index
    %c0_45 = arith.constant 0 : index
    %60 = vector.load %arg3[%c0_44, %c0_45] : memref<128x72xf32, #tpu.memory_space<vmem>>, vector<64x72xf32>
    %cst_46 = arith.constant dense<0.000000e+00> : vector<64x128xf32>
    %61 = tpu.matmul %60, %59, %cst_46 {dimension_numbers = #tpu.dot_dimension_numbers<[1], [0], [0], [1], [0, 0, 1, 1], [], []>} : vector<64x72xf32>, vector<72x128xf32>, vector<64x128xf32> -> vector<64x128xf32>
    %cst_47 = arith.constant 0.000000e+00 : f32
    %62 = vector.broadcast %cst_47 : f32 to vector<64x128xf32>
    %63 = arith.maximumf %61, %62 : vector<64x128xf32>
    %64 = vector.extract_strided_slice %63 {offsets = [0, 0], sizes = [16, 128], strides = [1, 1]} : vector<64x128xf32> to vector<16x128xf32>
    %65 = vector.extract_strided_slice %63 {offsets = [16, 0], sizes = [16, 128], strides = [1, 1]} : vector<64x128xf32> to vector<16x128xf32>
    %66 = arith.maximumf %64, %65 : vector<16x128xf32>
    %67 = vector.extract_strided_slice %63 {offsets = [32, 0], sizes = [16, 128], strides = [1, 1]} : vector<64x128xf32> to vector<16x128xf32>
    %68 = arith.maximumf %66, %67 : vector<16x128xf32>
    %69 = vector.extract_strided_slice %63 {offsets = [48, 0], sizes = [16, 128], strides = [1, 1]} : vector<64x128xf32> to vector<16x128xf32>
    %70 = arith.maximumf %68, %69 : vector<16x128xf32>
    %c32 = arith.constant 32 : index
    %c0_48 = arith.constant 0 : index
    %71 = vector.load %arg11[%c32, %c0_48] : memref<200x128xf32, #tpu.memory_space<vmem>>, vector<16x128xf32>
    tpu.vector_store %arg11[%c32, %c0_48], %70 {strides = array<i32>} : memref<200x128xf32, #tpu.memory_space<vmem>>, vector<16x128xf32>,
    %c64_49 = arith.constant 64 : index
    %c0_50 = arith.constant 0 : index
    %72 = vector.load %arg3[%c64_49, %c0_50] : memref<128x72xf32, #tpu.memory_space<vmem>>, vector<64x72xf32>
    %cst_51 = arith.constant dense<0.000000e+00> : vector<64x128xf32>
    %73 = tpu.matmul %72, %59, %cst_51 {dimension_numbers = #tpu.dot_dimension_numbers<[1], [0], [0], [1], [0, 0, 1, 1], [], []>} : vector<64x72xf32>, vector<72x128xf32>, vector<64x128xf32> -> vector<64x128xf32>
    %cst_52 = arith.constant 0.000000e+00 : f32
    %74 = vector.broadcast %cst_52 : f32 to vector<64x128xf32>
    %75 = arith.maximumf %73, %74 : vector<64x128xf32>
    %76 = vector.extract_strided_slice %75 {offsets = [0, 0], sizes = [16, 128], strides = [1, 1]} : vector<64x128xf32> to vector<16x128xf32>
    %77 = vector.extract_strided_slice %75 {offsets = [16, 0], sizes = [16, 128], strides = [1, 1]} : vector<64x128xf32> to vector<16x128xf32>
    %78 = arith.maximumf %76, %77 : vector<16x128xf32>
    %79 = vector.extract_strided_slice %75 {offsets = [32, 0], sizes = [16, 128], strides = [1, 1]} : vector<64x128xf32> to vector<16x128xf32>
    %80 = arith.maximumf %78, %79 : vector<16x128xf32>
    %81 = vector.extract_strided_slice %75 {offsets = [48, 0], sizes = [16, 128], strides = [1, 1]} : vector<64x128xf32> to vector<16x128xf32>
    %82 = arith.maximumf %80, %81 : vector<16x128xf32>
    %c48 = arith.constant 48 : index
    %c0_53 = arith.constant 0 : index
    %83 = vector.load %arg11[%c48, %c0_53] : memref<200x128xf32, #tpu.memory_space<vmem>>, vector<16x128xf32>
    tpu.vector_store %arg11[%c48, %c0_53], %82 {strides = array<i32>} : memref<200x128xf32, #tpu.memory_space<vmem>>, vector<16x128xf32>,
    %c16_54 = arith.constant 16 : index
    %c0_55 = arith.constant 0 : index
    %84 = vector.load %arg10[%c16_54, %c0_55] : memref<256x128xf32, #tpu.memory_space<vmem>>, vector<16x128xf32>
    %c80 = arith.constant 80 : index
    %c0_56 = arith.constant 0 : index
    %85 = vector.load %arg10[%c80, %c0_56] : memref<256x128xf32, #tpu.memory_space<vmem>>, vector<16x128xf32>
    %c144 = arith.constant 144 : index
    %c0_57 = arith.constant 0 : index
    %86 = vector.load %arg10[%c144, %c0_57] : memref<256x128xf32, #tpu.memory_space<vmem>>, vector<16x128xf32>
    %c208 = arith.constant 208 : index
    %c0_58 = arith.constant 0 : index
    %87 = vector.load %arg10[%c208, %c0_58] : memref<256x128xf32, #tpu.memory_space<vmem>>, vector<16x128xf32>
    %88 = tpu.concatenate %84, %85, %86, %87, %4 in 0 : vector<16x128xf32>, vector<16x128xf32>, vector<16x128xf32>, vector<16x128xf32>, vector<8x128xf32> -> vector<72x128xf32>
    %c0_59 = arith.constant 0 : index
    %c0_60 = arith.constant 0 : index
    %89 = vector.load %arg3[%c0_59, %c0_60] : memref<128x72xf32, #tpu.memory_space<vmem>>, vector<64x72xf32>
    %cst_61 = arith.constant dense<0.000000e+00> : vector<64x128xf32>
    %90 = tpu.matmul %89, %88, %cst_61 {dimension_numbers = #tpu.dot_dimension_numbers<[1], [0], [0], [1], [0, 0, 1, 1], [], []>} : vector<64x72xf32>, vector<72x128xf32>, vector<64x128xf32> -> vector<64x128xf32>
    %cst_62 = arith.constant 0.000000e+00 : f32
    %91 = vector.broadcast %cst_62 : f32 to vector<64x128xf32>
    %92 = arith.maximumf %90, %91 : vector<64x128xf32>
    %93 = vector.extract_strided_slice %92 {offsets = [0, 0], sizes = [16, 128], strides = [1, 1]} : vector<64x128xf32> to vector<16x128xf32>
    %94 = vector.extract_strided_slice %92 {offsets = [16, 0], sizes = [16, 128], strides = [1, 1]} : vector<64x128xf32> to vector<16x128xf32>
    %95 = arith.maximumf %93, %94 : vector<16x128xf32>
    %96 = vector.extract_strided_slice %92 {offsets = [32, 0], sizes = [16, 128], strides = [1, 1]} : vector<64x128xf32> to vector<16x128xf32>
    %97 = arith.maximumf %95, %96 : vector<16x128xf32>
    %98 = vector.extract_strided_slice %92 {offsets = [48, 0], sizes = [16, 128], strides = [1, 1]} : vector<64x128xf32> to vector<16x128xf32>
    %99 = arith.maximumf %97, %98 : vector<16x128xf32>
    %c64_63 = arith.constant 64 : index
    %c0_64 = arith.constant 0 : index
    %100 = vector.load %arg11[%c64_63, %c0_64] : memref<200x128xf32, #tpu.memory_space<vmem>>, vector<16x128xf32>
    tpu.vector_store %arg11[%c64_63, %c0_64], %99 {strides = array<i32>} : memref<200x128xf32, #tpu.memory_space<vmem>>, vector<16x128xf32>,
    %c64_65 = arith.constant 64 : index
    %c0_66 = arith.constant 0 : index
    %101 = vector.load %arg3[%c64_65, %c0_66] : memref<128x72xf32, #tpu.memory_space<vmem>>, vector<64x72xf32>
    %cst_67 = arith.constant dense<0.000000e+00> : vector<64x128xf32>
    %102 = tpu.matmul %101, %88, %cst_67 {dimension_numbers = #tpu.dot_dimension_numbers<[1], [0], [0], [1], [0, 0, 1, 1], [], []>} : vector<64x72xf32>, vector<72x128xf32>, vector<64x128xf32> -> vector<64x128xf32>
    %cst_68 = arith.constant 0.000000e+00 : f32
    %103 = vector.broadcast %cst_68 : f32 to vector<64x128xf32>
    %104 = arith.maximumf %102, %103 : vector<64x128xf32>
    %105 = vector.extract_strided_slice %104 {offsets = [0, 0], sizes = [16, 128], strides = [1, 1]} : vector<64x128xf32> to vector<16x128xf32>
    %106 = vector.extract_strided_slice %104 {offsets = [16, 0], sizes = [16, 128], strides = [1, 1]} : vector<64x128xf32> to vector<16x128xf32>
    %107 = arith.maximumf %105, %106 : vector<16x128xf32>
    %108 = vector.extract_strided_slice %104 {offsets = [32, 0], sizes = [16, 128], strides = [1, 1]} : vector<64x128xf32> to vector<16x128xf32>
    %109 = arith.maximumf %107, %108 : vector<16x128xf32>
    %110 = vector.extract_strided_slice %104 {offsets = [48, 0], sizes = [16, 128], strides = [1, 1]} : vector<64x128xf32> to vector<16x128xf32>
    %111 = arith.maximumf %109, %110 : vector<16x128xf32>
    %c80_69 = arith.constant 80 : index
    %c0_70 = arith.constant 0 : index
    %112 = vector.load %arg11[%c80_69, %c0_70] : memref<200x128xf32, #tpu.memory_space<vmem>>, vector<16x128xf32>
    tpu.vector_store %arg11[%c80_69, %c0_70], %111 {strides = array<i32>} : memref<200x128xf32, #tpu.memory_space<vmem>>, vector<16x128xf32>,
    %c24 = arith.constant 24 : index
    %c0_71 = arith.constant 0 : index
    %113 = vector.load %arg10[%c24, %c0_71] : memref<256x128xf32, #tpu.memory_space<vmem>>, vector<16x128xf32>
    %c88 = arith.constant 88 : index
    %c0_72 = arith.constant 0 : index
    %114 = vector.load %arg10[%c88, %c0_72] : memref<256x128xf32, #tpu.memory_space<vmem>>, vector<16x128xf32>
    %c152 = arith.constant 152 : index
    %c0_73 = arith.constant 0 : index
    %115 = vector.load %arg10[%c152, %c0_73] : memref<256x128xf32, #tpu.memory_space<vmem>>, vector<16x128xf32>
    %c216 = arith.constant 216 : index
    %c0_74 = arith.constant 0 : index
    %116 = vector.load %arg10[%c216, %c0_74] : memref<256x128xf32, #tpu.memory_space<vmem>>, vector<16x128xf32>
    %117 = tpu.concatenate %113, %114, %115, %116, %4 in 0 : vector<16x128xf32>, vector<16x128xf32>, vector<16x128xf32>, vector<16x128xf32>, vector<8x128xf32> -> vector<72x128xf32>
    %c0_75 = arith.constant 0 : index
    %c0_76 = arith.constant 0 : index
    %118 = vector.load %arg3[%c0_75, %c0_76] : memref<128x72xf32, #tpu.memory_space<vmem>>, vector<64x72xf32>
    %cst_77 = arith.constant dense<0.000000e+00> : vector<64x128xf32>
    %119 = tpu.matmul %118, %117, %cst_77 {dimension_numbers = #tpu.dot_dimension_numbers<[1], [0], [0], [1], [0, 0, 1, 1], [], []>} : vector<64x72xf32>, vector<72x128xf32>, vector<64x128xf32> -> vector<64x128xf32>
    %cst_78 = arith.constant 0.000000e+00 : f32
    %120 = vector.broadcast %cst_78 : f32 to vector<64x128xf32>
    %121 = arith.maximumf %119, %120 : vector<64x128xf32>
    %122 = vector.extract_strided_slice %121 {offsets = [0, 0], sizes = [16, 128], strides = [1, 1]} : vector<64x128xf32> to vector<16x128xf32>
    %123 = vector.extract_strided_slice %121 {offsets = [16, 0], sizes = [16, 128], strides = [1, 1]} : vector<64x128xf32> to vector<16x128xf32>
    %124 = arith.maximumf %122, %123 : vector<16x128xf32>
    %125 = vector.extract_strided_slice %121 {offsets = [32, 0], sizes = [16, 128], strides = [1, 1]} : vector<64x128xf32> to vector<16x128xf32>
    %126 = arith.maximumf %124, %125 : vector<16x128xf32>
    %127 = vector.extract_strided_slice %121 {offsets = [48, 0], sizes = [16, 128], strides = [1, 1]} : vector<64x128xf32> to vector<16x128xf32>
    %128 = arith.maximumf %126, %127 : vector<16x128xf32>
    %c96 = arith.constant 96 : index
    %c0_79 = arith.constant 0 : index
    %129 = vector.load %arg11[%c96, %c0_79] : memref<200x128xf32, #tpu.memory_space<vmem>>, vector<16x128xf32>
    tpu.vector_store %arg11[%c96, %c0_79], %128 {strides = array<i32>} : memref<200x128xf32, #tpu.memory_space<vmem>>, vector<16x128xf32>,
    %c64_80 = arith.constant 64 : index
    %c0_81 = arith.constant 0 : index
    %130 = vector.load %arg3[%c64_80, %c0_81] : memref<128x72xf32, #tpu.memory_space<vmem>>, vector<64x72xf32>
    %cst_82 = arith.constant dense<0.000000e+00> : vector<64x128xf32>
    %131 = tpu.matmul %130, %117, %cst_82 {dimension_numbers = #tpu.dot_dimension_numbers<[1], [0], [0], [1], [0, 0, 1, 1], [], []>} : vector<64x72xf32>, vector<72x128xf32>, vector<64x128xf32> -> vector<64x128xf32>
    %cst_83 = arith.constant 0.000000e+00 : f32
    %132 = vector.broadcast %cst_83 : f32 to vector<64x128xf32>
    %133 = arith.maximumf %131, %132 : vector<64x128xf32>
    %134 = vector.extract_strided_slice %133 {offsets = [0, 0], sizes = [16, 128], strides = [1, 1]} : vector<64x128xf32> to vector<16x128xf32>
    %135 = vector.extract_strided_slice %133 {offsets = [16, 0], sizes = [16, 128], strides = [1, 1]} : vector<64x128xf32> to vector<16x128xf32>
    %136 = arith.maximumf %134, %135 : vector<16x128xf32>
    %137 = vector.extract_strided_slice %133 {offsets = [32, 0], sizes = [16, 128], strides = [1, 1]} : vector<64x128xf32> to vector<16x128xf32>
    %138 = arith.maximumf %136, %137 : vector<16x128xf32>
    %139 = vector.extract_strided_slice %133 {offsets = [48, 0], sizes = [16, 128], strides = [1, 1]} : vector<64x128xf32> to vector<16x128xf32>
    %140 = arith.maximumf %138, %139 : vector<16x128xf32>
    %c112 = arith.constant 112 : index
    %c0_84 = arith.constant 0 : index
    %141 = vector.load %arg11[%c112, %c0_84] : memref<200x128xf32, #tpu.memory_space<vmem>>, vector<16x128xf32>
    tpu.vector_store %arg11[%c112, %c0_84], %140 {strides = array<i32>} : memref<200x128xf32, #tpu.memory_space<vmem>>, vector<16x128xf32>,
    %c32_85 = arith.constant 32 : index
    %c0_86 = arith.constant 0 : index
    %142 = vector.load %arg10[%c32_85, %c0_86] : memref<256x128xf32, #tpu.memory_space<vmem>>, vector<16x128xf32>
    %c96_87 = arith.constant 96 : index
    %c0_88 = arith.constant 0 : index
    %143 = vector.load %arg10[%c96_87, %c0_88] : memref<256x128xf32, #tpu.memory_space<vmem>>, vector<16x128xf32>
    %c160 = arith.constant 160 : index
    %c0_89 = arith.constant 0 : index
    %144 = vector.load %arg10[%c160, %c0_89] : memref<256x128xf32, #tpu.memory_space<vmem>>, vector<16x128xf32>
    %c224 = arith.constant 224 : index
    %c0_90 = arith.constant 0 : index
    %145 = vector.load %arg10[%c224, %c0_90] : memref<256x128xf32, #tpu.memory_space<vmem>>, vector<16x128xf32>
    %146 = tpu.concatenate %142, %143, %144, %145, %4 in 0 : vector<16x128xf32>, vector<16x128xf32>, vector<16x128xf32>, vector<16x128xf32>, vector<8x128xf32> -> vector<72x128xf32>
    %c0_91 = arith.constant 0 : index
    %c0_92 = arith.constant 0 : index
    %147 = vector.load %arg3[%c0_91, %c0_92] : memref<128x72xf32, #tpu.memory_space<vmem>>, vector<64x72xf32>
    %cst_93 = arith.constant dense<0.000000e+00> : vector<64x128xf32>
    %148 = tpu.matmul %147, %146, %cst_93 {dimension_numbers = #tpu.dot_dimension_numbers<[1], [0], [0], [1], [0, 0, 1, 1], [], []>} : vector<64x72xf32>, vector<72x128xf32>, vector<64x128xf32> -> vector<64x128xf32>
    %cst_94 = arith.constant 0.000000e+00 : f32
    %149 = vector.broadcast %cst_94 : f32 to vector<64x128xf32>
    %150 = arith.maximumf %148, %149 : vector<64x128xf32>
    %151 = vector.extract_strided_slice %150 {offsets = [0, 0], sizes = [16, 128], strides = [1, 1]} : vector<64x128xf32> to vector<16x128xf32>
    %152 = vector.extract_strided_slice %150 {offsets = [16, 0], sizes = [16, 128], strides = [1, 1]} : vector<64x128xf32> to vector<16x128xf32>
    %153 = arith.maximumf %151, %152 : vector<16x128xf32>
    %154 = vector.extract_strided_slice %150 {offsets = [32, 0], sizes = [16, 128], strides = [1, 1]} : vector<64x128xf32> to vector<16x128xf32>
    %155 = arith.maximumf %153, %154 : vector<16x128xf32>
    %156 = vector.extract_strided_slice %150 {offsets = [48, 0], sizes = [16, 128], strides = [1, 1]} : vector<64x128xf32> to vector<16x128xf32>
    %157 = arith.maximumf %155, %156 : vector<16x128xf32>
    %c128_95 = arith.constant 128 : index
    %c0_96 = arith.constant 0 : index
    %158 = vector.load %arg11[%c128_95, %c0_96] : memref<200x128xf32, #tpu.memory_space<vmem>>, vector<16x128xf32>
    tpu.vector_store %arg11[%c128_95, %c0_96], %157 {strides = array<i32>} : memref<200x128xf32, #tpu.memory_space<vmem>>, vector<16x128xf32>,
    %c64_97 = arith.constant 64 : index
    %c0_98 = arith.constant 0 : index
    %159 = vector.load %arg3[%c64_97, %c0_98] : memref<128x72xf32, #tpu.memory_space<vmem>>, vector<64x72xf32>
    %cst_99 = arith.constant dense<0.000000e+00> : vector<64x128xf32>
    %160 = tpu.matmul %159, %146, %cst_99 {dimension_numbers = #tpu.dot_dimension_numbers<[1], [0], [0], [1], [0, 0, 1, 1], [], []>} : vector<64x72xf32>, vector<72x128xf32>, vector<64x128xf32> -> vector<64x128xf32>
    %cst_100 = arith.constant 0.000000e+00 : f32
    %161 = vector.broadcast %cst_100 : f32 to vector<64x128xf32>
    %162 = arith.maximumf %160, %161 : vector<64x128xf32>
    %163 = vector.extract_strided_slice %162 {offsets = [0, 0], sizes = [16, 128], strides = [1, 1]} : vector<64x128xf32> to vector<16x128xf32>
    %164 = vector.extract_strided_slice %162 {offsets = [16, 0], sizes = [16, 128], strides = [1, 1]} : vector<64x128xf32> to vector<16x128xf32>
    %165 = arith.maximumf %163, %164 : vector<16x128xf32>
    %166 = vector.extract_strided_slice %162 {offsets = [32, 0], sizes = [16, 128], strides = [1, 1]} : vector<64x128xf32> to vector<16x128xf32>
    %167 = arith.maximumf %165, %166 : vector<16x128xf32>
    %168 = vector.extract_strided_slice %162 {offsets = [48, 0], sizes = [16, 128], strides = [1, 1]} : vector<64x128xf32> to vector<16x128xf32>
    %169 = arith.maximumf %167, %168 : vector<16x128xf32>
    %c144_101 = arith.constant 144 : index
    %c0_102 = arith.constant 0 : index
    %170 = vector.load %arg11[%c144_101, %c0_102] : memref<200x128xf32, #tpu.memory_space<vmem>>, vector<16x128xf32>
    tpu.vector_store %arg11[%c144_101, %c0_102], %169 {strides = array<i32>} : memref<200x128xf32, #tpu.memory_space<vmem>>, vector<16x128xf32>,
    %c40 = arith.constant 40 : index
    %c0_103 = arith.constant 0 : index
    %171 = vector.load %arg10[%c40, %c0_103] : memref<256x128xf32, #tpu.memory_space<vmem>>, vector<16x128xf32>
    %c104 = arith.constant 104 : index
    %c0_104 = arith.constant 0 : index
    %172 = vector.load %arg10[%c104, %c0_104] : memref<256x128xf32, #tpu.memory_space<vmem>>, vector<16x128xf32>
    %c168 = arith.constant 168 : index
    %c0_105 = arith.constant 0 : index
    %173 = vector.load %arg10[%c168, %c0_105] : memref<256x128xf32, #tpu.memory_space<vmem>>, vector<16x128xf32>
    %c232 = arith.constant 232 : index
    %c0_106 = arith.constant 0 : index
    %174 = vector.load %arg10[%c232, %c0_106] : memref<256x128xf32, #tpu.memory_space<vmem>>, vector<16x128xf32>
    %175 = tpu.concatenate %171, %172, %173, %174, %4 in 0 : vector<16x128xf32>, vector<16x128xf32>, vector<16x128xf32>, vector<16x128xf32>, vector<8x128xf32> -> vector<72x128xf32>
    %c0_107 = arith.constant 0 : index
    %c0_108 = arith.constant 0 : index
    %176 = vector.load %arg3[%c0_107, %c0_108] : memref<128x72xf32, #tpu.memory_space<vmem>>, vector<64x72xf32>
    %cst_109 = arith.constant dense<0.000000e+00> : vector<64x128xf32>
    %177 = tpu.matmul %176, %175, %cst_109 {dimension_numbers = #tpu.dot_dimension_numbers<[1], [0], [0], [1], [0, 0, 1, 1], [], []>} : vector<64x72xf32>, vector<72x128xf32>, vector<64x128xf32> -> vector<64x128xf32>
    %cst_110 = arith.constant 0.000000e+00 : f32
    %178 = vector.broadcast %cst_110 : f32 to vector<64x128xf32>
    %179 = arith.maximumf %177, %178 : vector<64x128xf32>
    %180 = vector.extract_strided_slice %179 {offsets = [0, 0], sizes = [16, 128], strides = [1, 1]} : vector<64x128xf32> to vector<16x128xf32>
    %181 = vector.extract_strided_slice %179 {offsets = [16, 0], sizes = [16, 128], strides = [1, 1]} : vector<64x128xf32> to vector<16x128xf32>
    %182 = arith.maximumf %180, %181 : vector<16x128xf32>
    %183 = vector.extract_strided_slice %179 {offsets = [32, 0], sizes = [16, 128], strides = [1, 1]} : vector<64x128xf32> to vector<16x128xf32>
    %184 = arith.maximumf %182, %183 : vector<16x128xf32>
    %185 = vector.extract_strided_slice %179 {offsets = [48, 0], sizes = [16, 128], strides = [1, 1]} : vector<64x128xf32> to vector<16x128xf32>
    %186 = arith.maximumf %184, %185 : vector<16x128xf32>
    %c160_111 = arith.constant 160 : index
    %c0_112 = arith.constant 0 : index
    %187 = vector.load %arg11[%c160_111, %c0_112] : memref<200x128xf32, #tpu.memory_space<vmem>>, vector<16x128xf32>
    tpu.vector_store %arg11[%c160_111, %c0_112], %186 {strides = array<i32>} : memref<200x128xf32, #tpu.memory_space<vmem>>, vector<16x128xf32>,
    %c64_113 = arith.constant 64 : index
    %c0_114 = arith.constant 0 : index
    %188 = vector.load %arg3[%c64_113, %c0_114] : memref<128x72xf32, #tpu.memory_space<vmem>>, vector<64x72xf32>
    %cst_115 = arith.constant dense<0.000000e+00> : vector<64x128xf32>
    %189 = tpu.matmul %188, %175, %cst_115 {dimension_numbers = #tpu.dot_dimension_numbers<[1], [0], [0], [1], [0, 0, 1, 1], [], []>} : vector<64x72xf32>, vector<72x128xf32>, vector<64x128xf32> -> vector<64x128xf32>
    %cst_116 = arith.constant 0.000000e+00 : f32
    %190 = vector.broadcast %cst_116 : f32 to vector<64x128xf32>
    %191 = arith.maximumf %189, %190 : vector<64x128xf32>
    %192 = vector.extract_strided_slice %191 {offsets = [0, 0], sizes = [16, 128], strides = [1, 1]} : vector<64x128xf32> to vector<16x128xf32>
    %193 = vector.extract_strided_slice %191 {offsets = [16, 0], sizes = [16, 128], strides = [1, 1]} : vector<64x128xf32> to vector<16x128xf32>
    %194 = arith.maximumf %192, %193 : vector<16x128xf32>
    %195 = vector.extract_strided_slice %191 {offsets = [32, 0], sizes = [16, 128], strides = [1, 1]} : vector<64x128xf32> to vector<16x128xf32>
    %196 = arith.maximumf %194, %195 : vector<16x128xf32>
    %197 = vector.extract_strided_slice %191 {offsets = [48, 0], sizes = [16, 128], strides = [1, 1]} : vector<64x128xf32> to vector<16x128xf32>
    %198 = arith.maximumf %196, %197 : vector<16x128xf32>
    %c176 = arith.constant 176 : index
    %c0_117 = arith.constant 0 : index
    %199 = vector.load %arg11[%c176, %c0_117] : memref<200x128xf32, #tpu.memory_space<vmem>>, vector<16x128xf32>
    tpu.vector_store %arg11[%c176, %c0_117], %198 {strides = array<i32>} : memref<200x128xf32, #tpu.memory_space<vmem>>, vector<16x128xf32>,
    %c192_118 = arith.constant 192 : index
    %c0_119 = arith.constant 0 : index
    %200 = vector.load %arg11[%c192_118, %c0_119] : memref<200x128xf32, #tpu.memory_space<vmem>>, vector<8x128xf32>
    tpu.vector_store %arg11[%c192_118, %c0_119], %4 {strides = array<i32>} : memref<200x128xf32, #tpu.memory_space<vmem>>, vector<8x128xf32>,
    %c0_120 = arith.constant 0 : index
    %c0_121 = arith.constant 0 : index
    %201 = vector.load %arg4[%c0_120, %c0_121] : memref<64x200xf32, #tpu.memory_space<vmem>>, vector<64x200xf32>
    %c0_122 = arith.constant 0 : index
    %c0_123 = arith.constant 0 : index
    %202 = vector.load %arg11[%c0_122, %c0_123] : memref<200x128xf32, #tpu.memory_space<vmem>>, vector<200x128xf32>
    %cst_124 = arith.constant dense<0.000000e+00> : vector<64x128xf32>
    %203 = tpu.matmul %201, %202, %cst_124 {dimension_numbers = #tpu.dot_dimension_numbers<[1], [0], [0], [1], [0, 0, 1, 1], [], []>} : vector<64x200xf32>, vector<200x128xf32>, vector<64x128xf32> -> vector<64x128xf32>
    %cst_125 = arith.constant 0.000000e+00 : f32
    %204 = vector.broadcast %cst_125 : f32 to vector<64x128xf32>
    %205 = arith.maximumf %203, %204 : vector<64x128xf32>
    %c0_126 = arith.constant 0 : index
    %c0_127 = arith.constant 0 : index
    %206 = vector.load %arg5[%c0_126, %c0_127] : memref<32x64xf32, #tpu.memory_space<vmem>>, vector<32x64xf32>
    %cst_128 = arith.constant dense<0.000000e+00> : vector<32x128xf32>
    %207 = tpu.matmul %206, %205, %cst_128 {dimension_numbers = #tpu.dot_dimension_numbers<[1], [0], [0], [1], [0, 0, 1, 1], [], []>} : vector<32x64xf32>, vector<64x128xf32>, vector<32x128xf32> -> vector<32x128xf32>
    %c0_129 = arith.constant 0 : index
    %c0_130 = arith.constant 0 : index
    %208 = vector.load %arg6[%c0_129, %c0_130] : memref<32x1xf32, #tpu.memory_space<vmem>>, vector<32x1xf32>
    %209 = vector.broadcast %208 : vector<32x1xf32> to vector<32x128xf32>
    %210 = arith.addf %207, %209 : vector<32x128xf32>
    %cst_131 = arith.constant 0.000000e+00 : f32
    %211 = vector.broadcast %cst_131 : f32 to vector<32x128xf32>
    %212 = arith.maximumf %210, %211 : vector<32x128xf32>
    %c0_132 = arith.constant 0 : index
    %c0_133 = arith.constant 0 : index
    %213 = vector.load %arg7[%c0_132, %c0_133] : memref<8x32xf32, #tpu.memory_space<vmem>>, vector<8x32xf32>
    %cst_134 = arith.constant dense<0.000000e+00> : vector<8x128xf32>
    %214 = tpu.matmul %213, %212, %cst_134 {dimension_numbers = #tpu.dot_dimension_numbers<[1], [0], [0], [1], [0, 0, 1, 1], [], []>} : vector<8x32xf32>, vector<32x128xf32>, vector<8x128xf32> -> vector<8x128xf32>
    %c0_135 = arith.constant 0 : index
    %c0_136 = arith.constant 0 : index
    %215 = vector.load %arg8[%c0_135, %c0_136] : memref<8x1xf32, #tpu.memory_space<vmem>>, vector<8x1xf32>
    %216 = vector.broadcast %215 : vector<8x1xf32> to vector<8x128xf32>
    %217 = arith.addf %214, %216 : vector<8x128xf32>
    %c0_137 = arith.constant 0 : index
    %c0_138 = arith.constant 0 : index
    %218 = vector.load %arg9[%c0_137, %c0_138] : memref<8x128xf32, #tpu.memory_space<vmem>>, vector<8x128xf32>
    tpu.vector_store %arg9[%c0_137, %c0_138], %217 {strides = array<i32>} : memref<8x128xf32, #tpu.memory_space<vmem>>, vector<8x128xf32>,
    return
  }
  func.func @transform_0(%arg0: i32) -> (i32, i32) {
    %c0_i32 = arith.constant 0 : i32
    %c0_i32_0 = arith.constant 0 : i32
    return %c0_i32, %arg0 : i32, i32
  }
  func.func @transform_1(%arg0: i32) -> (i32, i32) {
    %c0_i32 = arith.constant 0 : i32
    %c0_i32_0 = arith.constant 0 : i32
    %c0_i32_1 = arith.constant 0 : i32
    return %c0_i32, %c0_i32_0 : i32, i32
  }
  func.func @transform_2(%arg0: i32) -> (i32, i32) {
    %c0_i32 = arith.constant 0 : i32
    %c0_i32_0 = arith.constant 0 : i32
    %c0_i32_1 = arith.constant 0 : i32
    return %c0_i32, %c0_i32_0 : i32, i32
  }
  func.func @transform_3(%arg0: i32) -> (i32, i32) {
    %c0_i32 = arith.constant 0 : i32
    %c0_i32_0 = arith.constant 0 : i32
    %c0_i32_1 = arith.constant 0 : i32
    return %c0_i32, %c0_i32_0 : i32, i32
  }
  func.func @transform_4(%arg0: i32) -> (i32, i32) {
    %c0_i32 = arith.constant 0 : i32
    %c0_i32_0 = arith.constant 0 : i32
    %c0_i32_1 = arith.constant 0 : i32
    return %c0_i32, %c0_i32_0 : i32, i32
  }
  func.func @transform_5(%arg0: i32) -> (i32, i32) {
    %c0_i32 = arith.constant 0 : i32
    %c0_i32_0 = arith.constant 0 : i32
    %c0_i32_1 = arith.constant 0 : i32
    return %c0_i32, %c0_i32_0 : i32, i32
  }
  func.func @transform_6(%arg0: i32) -> (i32, i32) {
    %c0_i32 = arith.constant 0 : i32
    %c0_i32_0 = arith.constant 0 : i32
    %c0_i32_1 = arith.constant 0 : i32
    return %c0_i32, %c0_i32_0 : i32, i32
  }
  func.func @transform_7(%arg0: i32) -> (i32, i32) {
    %c0_i32 = arith.constant 0 : i32
    %c0_i32_0 = arith.constant 0 : i32
    %c0_i32_1 = arith.constant 0 : i32
    return %c0_i32, %c0_i32_0 : i32, i32
  }
  func.func @transform_8(%arg0: i32) -> (i32, i32) {
    %c0_i32 = arith.constant 0 : i32
    %c0_i32_0 = arith.constant 0 : i32
    return %c0_i32, %arg0 : i32, i32
  }
}

</mosaic_0001>

<llo_original>
// kernel: tile.8
$region0: #{tile.8}
  #allocation0 [shape = 's32[1]{0}', space=sflag, size = 0x4, scoped, tag = 'scoped memory for tile.8']
  %s0 = inlined_call_operand.vmem [shape: f32[16], index: 0, kind: input, shape index: {}]
  %s1 = inlined_call_operand.vmem [shape: f32[8,16], index: 1, kind: output, shape index: {}]
  // Predicated region
  $region2: #{tile.8} parent=0 // pred_check
    _
  $region3: #{tile.8} parent=0 // pred_check_branch
    %3 = sbr.rel (0) target = $region5
  $region4: #{tile.8} parent=0 // pred_region
    _
  $region5: #{tile.8} parent=0 // pred_fallthru
    _
  %v4 = vld [vmem:[%s0] ss:$0 sm:$0xff]
  %5 = vst [vmem:[%s1] sm:$0xff] %v4

// kernel: tile.0
$region0: #{tile.0}
  %s0 = inlined_call_operand.vmem [shape: f32[8,16], index: 0, kind: input, shape index: {}]
  %s1 = inlined_call_operand.vmem [shape: f32[128,1], index: 1, kind: output, shape index: {}]
  %v2 = vld [vmem:[%s0] sm:$0xff]
  %vm3 = vcmask 7168
  %4 = vst.msk [vmem:[%s1] ss:$16 sm:$0x3] %vm3, %v2
  %5 = vst.msk [vmem:[%s1] ss:$16 sm:$0xc] %vm3, %v2
  %6 = vst.msk [vmem:[%s1] ss:$16 sm:$0x30] %vm3, %v2
  %7 = vst.msk [vmem:[%s1] ss:$16 sm:$0xc0] %vm3, %v2
  %v8 = vld [vmem:[%s0] sm:$0xff]
  %9 = vrot.lane.b32.xlu0 %v8, 127
  %v10 = vpop.permute.xlu0 %9
  %vm11 = vcmask 7168
  %s12 = scalar_lea.vmem %s1, 1
  %13 = vst.msk [vmem:[%s12] ss:$16 sm:$0x3] %vm11, %v10
  %s14 = scalar_lea.vmem %s1, 1
  %15 = vst.msk [vmem:[%s14] ss:$16 sm:$0xc] %vm11, %v10
  %s16 = scalar_lea.vmem %s1, 1
  %17 = vst.msk [vmem:[%s16] ss:$16 sm:$0x30] %vm11, %v10
  %s18 = scalar_lea.vmem %s1, 1
  %19 = vst.msk [vmem:[%s18] ss:$16 sm:$0xc0] %vm11, %v10
  %v20 = vld [vmem:[%s0] sm:$0xff]
  %21 = vrot.lane.b32.xlu0 %v20, 126
  %v22 = vpop.permute.xlu0 %21
  %vm23 = vcmask 7168
  %s24 = scalar_lea.vmem %s1, 2
  %25 = vst.msk [vmem:[%s24] ss:$16 sm:$0x3] %vm23, %v22
  %s26 = scalar_lea.vmem %s1, 2
  %27 = vst.msk [vmem:[%s26] ss:$16 sm:$0xc] %vm23, %v22
  %s28 = scalar_lea.vmem %s1, 2
  %29 = vst.msk [vmem:[%s28] ss:$16 sm:$0x30] %vm23, %v22
  %s30 = scalar_lea.vmem %s1, 2
  %31 = vst.msk [vmem:[%s30] ss:$16 sm:$0xc0] %vm23, %v22
  %v32 = vld [vmem:[%s0] sm:$0xff]
  %33 = vrot.lane.b32.xlu0 %v32, 125
  %v34 = vpop.permute.xlu0 %33
  %vm35 = vcmask 7168
  %s36 = scalar_lea.vmem %s1, 3
  %37 = vst.msk [vmem:[%s36] ss:$16 sm:$0x3] %vm35, %v34
  %s38 = scalar_lea.vmem %s1, 3
  %39 = vst.msk [vmem:[%s38] ss:$16 sm:$0xc] %vm35, %v34
  %s40 = scalar_lea.vmem %s1, 3
  %41 = vst.msk [vmem:[%s40] ss:$16 sm:$0x30] %vm35, %v34
  %s42 = scalar_lea.vmem %s1, 3
  %43 = vst.msk [vmem:[%s42] ss:$16 sm:$0xc0] %vm35, %v34
  %v44 = vld [vmem:[%s0] sm:$0xff]
  %45 = vrot.lane.b32.xlu0 %v44, 124
  %v46 = vpop.permute.xlu0 %45
  %vm47 = vcmask 7168
  %s48 = scalar_lea.vmem %s1, 4
  %49 = vst.msk [vmem:[%s48] ss:$16 sm:$0x3] %vm47, %v46
  %s50 = scalar_lea.vmem %s1, 4
  %51 = vst.msk [vmem:[%s50] ss:$16 sm:$0xc] %vm47, %v46
  %s52 = scalar_lea.vmem %s1, 4
  %53 = vst.msk [vmem:[%s52] ss:$16 sm:$0x30] %vm47, %v46
  %s54 = scalar_lea.vmem %s1, 4
  %55 = vst.msk [vmem:[%s54] ss:$16 sm:$0xc0] %vm47, %v46
  %v56 = vld [vmem:[%s0] sm:$0xff]
  %57 = vrot.lane.b32.xlu0 %v56, 123
  %v58 = vpop.permute.xlu0 %57
  %vm59 = vcmask 7168
  %s60 = scalar_lea.vmem %s1, 5
  %61 = vst.msk [vmem:[%s60] ss:$16 sm:$0x3] %vm59, %v58
  %s62 = scalar_lea.vmem %s1, 5
  %63 = vst.msk [vmem:[%s62] ss:$16 sm:$0xc] %vm59, %v58
  %s64 = scalar_lea.vmem %s1, 5
  %65 = vst.msk [vmem:[%s64] ss:$16 sm:$0x30] %vm59, %v58
  %s66 = scalar_lea.vmem %s1, 5
  %67 = vst.msk [vmem:[%s66] ss:$16 sm:$0xc0] %vm59, %v58
  %v68 = vld [vmem:[%s0] sm:$0xff]
  %69 = vrot.lane.b32.xlu0 %v68, 122
  %v70 = vpop.permute.xlu0 %69
  %vm71 = vcmask 7168
  %s72 = scalar_lea.vmem %s1, 6
  %73 = vst.msk [vmem:[%s72] ss:$16 sm:$0x3] %vm71, %v70
  %s74 = scalar_lea.vmem %s1, 6
  %75 = vst.msk [vmem:[%s74] ss:$16 sm:$0xc] %vm71, %v70
  %s76 = scalar_lea.vmem %s1, 6
  %77 = vst.msk [vmem:[%s76] ss:$16 sm:$0x30] %vm71, %v70
  %s78 = scalar_lea.vmem %s1, 6
  %79 = vst.msk [vmem:[%s78] ss:$16 sm:$0xc0] %vm71, %v70
  %v80 = vld [vmem:[%s0] sm:$0xff]
  %81 = vrot.lane.b32.xlu0 %v80, 121
  %v82 = vpop.permute.xlu0 %81
  %vm83 = vcmask 7168
  %s84 = scalar_lea.vmem %s1, 7
  %85 = vst.msk [vmem:[%s84] ss:$16 sm:$0x3] %vm83, %v82
  %s86 = scalar_lea.vmem %s1, 7
  %87 = vst.msk [vmem:[%s86] ss:$16 sm:$0xc] %vm83, %v82
  %s88 = scalar_lea.vmem %s1, 7
  %89 = vst.msk [vmem:[%s88] ss:$16 sm:$0x30] %vm83, %v82
  %s90 = scalar_lea.vmem %s1, 7
  %91 = vst.msk [vmem:[%s90] ss:$16 sm:$0xc0] %vm83, %v82
  %v92 = vld [vmem:[%s0] sm:$0xff]
  %93 = vrot.lane.b32.xlu0 %v92, 120
  %v94 = vpop.permute.xlu0 %93
  %vm95 = vcmask 7168
  %s96 = scalar_lea.vmem %s1, 8
  %97 = vst.msk [vmem:[%s96] ss:$16 sm:$0x3] %vm95, %v94
  %s98 = scalar_lea.vmem %s1, 8
  %99 = vst.msk [vmem:[%s98] ss:$16 sm:$0xc] %vm95, %v94
  %s100 = scalar_lea.vmem %s1, 8
  %101 = vst.msk [vmem:[%s100] ss:$16 sm:$0x30] %vm95, %v94
  %s102 = scalar_lea.vmem %s1, 8
  %103 = vst.msk [vmem:[%s102] ss:$16 sm:$0xc0] %vm95, %v94
  %v104 = vld [vmem:[%s0] sm:$0xff]
  %105 = vrot.lane.b32.xlu0 %v104, 119
  %v106 = vpop.permute.xlu0 %105
  %vm107 = vcmask 7168
  %s108 = scalar_lea.vmem %s1, 9
  %109 = vst.msk [vmem:[%s108] ss:$16 sm:$0x3] %vm107, %v106
  %s110 = scalar_lea.vmem %s1, 9
  %111 = vst.msk [vmem:[%s110] ss:$16 sm:$0xc] %vm107, %v106
  %s112 = scalar_lea.vmem %s1, 9
  %113 = vst.msk [vmem:[%s112] ss:$16 sm:$0x30] %vm107, %v106
  %s114 = scalar_lea.vmem %s1, 9
  %115 = vst.msk [vmem:[%s114] ss:$16 sm:$0xc0] %vm107, %v106
  %v116 = vld [vmem:[%s0] sm:$0xff]
  %117 = vrot.lane.b32.xlu0 %v116, 118
  %v118 = vpop.permute.xlu0 %117
  %vm119 = vcmask 7168
  %s120 = scalar_lea.vmem %s1, 10
  %121 = vst.msk [vmem:[%s120] ss:$16 sm:$0x3] %vm119, %v118
  %s122 = scalar_lea.vmem %s1, 10
  %123 = vst.msk [vmem:[%s122] ss:$16 sm:$0xc] %vm119, %v118
  %s124 = scalar_lea.vmem %s1, 10
  %125 = vst.msk [vmem:[%s124] ss:$16 sm:$0x30] %vm119, %v118
  %s126 = scalar_lea.vmem %s1, 10
  %127 = vst.msk [vmem:[%s126] ss:$16 sm:$0xc0] %vm119, %v118
  %v128 = vld [vmem:[%s0] sm:$0xff]
  %129 = vrot.lane.b32.xlu0 %v128, 117
  %v130 = vpop.permute.xlu0 %129
  %vm131 = vcmask 7168
  %s132 = scalar_lea.vmem %s1, 11
  %133 = vst.msk [vmem:[%s132] ss:$16 sm:$0x3] %vm131, %v130
  %s134 = scalar_lea.vmem %s1, 11
  %135 = vst.msk [vmem:[%s134] ss:$16 sm:$0xc] %vm131, %v130
  %s136 = scalar_lea.vmem %s1, 11
  %137 = vst.msk [vmem:[%s136] ss:$16 sm:$0x30] %vm131, %v130
  %s138 = scalar_lea.vmem %s1, 11
  %139 = vst.msk [vmem:[%s138] ss:$16 sm:$0xc0] %vm131, %v130
  %v140 = vld [vmem:[%s0] sm:$0xff]
  %141 = vrot.lane.b32.xlu0 %v140, 116
  %v142 = vpop.permute.xlu0 %141
  %vm143 = vcmask 7168
  %s144 = scalar_lea.vmem %s1, 12
  %145 = vst.msk [vmem:[%s144] ss:$16 sm:$0x3] %vm143, %v142
  %s146 = scalar_lea.vmem %s1, 12
  %147 = vst.msk [vmem:[%s146] ss:$16 sm:$0xc] %vm143, %v142
  %s148 = scalar_lea.vmem %s1, 12
  %149 = vst.msk [vmem:[%s148] ss:$16 sm:$0x30] %vm143, %v142
  %s150 = scalar_lea.vmem %s1, 12
  %151 = vst.msk [vmem:[%s150] ss:$16 sm:$0xc0] %vm143, %v142
  %v152 = vld [vmem:[%s0] sm:$0xff]
  %153 = vrot.lane.b32.xlu0 %v152, 115
  %v154 = vpop.permute.xlu0 %153
  %vm155 = vcmask 7168
  %s156 = scalar_lea.vmem %s1, 13
  %157 = vst.msk [vmem:[%s156] ss:$16 sm:$0x3] %vm155, %v154
  %s158 = scalar_lea.vmem %s1, 13
  %159 = vst.msk [vmem:[%s158] ss:$16 sm:$0xc] %vm155, %v154
  %s160 = scalar_lea.vmem %s1, 13
  %161 = vst.msk [vmem:[%s160] ss:$16 sm:$0x30] %vm155, %v154
  %s162 = scalar_lea.vmem %s1, 13
  %163 = vst.msk [vmem:[%s162] ss:$16 sm:$0xc0] %vm155, %v154
  %v164 = vld [vmem:[%s0] sm:$0xff]
  %165 = vrot.lane.b32.xlu0 %v164, 114
  %v166 = vpop.permute.xlu0 %165
  %vm167 = vcmask 7168
  %s168 = scalar_lea.vmem %s1, 14
  %169 = vst.msk [vmem:[%s168] ss:$16 sm:$0x3] %vm167, %v166
  %s170 = scalar_lea.vmem %s1, 14
  %171 = vst.msk [vmem:[%s170] ss:$16 sm:$0xc] %vm167, %v166
  %s172 = scalar_lea.vmem %s1, 14
  %173 = vst.msk [vmem:[%s172] ss:$16 sm:$0x30] %vm167, %v166
  %s174 = scalar_lea.vmem %s1, 14
  %175 = vst.msk [vmem:[%s174] ss:$16 sm:$0xc0] %vm167, %v166
  %v176 = vld [vmem:[%s0] sm:$0xff]
  %177 = vrot.lane.b32.xlu0 %v176, 113
  %v178 = vpop.permute.xlu0 %177
  %vm179 = vcmask 7168
  %s180 = scalar_lea.vmem %s1, 15
  %181 = vst.msk [vmem:[%s180] ss:$16 sm:$0x3] %vm179, %v178
  %s182 = scalar_lea.vmem %s1, 15
  %183 = vst.msk [vmem:[%s182] ss:$16 sm:$0xc] %vm179, %v178
  %s184 = scalar_lea.vmem %s1, 15
  %185 = vst.msk [vmem:[%s184] ss:$16 sm:$0x30] %vm179, %v178
  %s186 = scalar_lea.vmem %s1, 15
  %187 = vst.msk [vmem:[%s186] ss:$16 sm:$0xc0] %vm179, %v178

// kernel: starnet_forward.1
$region0: #{starnet_forward.1}
  #allocation0 [shape = 'u32[]', space=smem, size = 0x4, offset = 0x4, fixed_abs, tag = 'smem constant byte address 0x4 - core index']
  #allocation1 [shape = 'u32[144,128]{1,0:T(1,128)}', space=vmem, size = 0x12000, scoped, tag = 'internal scratch']
  #allocation2 [shape = 'f32[256,128]{1,0:T(8,128)}', space=vmem, size = 0x20000, scoped, tag = 'scratch operand']
  #allocation3 [shape = 'f32[200,128]{1,0:T(8,128)}', space=vmem, size = 0x19000, scoped, tag = 'scratch operand']
  %s0 = inlined_call_operand.vmem [shape: f32[72,128], index: 0, kind: input, shape index: {}]
  %s1 = inlined_call_operand.vmem [shape: f32[256,72], index: 1, kind: input, shape index: {}]
  %s2 = inlined_call_operand.vmem [shape: f32[128,72], index: 2, kind: input, shape index: {}]
  %s3 = inlined_call_operand.vmem [shape: f32[64,200], index: 3, kind: input, shape index: {}]
  %s4 = inlined_call_operand.vmem [shape: f32[32,64], index: 4, kind: input, shape index: {}]
  %s5 = inlined_call_operand.vmem [shape: f32[32,1], index: 5, kind: input, shape index: {}]
  %s6 = inlined_call_operand.vmem [shape: f32[8,32], index: 6, kind: input, shape index: {}]
  %s7 = inlined_call_operand.vmem [shape: f32[8,1], index: 7, kind: input, shape index: {}]
  %s8 = inlined_call_operand.vmem [shape: f32[8,128], index: 8, kind: output, shape index: {}]
  %s9 = sld [smem:[#allocation0]]
  $region42: #{starnet_forward.1} parent=0
    _
  %s11 = ssub.s32 1, %s9
  %s12 = scalar_select 0, %s11, %s9
  // Predicated region
  $region2: #{starnet_forward.1} parent=0 // pred_check
    _
  $region3: #{starnet_forward.1} parent=0 // pred_check_branch
    %14 = sbr.rel (0) target = $region5
  $region4: #{starnet_forward.1} parent=0 // pred_region
    _
  $region5: #{starnet_forward.1} parent=0 // pred_fallthru
    _
  // Predicated region
  $region6: #{starnet_forward.1} parent=0 // pred_check
    _
  $region7: #{starnet_forward.1} parent=0 // pred_check_branch
    %16 = sbr.rel (0) target = $region9
  $region8: #{starnet_forward.1} parent=0 // pred_region
    _
  $region9: #{starnet_forward.1} parent=0 // pred_fallthru
    _
  // Predicated region
  $region10: #{starnet_forward.1} parent=0 // pred_check
    _
  $region11: #{starnet_forward.1} parent=0 // pred_check_branch
    %18 = sbr.rel (0) target = $region13
  $region12: #{starnet_forward.1} parent=0 // pred_region
    _
  $region13: #{starnet_forward.1} parent=0 // pred_fallthru
    _
  // Predicated region
  $region14: #{starnet_forward.1} parent=0 // pred_check
    _
  $region15: #{starnet_forward.1} parent=0 // pred_check_branch
    %20 = sbr.rel (0) target = $region17
  $region16: #{starnet_forward.1} parent=0 // pred_region
    _
  $region17: #{starnet_forward.1} parent=0 // pred_fallthru
    _
  // Predicated region
  $region18: #{starnet_forward.1} parent=0 // pred_check
    _
  $region19: #{starnet_forward.1} parent=0 // pred_check_branch
    %22 = sbr.rel (0) target = $region21
  $region20: #{starnet_forward.1} parent=0 // pred_region
    _
  $region21: #{starnet_forward.1} parent=0 // pred_fallthru
    _
  // Predicated region
  $region22: #{starnet_forward.1} parent=0 // pred_check
    _
  $region23: #{starnet_forward.1} parent=0 // pred_check_branch
    %24 = sbr.rel (0) target = $region25
  $region24: #{starnet_forward.1} parent=0 // pred_region
    _
  $region25: #{starnet_forward.1} parent=0 // pred_fallthru
    _
  // Predicated region
  $region26: #{starnet_forward.1} parent=0 // pred_check
    _
  $region27: #{starnet_forward.1} parent=0 // pred_check_branch
    %26 = sbr.rel (0) target = $region29
  $region28: #{starnet_forward.1} parent=0 // pred_region
    _
  $region29: #{starnet_forward.1} parent=0 // pred_fallthru
    _
  // Predicated region
  $region30: #{starnet_forward.1} parent=0 // pred_check
    _
  $region31: #{starnet_forward.1} parent=0 // pred_check_branch
    %28 = sbr.rel (0) target = $region33
  $region32: #{starnet_forward.1} parent=0 // pred_region
    _
  $region33: #{starnet_forward.1} parent=0 // pred_fallthru
    _
  %v29 = vlaneseq
  %v30 = vshrl.u32 %v29, 7
  %vm31 = vcmp.eq.s32.totalorder %v30, 0
  %v32 = vsel %vm31, 1, 0
  %v33 = vcvt.s32.f32 %v32
  %v34 = vld [vmem:[%s0] sm:$0xff]
  %v35 = vld [vmem:[%s0 + $0x8] sm:$0xff]
  %v36 = vld [vmem:[%s0 + $0x10] sm:$0xff]
  %v37 = vld [vmem:[%s0 + $0x18] sm:$0xff]
  %v38 = vld [vmem:[%s0 + $0x20] sm:$0xff]
  %v39 = vld [vmem:[%s0 + $0x28] sm:$0xff]
  %v40 = vld [vmem:[%s0 + $0x30] sm:$0xff]
  %v41 = vld [vmem:[%s0 + $0x38] sm:$0xff]
  %v42 = vld [vmem:[%s0 + $0x40] sm:$0xff]
  %v43 = vld [vmem:[%s1] sm:$0xff]
  %v44 = vld [vmem:[%s1 + $0x8] sm:$0xff]
  %v45 = vld [vmem:[%s1 + $0x10] sm:$0xff]
  %v46 = vld [vmem:[%s1 + $0x18] sm:$0xff]
  %v47 = vld [vmem:[%s1 + $0x20] sm:$0xff]
  %v48 = vld [vmem:[%s1 + $0x28] sm:$0xff]
  %v49 = vld [vmem:[%s1 + $0x30] sm:$0xff]
  %v50 = vld [vmem:[%s1 + $0x38] sm:$0xff]
  %vm51 = vcmask 588800
  %v53 = vsel %vm51, %v43, 0
  %v56 = vsel %vm51, %v44, 0
  %v59 = vsel %vm51, %v45, 0
  %v62 = vsel %vm51, %v46, 0
  %v65 = vsel %vm51, %v47, 0
  %v68 = vsel %vm51, %v48, 0
  %v71 = vsel %vm51, %v49, 0
  %v74 = vsel %vm51, %v50, 0
  %76 = vmatprep.subr.mxu0 0.0
  %77 = vmatpush1.msra.mxu0 0.0
  %78 = vmatprep.subr.mxu0 0.0
  %79 = vmatpush1.msra.mxu0 0.0
  %80 = vmatprep.subr.mxu0 0.0
  %81 = vmatpush1.msra.mxu0 0.0
  %82 = vmatprep.subr.mxu0 0.0
  %83 = vmatpush1.msra.mxu0 0.0
  %84 = vmatprep.subr.mxu0 0.0
  %85 = vmatpush1.msra.mxu0 0.0
  %86 = vmatprep.subr.mxu0 0.0
  %87 = vmatpush1.msra.mxu0 0.0
  %88 = vmatprep.subr.mxu0 0.0
  %89 = vmatpush1.msra.mxu0 0.0
  %90 = vmatprep.subr.mxu0 0.0
  %91 = vmatpush1.msra.mxu0 %v42
  %92 = vmatprep.subr.mxu0 0.0
  %93 = vmatpush1.msra.mxu0 %v41
  %94 = vmatprep.subr.mxu0 0.0
  %95 = vmatpush1.msra.mxu0 %v40
  %96 = vmatprep.subr.mxu0 0.0
  %97 = vmatpush1.msra.mxu0 %v39
  %98 = vmatprep.subr.mxu0 0.0
  %99 = vmatpush1.msra.mxu0 %v38
  %100 = vmatprep.subr.mxu0 0.0
  %101 = vmatpush1.msra.mxu0 %v37
  %102 = vmatprep.subr.mxu0 0.0
  %103 = vmatpush1.msra.mxu0 %v36
  %104 = vmatprep.subr.mxu0 0.0
  %105 = vmatpush1.msra.mxu0 %v35
  %106 = vmatprep.subr.mxu0 0.0
  %107 = vmatpush1.msra.mxu0 %v34
  %108 = vmatprep.subr.mxu0 0.0
  %109 = vmatpush2.msra.mxu0 0.0
  %110 = vmatprep.subr.mxu0 0.0
  %111 = vmatpush2.msra.mxu0 0.0
  %112 = vmatprep.subr.mxu0 0.0
  %113 = vmatpush2.msra.mxu0 0.0
  %114 = vmatprep.subr.mxu0 0.0
  %115 = vmatpush2.msra.mxu0 0.0
  %116 = vmatprep.subr.mxu0 0.0
  %117 = vmatpush2.msra.mxu0 0.0
  %118 = vmatprep.subr.mxu0 0.0
  %119 = vmatpush2.msra.mxu0 0.0
  %120 = vmatprep.subr.mxu0 0.0
  %121 = vmatpush2.msra.mxu0 0.0
  %122 = vmatprep.subr.mxu0 0.0
  %123 = vmatpush2.msra.mxu0 0.0
  %124 = vmatprep.subr.mxu0 0.0
  %125 = vmatpush2.msra.mxu0 0.0
  %126 = vmatprep.subr.mxu0 0.0
  %127 = vmatpush2.msra.mxu0 0.0
  %128 = vmatprep.subr.mxu0 0.0
  %129 = vmatpush2.msra.mxu0 0.0
  %130 = vmatprep.subr.mxu0 0.0
  %131 = vmatpush2.msra.mxu0 0.0
  %132 = vmatprep.subr.mxu0 0.0
  %133 = vmatpush2.msra.mxu0 0.0
  %134 = vmatprep.subr.mxu0 0.0
  %135 = vmatpush2.msra.mxu0 0.0
  %136 = vmatprep.subr.mxu0 0.0
  %137 = vmatpush2.msra.mxu0 0.0
  %138 = vmatprep.subr.mxu0 0.0
  %139 = vmatpush2.msra.mxu0 0.0
  %140 = vmatprep.mubr.f32.mxu0 0.0
  %141 = vmatmul.mubr.f32.gmra.mxu0 %v53
  %v142 = vpop.f32.mrf.mxu0
  %v143 = vadd.f32 0.0, %v142
  %v144 = vpop.f32.mrf.mxu0
  %145 = vmatprep.mubr.f32.mxu0 0.0
  %146 = vmatmul.mubr.f32.gmra.mxu0 %v56
  %v147 = vpop.f32.mrf.mxu0
  %v148 = vadd.f32 0.0, %v147
  %v149 = vpop.f32.mrf.mxu0
  %150 = vmatprep.mubr.f32.mxu0 0.0
  %151 = vmatmul.mubr.f32.gmra.mxu0 %v59
  %v152 = vpop.f32.mrf.mxu0
  %v153 = vadd.f32 0.0, %v152
  %v154 = vpop.f32.mrf.mxu0
  %155 = vmatprep.mubr.f32.mxu0 0.0
  %156 = vmatmul.mubr.f32.gmra.mxu0 %v62
  %v157 = vpop.f32.mrf.mxu0
  %v158 = vadd.f32 0.0, %v157
  %v159 = vpop.f32.mrf.mxu0
  %160 = vmatprep.mubr.f32.mxu0 0.0
  %161 = vmatmul.mubr.f32.gmra.mxu0 %v65
  %v162 = vpop.f32.mrf.mxu0
  %v163 = vadd.f32 0.0, %v162
  %v164 = vpop.f32.mrf.mxu0
  %165 = vmatprep.mubr.f32.mxu0 0.0
  %166 = vmatmul.mubr.f32.gmra.mxu0 %v68
  %v167 = vpop.f32.mrf.mxu0
  %v168 = vadd.f32 0.0, %v167
  %v169 = vpop.f32.mrf.mxu0
  %170 = vmatprep.mubr.f32.mxu0 0.0
  %171 = vmatmul.mubr.f32.gmra.mxu0 %v71
  %v172 = vpop.f32.mrf.mxu0
  %v173 = vadd.f32 0.0, %v172
  %v174 = vpop.f32.mrf.mxu0
  %175 = vmatprep.mubr.f32.mxu0 0.0
  %176 = vmatmul.mubr.f32.gmra.mxu0 %v74
  %v177 = vpop.f32.mrf.mxu0
  %v178 = vadd.f32 0.0, %v177
  %v179 = vpop.f32.mrf.mxu0
  %180 = vdwg.mxu0
  %v181 = vmax.f32 %v143, 0.0
  %v182 = vmax.f32 %v148, 0.0
  %v183 = vmax.f32 %v153, 0.0
  %v184 = vmax.f32 %v158, 0.0
  %v185 = vmax.f32 %v163, 0.0
  %v186 = vmax.f32 %v168, 0.0
  %v187 = vmax.f32 %v173, 0.0
  %v188 = vmax.f32 %v178, 0.0
  %189 = vst [vmem:[#allocation2] sm:$0xff] %v181
  %190 = vst [vmem:[#allocation2 + $0x8] sm:$0xff] %v182
  %191 = vst [vmem:[#allocation2 + $0x10] sm:$0xff] %v183
  %192 = vst [vmem:[#allocation2 + $0x18] sm:$0xff] %v184
  %193 = vst [vmem:[#allocation2 + $0x20] sm:$0xff] %v185
  %194 = vst [vmem:[#allocation2 + $0x28] sm:$0xff] %v186
  %195 = vst [vmem:[#allocation2 + $0x30] sm:$0xff] %v187
  %196 = vst [vmem:[#allocation2 + $0x38] sm:$0xff] %v188
  %v197 = vld [vmem:[%s1 + $0x40] sm:$0xff]
  %v198 = vld [vmem:[%s1 + $0x48] sm:$0xff]
  %v199 = vld [vmem:[%s1 + $0x50] sm:$0xff]
  %v200 = vld [vmem:[%s1 + $0x58] sm:$0xff]
  %v201 = vld [vmem:[%s1 + $0x60] sm:$0xff]
  %v202 = vld [vmem:[%s1 + $0x68] sm:$0xff]
  %v203 = vld [vmem:[%s1 + $0x70] sm:$0xff]
  %v204 = vld [vmem:[%s1 + $0x78] sm:$0xff]
  %v206 = vsel %vm51, %v197, 0
  %v209 = vsel %vm51, %v198, 0
  %v212 = vsel %vm51, %v199, 0
  %v215 = vsel %vm51, %v200, 0
  %v218 = vsel %vm51, %v201, 0
  %v221 = vsel %vm51, %v202, 0
  %v224 = vsel %vm51, %v203, 0
  %v227 = vsel %vm51, %v204, 0
  %229 = vmatprep.subr.mxu0 0.0
  %230 = vmatpush1.msra.mxu0 0.0
  %231 = vmatprep.subr.mxu0 0.0
  %232 = vmatpush1.msra.mxu0 0.0
  %233 = vmatprep.subr.mxu0 0.0
  %234 = vmatpush1.msra.mxu0 0.0
  %235 = vmatprep.subr.mxu0 0.0
  %236 = vmatpush1.msra.mxu0 0.0
  %237 = vmatprep.subr.mxu0 0.0
  %238 = vmatpush1.msra.mxu0 0.0
  %239 = vmatprep.subr.mxu0 0.0
  %240 = vmatpush1.msra.mxu0 0.0
  %241 = vmatprep.subr.mxu0 0.0
  %242 = vmatpush1.msra.mxu0 0.0
  %243 = vmatprep.subr.mxu0 0.0
  %244 = vmatpush1.msra.mxu0 %v42
  %245 = vmatprep.subr.mxu0 0.0
  %246 = vmatpush1.msra.mxu0 %v41
  %247 = vmatprep.subr.mxu0 0.0
  %248 = vmatpush1.msra.mxu0 %v40
  %249 = vmatprep.subr.mxu0 0.0
  %250 = vmatpush1.msra.mxu0 %v39
  %251 = vmatprep.subr.mxu0 0.0
  %252 = vmatpush1.msra.mxu0 %v38
  %253 = vmatprep.subr.mxu0 0.0
  %254 = vmatpush1.msra.mxu0 %v37
  %255 = vmatprep.subr.mxu0 0.0
  %256 = vmatpush1.msra.mxu0 %v36
  %257 = vmatprep.subr.mxu0 0.0
  %258 = vmatpush1.msra.mxu0 %v35
  %259 = vmatprep.subr.mxu0 0.0
  %260 = vmatpush1.msra.mxu0 %v34
  %261 = vmatprep.subr.mxu0 0.0
  %262 = vmatpush2.msra.mxu0 0.0
  %263 = vmatprep.subr.mxu0 0.0
  %264 = vmatpush2.msra.mxu0 0.0
  %265 = vmatprep.subr.mxu0 0.0
  %266 = vmatpush2.msra.mxu0 0.0
  %267 = vmatprep.subr.mxu0 0.0
  %268 = vmatpush2.msra.mxu0 0.0
  %269 = vmatprep.subr.mxu0 0.0
  %270 = vmatpush2.msra.mxu0 0.0
  %271 = vmatprep.subr.mxu0 0.0
  %272 = vmatpush2.msra.mxu0 0.0
  %273 = vmatprep.subr.mxu0 0.0
  %274 = vmatpush2.msra.mxu0 0.0
  %275 = vmatprep.subr.mxu0 0.0
  %276 = vmatpush2.msra.mxu0 0.0
  %277 = vmatprep.subr.mxu0 0.0
  %278 = vmatpush2.msra.mxu0 0.0
  %279 = vmatprep.subr.mxu0 0.0
  %280 = vmatpush2.msra.mxu0 0.0
  %281 = vmatprep.subr.mxu0 0.0
  %282 = vmatpush2.msra.mxu0 0.0
  %283 = vmatprep.subr.mxu0 0.0
  %284 = vmatpush2.msra.mxu0 0.0
  %285 = vmatprep.subr.mxu0 0.0
  %286 = vmatpush2.msra.mxu0 0.0
  %287 = vmatprep.subr.mxu0 0.0
  %288 = vmatpush2.msra.mxu0 0.0
  %289 = vmatprep.subr.mxu0 0.0
  %290 = vmatpush2.msra.mxu0 0.0
  %291 = vmatprep.subr.mxu0 0.0
  %292 = vmatpush2.msra.mxu0 0.0
  %293 = vmatprep.mubr.f32.mxu0 0.0
  %294 = vmatmul.mubr.f32.gmra.mxu0 %v206
  %v295 = vpop.f32.mrf.mxu0
  %v296 = vadd.f32 0.0, %v295
  %v297 = vpop.f32.mrf.mxu0
  %298 = vmatprep.mubr.f32.mxu0 0.0
  %299 = vmatmul.mubr.f32.gmra.mxu0 %v209
  %v300 = vpop.f32.mrf.mxu0
  %v301 = vadd.f32 0.0, %v300
  %v302 = vpop.f32.mrf.mxu0
  %303 = vmatprep.mubr.f32.mxu0 0.0
  %304 = vmatmul.mubr.f32.gmra.mxu0 %v212
  %v305 = vpop.f32.mrf.mxu0
  %v306 = vadd.f32 0.0, %v305
  %v307 = vpop.f32.mrf.mxu0
  %308 = vmatprep.mubr.f32.mxu0 0.0
  %309 = vmatmul.mubr.f32.gmra.mxu0 %v215
  %v310 = vpop.f32.mrf.mxu0
  %v311 = vadd.f32 0.0, %v310
  %v312 = vpop.f32.mrf.mxu0
  %313 = vmatprep.mubr.f32.mxu0 0.0
  %314 = vmatmul.mubr.f32.gmra.mxu0 %v218
  %v315 = vpop.f32.mrf.mxu0
  %v316 = vadd.f32 0.0, %v315
  %v317 = vpop.f32.mrf.mxu0
  %318 = vmatprep.mubr.f32.mxu0 0.0
  %319 = vmatmul.mubr.f32.gmra.mxu0 %v221
  %v320 = vpop.f32.mrf.mxu0
  %v321 = vadd.f32 0.0, %v320
  %v322 = vpop.f32.mrf.mxu0
  %323 = vmatprep.mubr.f32.mxu0 0.0
  %324 = vmatmul.mubr.f32.gmra.mxu0 %v224
  %v325 = vpop.f32.mrf.mxu0
  %v326 = vadd.f32 0.0, %v325
  %v327 = vpop.f32.mrf.mxu0
  %328 = vmatprep.mubr.f32.mxu0 0.0
  %329 = vmatmul.mubr.f32.gmra.mxu0 %v227
  %v330 = vpop.f32.mrf.mxu0
  %v331 = vadd.f32 0.0, %v330
  %v332 = vpop.f32.mrf.mxu0
  %333 = vdwg.mxu0
  %v334 = vmax.f32 %v296, 0.0
  %v335 = vmax.f32 %v301, 0.0
  %v336 = vmax.f32 %v306, 0.0
  %v337 = vmax.f32 %v311, 0.0
  %v338 = vmax.f32 %v316, 0.0
  %v339 = vmax.f32 %v321, 0.0
  %v340 = vmax.f32 %v326, 0.0
  %v341 = vmax.f32 %v331, 0.0
  %342 = vst [vmem:[#allocation2 + $0x40] sm:$0xff] %v334
  %343 = vst [vmem:[#allocation2 + $0x48] sm:$0xff] %v335
  %344 = vst [vmem:[#allocation2 + $0x50] sm:$0xff] %v336
  %345 = vst [vmem:[#allocation2 + $0x58] sm:$0xff] %v337
  %346 = vst [vmem:[#allocation2 + $0x60] sm:$0xff] %v338
  %347 = vst [vmem:[#allocation2 + $0x68] sm:$0xff] %v339
  %348 = vst [vmem:[#allocation2 + $0x70] sm:$0xff] %v340
  %349 = vst [vmem:[#allocation2 + $0x78] sm:$0xff] %v341
  %v350 = vld [vmem:[%s1 + $0x80] sm:$0xff]
  %v351 = vld [vmem:[%s1 + $0x88] sm:$0xff]
  %v352 = vld [vmem:[%s1 + $0x90] sm:$0xff]
  %v353 = vld [vmem:[%s1 + $0x98] sm:$0xff]
  %v354 = vld [vmem:[%s1 + $0xa0] sm:$0xff]
  %v355 = vld [vmem:[%s1 + $0xa8] sm:$0xff]
  %v356 = vld [vmem:[%s1 + $0xb0] sm:$0xff]
  %v357 = vld [vmem:[%s1 + $0xb8] sm:$0xff]
  %v359 = vsel %vm51, %v350, 0
  %v362 = vsel %vm51, %v351, 0
  %v365 = vsel %vm51, %v352, 0
  %v368 = vsel %vm51, %v353, 0
  %v371 = vsel %vm51, %v354, 0
  %v374 = vsel %vm51, %v355, 0
  %v377 = vsel %vm51, %v356, 0
  %v380 = vsel %vm51, %v357, 0
  %382 = vmatprep.subr.mxu0 0.0
  %383 = vmatpush1.msra.mxu0 0.0
  %384 = vmatprep.subr.mxu0 0.0
  %385 = vmatpush1.msra.mxu0 0.0
  %386 = vmatprep.subr.mxu0 0.0
  %387 = vmatpush1.msra.mxu0 0.0
  %388 = vmatprep.subr.mxu0 0.0
  %389 = vmatpush1.msra.mxu0 0.0
  %390 = vmatprep.subr.mxu0 0.0
  %391 = vmatpush1.msra.mxu0 0.0
  %392 = vmatprep.subr.mxu0 0.0
  %393 = vmatpush1.msra.mxu0 0.0
  %394 = vmatprep.subr.mxu0 0.0
  %395 = vmatpush1.msra.mxu0 0.0
  %396 = vmatprep.subr.mxu0 0.0
  %397 = vmatpush1.msra.mxu0 %v42
  %398 = vmatprep.subr.mxu0 0.0
  %399 = vmatpush1.msra.mxu0 %v41
  %400 = vmatprep.subr.mxu0 0.0
  %401 = vmatpush1.msra.mxu0 %v40
  %402 = vmatprep.subr.mxu0 0.0
  %403 = vmatpush1.msra.mxu0 %v39
  %404 = vmatprep.subr.mxu0 0.0
  %405 = vmatpush1.msra.mxu0 %v38
  %406 = vmatprep.subr.mxu0 0.0
  %407 = vmatpush1.msra.mxu0 %v37
  %408 = vmatprep.subr.mxu0 0.0
  %409 = vmatpush1.msra.mxu0 %v36
  %410 = vmatprep.subr.mxu0 0.0
  %411 = vmatpush1.msra.mxu0 %v35
  %412 = vmatprep.subr.mxu0 0.0
  %413 = vmatpush1.msra.mxu0 %v34
  %414 = vmatprep.subr.mxu0 0.0
  %415 = vmatpush2.msra.mxu0 0.0
  %416 = vmatprep.subr.mxu0 0.0
  %417 = vmatpush2.msra.mxu0 0.0
  %418 = vmatprep.subr.mxu0 0.0
  %419 = vmatpush2.msra.mxu0 0.0
  %420 = vmatprep.subr.mxu0 0.0
  %421 = vmatpush2.msra.mxu0 0.0
  %422 = vmatprep.subr.mxu0 0.0
  %423 = vmatpush2.msra.mxu0 0.0
  %424 = vmatprep.subr.mxu0 0.0
  %425 = vmatpush2.msra.mxu0 0.0
  %426 = vmatprep.subr.mxu0 0.0
  %427 = vmatpush2.msra.mxu0 0.0
  %428 = vmatprep.subr.mxu0 0.0
  %429 = vmatpush2.msra.mxu0 0.0
  %430 = vmatprep.subr.mxu0 0.0
  %431 = vmatpush2.msra.mxu0 0.0
  %432 = vmatprep.subr.mxu0 0.0
  %433 = vmatpush2.msra.mxu0 0.0
  %434 = vmatprep.subr.mxu0 0.0
  %435 = vmatpush2.msra.mxu0 0.0
  %436 = vmatprep.subr.mxu0 0.0
  %437 = vmatpush2.msra.mxu0 0.0
  %438 = vmatprep.subr.mxu0 0.0
  %439 = vmatpush2.msra.mxu0 0.0
  %440 = vmatprep.subr.mxu0 0.0
  %441 = vmatpush2.msra.mxu0 0.0
  %442 = vmatprep.subr.mxu0 0.0
  %443 = vmatpush2.msra.mxu0 0.0
  %444 = vmatprep.subr.mxu0 0.0
  %445 = vmatpush2.msra.mxu0 0.0
  %446 = vmatprep.mubr.f32.mxu0 0.0
  %447 = vmatmul.mubr.f32.gmra.mxu0 %v359
  %v448 = vpop.f32.mrf.mxu0
  %v449 = vadd.f32 0.0, %v448
  %v450 = vpop.f32.mrf.mxu0
  %451 = vmatprep.mubr.f32.mxu0 0.0
  %452 = vmatmul.mubr.f32.gmra.mxu0 %v362
  %v453 = vpop.f32.mrf.mxu0
  %v454 = vadd.f32 0.0, %v453
  %v455 = vpop.f32.mrf.mxu0
  %456 = vmatprep.mubr.f32.mxu0 0.0
  %457 = vmatmul.mubr.f32.gmra.mxu0 %v365
  %v458 = vpop.f32.mrf.mxu0
  %v459 = vadd.f32 0.0, %v458
  %v460 = vpop.f32.mrf.mxu0
  %461 = vmatprep.mubr.f32.mxu0 0.0
  %462 = vmatmul.mubr.f32.gmra.mxu0 %v368
  %v463 = vpop.f32.mrf.mxu0
  %v464 = vadd.f32 0.0, %v463
  %v465 = vpop.f32.mrf.mxu0
  %466 = vmatprep.mubr.f32.mxu0 0.0
  %467 = vmatmul.mubr.f32.gmra.mxu0 %v371
  %v468 = vpop.f32.mrf.mxu0
  %v469 = vadd.f32 0.0, %v468
  %v470 = vpop.f32.mrf.mxu0
  %471 = vmatprep.mubr.f32.mxu0 0.0
  %472 = vmatmul.mubr.f32.gmra.mxu0 %v374
  %v473 = vpop.f32.mrf.mxu0
  %v474 = vadd.f32 0.0, %v473
  %v475 = vpop.f32.mrf.mxu0
  %476 = vmatprep.mubr.f32.mxu0 0.0
  %477 = vmatmul.mubr.f32.gmra.mxu0 %v377
  %v478 = vpop.f32.mrf.mxu0
  %v479 = vadd.f32 0.0, %v478
  %v480 = vpop.f32.mrf.mxu0
  %481 = vmatprep.mubr.f32.mxu0 0.0
  %482 = vmatmul.mubr.f32.gmra.mxu0 %v380
  %v483 = vpop.f32.mrf.mxu0
  %v484 = vadd.f32 0.0, %v483
  %v485 = vpop.f32.mrf.mxu0
  %486 = vdwg.mxu0
  %v487 = vmax.f32 %v449, 0.0
  %v488 = vmax.f32 %v454, 0.0
  %v489 = vmax.f32 %v459, 0.0
  %v490 = vmax.f32 %v464, 0.0
  %v491 = vmax.f32 %v469, 0.0
  %v492 = vmax.f32 %v474, 0.0
  %v493 = vmax.f32 %v479, 0.0
  %v494 = vmax.f32 %v484, 0.0
  %495 = vst [vmem:[#allocation2 + $0x80] sm:$0xff] %v487
  %496 = vst [vmem:[#allocation2 + $0x88] sm:$0xff] %v488
  %497 = vst [vmem:[#allocation2 + $0x90] sm:$0xff] %v489
  %498 = vst [vmem:[#allocation2 + $0x98] sm:$0xff] %v490
  %499 = vst [vmem:[#allocation2 + $0xa0] sm:$0xff] %v491
  %500 = vst [vmem:[#allocation2 + $0xa8] sm:$0xff] %v492
  %501 = vst [vmem:[#allocation2 + $0xb0] sm:$0xff] %v493
  %502 = vst [vmem:[#allocation2 + $0xb8] sm:$0xff] %v494
  %v503 = vld [vmem:[%s1 + $0xc0] sm:$0xff]
  %v504 = vld [vmem:[%s1 + $0xc8] sm:$0xff]
  %v505 = vld [vmem:[%s1 + $0xd0] sm:$0xff]
  %v506 = vld [vmem:[%s1 + $0xd8] sm:$0xff]
  %v507 = vld [vmem:[%s1 + $0xe0] sm:$0xff]
  %v508 = vld [vmem:[%s1 + $0xe8] sm:$0xff]
  %v509 = vld [vmem:[%s1 + $0xf0] sm:$0xff]
  %v510 = vld [vmem:[%s1 + $0xf8] sm:$0xff]
  %v512 = vsel %vm51, %v503, 0
  %v515 = vsel %vm51, %v504, 0
  %v518 = vsel %vm51, %v505, 0
  %v521 = vsel %vm51, %v506, 0
  %v524 = vsel %vm51, %v507, 0
  %v527 = vsel %vm51, %v508, 0
  %v530 = vsel %vm51, %v509, 0
  %v533 = vsel %vm51, %v510, 0
  %535 = vmatprep.subr.mxu0 0.0
  %536 = vmatpush1.msra.mxu0 0.0
  %537 = vmatprep.subr.mxu0 0.0
  %538 = vmatpush1.msra.mxu0 0.0
  %539 = vmatprep.subr.mxu0 0.0
  %540 = vmatpush1.msra.mxu0 0.0
  %541 = vmatprep.subr.mxu0 0.0
  %542 = vmatpush1.msra.mxu0 0.0
  %543 = vmatprep.subr.mxu0 0.0
  %544 = vmatpush1.msra.mxu0 0.0
  %545 = vmatprep.subr.mxu0 0.0
  %546 = vmatpush1.msra.mxu0 0.0
  %547 = vmatprep.subr.mxu0 0.0
  %548 = vmatpush1.msra.mxu0 0.0
  %549 = vmatprep.subr.mxu0 0.0
  %550 = vmatpush1.msra.mxu0 %v42
  %551 = vmatprep.subr.mxu0 0.0
  %552 = vmatpush1.msra.mxu0 %v41
  %553 = vmatprep.subr.mxu0 0.0
  %554 = vmatpush1.msra.mxu0 %v40
  %555 = vmatprep.subr.mxu0 0.0
  %556 = vmatpush1.msra.mxu0 %v39
  %557 = vmatprep.subr.mxu0 0.0
  %558 = vmatpush1.msra.mxu0 %v38
  %559 = vmatprep.subr.mxu0 0.0
  %560 = vmatpush1.msra.mxu0 %v37
  %561 = vmatprep.subr.mxu0 0.0
  %562 = vmatpush1.msra.mxu0 %v36
  %563 = vmatprep.subr.mxu0 0.0
  %564 = vmatpush1.msra.mxu0 %v35
  %565 = vmatprep.subr.mxu0 0.0
  %566 = vmatpush1.msra.mxu0 %v34
  %567 = vmatprep.subr.mxu0 0.0
  %568 = vmatpush2.msra.mxu0 0.0
  %569 = vmatprep.subr.mxu0 0.0
  %570 = vmatpush2.msra.mxu0 0.0
  %571 = vmatprep.subr.mxu0 0.0
  %572 = vmatpush2.msra.mxu0 0.0
  %573 = vmatprep.subr.mxu0 0.0
  %574 = vmatpush2.msra.mxu0 0.0
  %575 = vmatprep.subr.mxu0 0.0
  %576 = vmatpush2.msra.mxu0 0.0
  %577 = vmatprep.subr.mxu0 0.0
  %578 = vmatpush2.msra.mxu0 0.0
  %579 = vmatprep.subr.mxu0 0.0
  %580 = vmatpush2.msra.mxu0 0.0
  %581 = vmatprep.subr.mxu0 0.0
  %582 = vmatpush2.msra.mxu0 0.0
  %583 = vmatprep.subr.mxu0 0.0
  %584 = vmatpush2.msra.mxu0 0.0
  %585 = vmatprep.subr.mxu0 0.0
  %586 = vmatpush2.msra.mxu0 0.0
  %587 = vmatprep.subr.mxu0 0.0
  %588 = vmatpush2.msra.mxu0 0.0
  %589 = vmatprep.subr.mxu0 0.0
  %590 = vmatpush2.msra.mxu0 0.0
  %591 = vmatprep.subr.mxu0 0.0
  %592 = vmatpush2.msra.mxu0 0.0
  %593 = vmatprep.subr.mxu0 0.0
  %594 = vmatpush2.msra.mxu0 0.0
  %595 = vmatprep.subr.mxu0 0.0
  %596 = vmatpush2.msra.mxu0 0.0
  %597 = vmatprep.subr.mxu0 0.0
  %598 = vmatpush2.msra.mxu0 0.0
  %599 = vmatprep.mubr.f32.mxu0 0.0
  %600 = vmatmul.mubr.f32.gmra.mxu0 %v512
  %v601 = vpop.f32.mrf.mxu0
  %v602 = vadd.f32 0.0, %v601
  %v603 = vpop.f32.mrf.mxu0
  %604 = vmatprep.mubr.f32.mxu0 0.0
  %605 = vmatmul.mubr.f32.gmra.mxu0 %v515
  %v606 = vpop.f32.mrf.mxu0
  %v607 = vadd.f32 0.0, %v606
  %v608 = vpop.f32.mrf.mxu0
  %609 = vmatprep.mubr.f32.mxu0 0.0
  %610 = vmatmul.mubr.f32.gmra.mxu0 %v518
  %v611 = vpop.f32.mrf.mxu0
  %v612 = vadd.f32 0.0, %v611
  %v613 = vpop.f32.mrf.mxu0
  %614 = vmatprep.mubr.f32.mxu0 0.0
  %615 = vmatmul.mubr.f32.gmra.mxu0 %v521
  %v616 = vpop.f32.mrf.mxu0
  %v617 = vadd.f32 0.0, %v616
  %v618 = vpop.f32.mrf.mxu0
  %619 = vmatprep.mubr.f32.mxu0 0.0
  %620 = vmatmul.mubr.f32.gmra.mxu0 %v524
  %v621 = vpop.f32.mrf.mxu0
  %v622 = vadd.f32 0.0, %v621
  %v623 = vpop.f32.mrf.mxu0
  %624 = vmatprep.mubr.f32.mxu0 0.0
  %625 = vmatmul.mubr.f32.gmra.mxu0 %v527
  %v626 = vpop.f32.mrf.mxu0
  %v627 = vadd.f32 0.0, %v626
  %v628 = vpop.f32.mrf.mxu0
  %629 = vmatprep.mubr.f32.mxu0 0.0
  %630 = vmatmul.mubr.f32.gmra.mxu0 %v530
  %v631 = vpop.f32.mrf.mxu0
  %v632 = vadd.f32 0.0, %v631
  %v633 = vpop.f32.mrf.mxu0
  %634 = vmatprep.mubr.f32.mxu0 0.0
  %635 = vmatmul.mubr.f32.gmra.mxu0 %v533
  %v636 = vpop.f32.mrf.mxu0
  %v637 = vadd.f32 0.0, %v636
  %v638 = vpop.f32.mrf.mxu0
  %639 = vdwg.mxu0
  %v640 = vmax.f32 %v602, 0.0
  %v641 = vmax.f32 %v607, 0.0
  %v642 = vmax.f32 %v612, 0.0
  %v643 = vmax.f32 %v617, 0.0
  %v644 = vmax.f32 %v622, 0.0
  %v645 = vmax.f32 %v627, 0.0
  %v646 = vmax.f32 %v632, 0.0
  %v647 = vmax.f32 %v637, 0.0
  %648 = vst [vmem:[#allocation2 + $0xc0] sm:$0xff] %v640
  %649 = vst [vmem:[#allocation2 + $0xc8] sm:$0xff] %v641
  %650 = vst [vmem:[#allocation2 + $0xd0] sm:$0xff] %v642
  %651 = vst [vmem:[#allocation2 + $0xd8] sm:$0xff] %v643
  %652 = vst [vmem:[#allocation2 + $0xe0] sm:$0xff] %v644
  %653 = vst [vmem:[#allocation2 + $0xe8] sm:$0xff] %v645
  %654 = vst [vmem:[#allocation2 + $0xf0] sm:$0xff] %v646
  %655 = vst [vmem:[#allocation2 + $0xf8] sm:$0xff] %v647
  %v656 = vld [vmem:[#allocation2] sm:$0xff]
  %v657 = vld [vmem:[#allocation2 + $0x8] sm:$0xff]
  %v658 = vld [vmem:[#allocation2 + $0x40] sm:$0xff]
  %v659 = vld [vmem:[#allocation2 + $0x48] sm:$0xff]
  %v660 = vld [vmem:[#allocation2 + $0x80] sm:$0xff]
  %v661 = vld [vmem:[#allocation2 + $0x88] sm:$0xff]
  %v662 = vld [vmem:[#allocation2 + $0xc0] sm:$0xff]
  %v663 = vld [vmem:[#allocation2 + $0xc8] sm:$0xff]
  %v664 = vld [vmem:[%s2] sm:$0xff]
  %v665 = vld [vmem:[%s2 + $0x8] sm:$0xff]
  %v666 = vld [vmem:[%s2 + $0x10] sm:$0xff]
  %v667 = vld [vmem:[%s2 + $0x18] sm:$0xff]
  %v668 = vld [vmem:[%s2 + $0x20] sm:$0xff]
  %v669 = vld [vmem:[%s2 + $0x28] sm:$0xff]
  %v670 = vld [vmem:[%s2 + $0x30] sm:$0xff]
  %v671 = vld [vmem:[%s2 + $0x38] sm:$0xff]
  %v673 = vsel %vm51, %v664, 0
  %v676 = vsel %vm51, %v665, 0
  %v679 = vsel %vm51, %v666, 0
  %v682 = vsel %vm51, %v667, 0
  %v685 = vsel %vm51, %v668, 0
  %v688 = vsel %vm51, %v669, 0
  %v691 = vsel %vm51, %v670, 0
  %v694 = vsel %vm51, %v671, 0
  %696 = vmatprep.subr.mxu0 0.0
  %697 = vmatpush1.msra.mxu0 0.0
  %698 = vmatprep.subr.mxu0 0.0
  %699 = vmatpush1.msra.mxu0 0.0
  %700 = vmatprep.subr.mxu0 0.0
  %701 = vmatpush1.msra.mxu0 0.0
  %702 = vmatprep.subr.mxu0 0.0
  %703 = vmatpush1.msra.mxu0 0.0
  %704 = vmatprep.subr.mxu0 0.0
  %705 = vmatpush1.msra.mxu0 0.0
  %706 = vmatprep.subr.mxu0 0.0
  %707 = vmatpush1.msra.mxu0 0.0
  %708 = vmatprep.subr.mxu0 0.0
  %709 = vmatpush1.msra.mxu0 0.0
  %710 = vmatprep.subr.mxu0 0.0
  %711 = vmatpush1.msra.mxu0 %v33
  %712 = vmatprep.subr.mxu0 0.0
  %713 = vmatpush1.msra.mxu0 %v663
  %714 = vmatprep.subr.mxu0 0.0
  %715 = vmatpush1.msra.mxu0 %v662
  %716 = vmatprep.subr.mxu0 0.0
  %717 = vmatpush1.msra.mxu0 %v661
  %718 = vmatprep.subr.mxu0 0.0
  %719 = vmatpush1.msra.mxu0 %v660
  %720 = vmatprep.subr.mxu0 0.0
  %721 = vmatpush1.msra.mxu0 %v659
  %722 = vmatprep.subr.mxu0 0.0
  %723 = vmatpush1.msra.mxu0 %v658
  %724 = vmatprep.subr.mxu0 0.0
  %725 = vmatpush1.msra.mxu0 %v657
  %726 = vmatprep.subr.mxu0 0.0
  %727 = vmatpush1.msra.mxu0 %v656
  %728 = vmatprep.subr.mxu0 0.0
  %729 = vmatpush2.msra.mxu0 0.0
  %730 = vmatprep.subr.mxu0 0.0
  %731 = vmatpush2.msra.mxu0 0.0
  %732 = vmatprep.subr.mxu0 0.0
  %733 = vmatpush2.msra.mxu0 0.0
  %734 = vmatprep.subr.mxu0 0.0
  %735 = vmatpush2.msra.mxu0 0.0
  %736 = vmatprep.subr.mxu0 0.0
  %737 = vmatpush2.msra.mxu0 0.0
  %738 = vmatprep.subr.mxu0 0.0
  %739 = vmatpush2.msra.mxu0 0.0
  %740 = vmatprep.subr.mxu0 0.0
  %741 = vmatpush2.msra.mxu0 0.0
  %742 = vmatprep.subr.mxu0 0.0
  %743 = vmatpush2.msra.mxu0 0.0
  %744 = vmatprep.subr.mxu0 0.0
  %745 = vmatpush2.msra.mxu0 0.0
  %746 = vmatprep.subr.mxu0 0.0
  %747 = vmatpush2.msra.mxu0 0.0
  %748 = vmatprep.subr.mxu0 0.0
  %749 = vmatpush2.msra.mxu0 0.0
  %750 = vmatprep.subr.mxu0 0.0
  %751 = vmatpush2.msra.mxu0 0.0
  %752 = vmatprep.subr.mxu0 0.0
  %753 = vmatpush2.msra.mxu0 0.0
  %754 = vmatprep.subr.mxu0 0.0
  %755 = vmatpush2.msra.mxu0 0.0
  %756 = vmatprep.subr.mxu0 0.0
  %757 = vmatpush2.msra.mxu0 0.0
  %758 = vmatprep.subr.mxu0 0.0
  %759 = vmatpush2.msra.mxu0 0.0
  %760 = vmatprep.mubr.f32.mxu0 0.0
  %761 = vmatmul.mubr.f32.gmra.mxu0 %v673
  %v762 = vpop.f32.mrf.mxu0
  %v763 = vadd.f32 0.0, %v762
  %v764 = vpop.f32.mrf.mxu0
  %765 = vmatprep.mubr.f32.mxu0 0.0
  %766 = vmatmul.mubr.f32.gmra.mxu0 %v676
  %v767 = vpop.f32.mrf.mxu0
  %v768 = vadd.f32 0.0, %v767
  %v769 = vpop.f32.mrf.mxu0
  %770 = vmatprep.mubr.f32.mxu0 0.0
  %771 = vmatmul.mubr.f32.gmra.mxu0 %v679
  %v772 = vpop.f32.mrf.mxu0
  %v773 = vadd.f32 0.0, %v772
  %v774 = vpop.f32.mrf.mxu0
  %775 = vmatprep.mubr.f32.mxu0 0.0
  %776 = vmatmul.mubr.f32.gmra.mxu0 %v682
  %v777 = vpop.f32.mrf.mxu0
  %v778 = vadd.f32 0.0, %v777
  %v779 = vpop.f32.mrf.mxu0
  %780 = vmatprep.mubr.f32.mxu0 0.0
  %781 = vmatmul.mubr.f32.gmra.mxu0 %v685
  %v782 = vpop.f32.mrf.mxu0
  %v783 = vadd.f32 0.0, %v782
  %v784 = vpop.f32.mrf.mxu0
  %785 = vmatprep.mubr.f32.mxu0 0.0
  %786 = vmatmul.mubr.f32.gmra.mxu0 %v688
  %v787 = vpop.f32.mrf.mxu0
  %v788 = vadd.f32 0.0, %v787
  %v789 = vpop.f32.mrf.mxu0
  %790 = vmatprep.mubr.f32.mxu0 0.0
  %791 = vmatmul.mubr.f32.gmra.mxu0 %v691
  %v792 = vpop.f32.mrf.mxu0
  %v793 = vadd.f32 0.0, %v792
  %v794 = vpop.f32.mrf.mxu0
  %795 = vmatprep.mubr.f32.mxu0 0.0
  %796 = vmatmul.mubr.f32.gmra.mxu0 %v694
  %v797 = vpop.f32.mrf.mxu0
  %v798 = vadd.f32 0.0, %v797
  %v799 = vpop.f32.mrf.mxu0
  %800 = vdwg.mxu0
  %v801 = vmax.f32 %v763, 0.0
  %v802 = vmax.f32 %v768, 0.0
  %v803 = vmax.f32 %v773, 0.0
  %v804 = vmax.f32 %v778, 0.0
  %v805 = vmax.f32 %v783, 0.0
  %v806 = vmax.f32 %v788, 0.0
  %v807 = vmax.f32 %v793, 0.0
  %v808 = vmax.f32 %v798, 0.0
  %v809 = vmax.f32 %v801, %v803
  %v810 = vmax.f32 %v802, %v804
  %v811 = vmax.f32 %v809, %v805
  %v812 = vmax.f32 %v810, %v806
  %v813 = vmax.f32 %v811, %v807
  %v814 = vmax.f32 %v812, %v808
  %815 = vst [vmem:[#allocation3] sm:$0xff] %v813
  %816 = vst [vmem:[#allocation3 + $0x8] sm:$0xff] %v814
  %v817 = vld [vmem:[%s2 + $0x40] sm:$0xff]
  %v818 = vld [vmem:[%s2 + $0x48] sm:$0xff]
  %v819 = vld [vmem:[%s2 + $0x50] sm:$0xff]
  %v820 = vld [vmem:[%s2 + $0x58] sm:$0xff]
  %v821 = vld [vmem:[%s2 + $0x60] sm:$0xff]
  %v822 = vld [vmem:[%s2 + $0x68] sm:$0xff]
  %v823 = vld [vmem:[%s2 + $0x70] sm:$0xff]
  %v824 = vld [vmem:[%s2 + $0x78] sm:$0xff]
  %v826 = vsel %vm51, %v817, 0
  %v829 = vsel %vm51, %v818, 0
  %v832 = vsel %vm51, %v819, 0
  %v835 = vsel %vm51, %v820, 0
  %v838 = vsel %vm51, %v821, 0
  %v841 = vsel %vm51, %v822, 0
  %v844 = vsel %vm51, %v823, 0
  %v847 = vsel %vm51, %v824, 0
  %849 = vmatprep.subr.mxu0 0.0
  %850 = vmatpush1.msra.mxu0 0.0
  %851 = vmatprep.subr.mxu0 0.0
  %852 = vmatpush1.msra.mxu0 0.0
  %853 = vmatprep.subr.mxu0 0.0
  %854 = vmatpush1.msra.mxu0 0.0
  %855 = vmatprep.subr.mxu0 0.0
  %856 = vmatpush1.msra.mxu0 0.0
  %857 = vmatprep.subr.mxu0 0.0
  %858 = vmatpush1.msra.mxu0 0.0
  %859 = vmatprep.subr.mxu0 0.0
  %860 = vmatpush1.msra.mxu0 0.0
  %861 = vmatprep.subr.mxu0 0.0
  %862 = vmatpush1.msra.mxu0 0.0
  %863 = vmatprep.subr.mxu0 0.0
  %864 = vmatpush1.msra.mxu0 %v33
  %865 = vmatprep.subr.mxu0 0.0
  %866 = vmatpush1.msra.mxu0 %v663
  %867 = vmatprep.subr.mxu0 0.0
  %868 = vmatpush1.msra.mxu0 %v662
  %869 = vmatprep.subr.mxu0 0.0
  %870 = vmatpush1.msra.mxu0 %v661
  %871 = vmatprep.subr.mxu0 0.0
  %872 = vmatpush1.msra.mxu0 %v660
  %873 = vmatprep.subr.mxu0 0.0
  %874 = vmatpush1.msra.mxu0 %v659
  %875 = vmatprep.subr.mxu0 0.0
  %876 = vmatpush1.msra.mxu0 %v658
  %877 = vmatprep.subr.mxu0 0.0
  %878 = vmatpush1.msra.mxu0 %v657
  %879 = vmatprep.subr.mxu0 0.0
  %880 = vmatpush1.msra.mxu0 %v656
  %881 = vmatprep.subr.mxu0 0.0
  %882 = vmatpush2.msra.mxu0 0.0
  %883 = vmatprep.subr.mxu0 0.0
  %884 = vmatpush2.msra.mxu0 0.0
  %885 = vmatprep.subr.mxu0 0.0
  %886 = vmatpush2.msra.mxu0 0.0
  %887 = vmatprep.subr.mxu0 0.0
  %888 = vmatpush2.msra.mxu0 0.0
  %889 = vmatprep.subr.mxu0 0.0
  %890 = vmatpush2.msra.mxu0 0.0
  %891 = vmatprep.subr.mxu0 0.0
  %892 = vmatpush2.msra.mxu0 0.0
  %893 = vmatprep.subr.mxu0 0.0
  %894 = vmatpush2.msra.mxu0 0.0
  %895 = vmatprep.subr.mxu0 0.0
  %896 = vmatpush2.msra.mxu0 0.0
  %897 = vmatprep.subr.mxu0 0.0
  %898 = vmatpush2.msra.mxu0 0.0
  %899 = vmatprep.subr.mxu0 0.0
  %900 = vmatpush2.msra.mxu0 0.0
  %901 = vmatprep.subr.mxu0 0.0
  %902 = vmatpush2.msra.mxu0 0.0
  %903 = vmatprep.subr.mxu0 0.0
  %904 = vmatpush2.msra.mxu0 0.0
  %905 = vmatprep.subr.mxu0 0.0
  %906 = vmatpush2.msra.mxu0 0.0
  %907 = vmatprep.subr.mxu0 0.0
  %908 = vmatpush2.msra.mxu0 0.0
  %909 = vmatprep.subr.mxu0 0.0
  %910 = vmatpush2.msra.mxu0 0.0
  %911 = vmatprep.subr.mxu0 0.0
  %912 = vmatpush2.msra.mxu0 0.0
  %913 = vmatprep.mubr.f32.mxu0 0.0
  %914 = vmatmul.mubr.f32.gmra.mxu0 %v826
  %v915 = vpop.f32.mrf.mxu0
  %v916 = vadd.f32 0.0, %v915
  %v917 = vpop.f32.mrf.mxu0
  %918 = vmatprep.mubr.f32.mxu0 0.0
  %919 = vmatmul.mubr.f32.gmra.mxu0 %v829
  %v920 = vpop.f32.mrf.mxu0
  %v921 = vadd.f32 0.0, %v920
  %v922 = vpop.f32.mrf.mxu0
  %923 = vmatprep.mubr.f32.mxu0 0.0
  %924 = vmatmul.mubr.f32.gmra.mxu0 %v832
  %v925 = vpop.f32.mrf.mxu0
  %v926 = vadd.f32 0.0, %v925
  %v927 = vpop.f32.mrf.mxu0
  %928 = vmatprep.mubr.f32.mxu0 0.0
  %929 = vmatmul.mubr.f32.gmra.mxu0 %v835
  %v930 = vpop.f32.mrf.mxu0
  %v931 = vadd.f32 0.0, %v930
  %v932 = vpop.f32.mrf.mxu0
  %933 = vmatprep.mubr.f32.mxu0 0.0
  %934 = vmatmul.mubr.f32.gmra.mxu0 %v838
  %v935 = vpop.f32.mrf.mxu0
  %v936 = vadd.f32 0.0, %v935
  %v937 = vpop.f32.mrf.mxu0
  %938 = vmatprep.mubr.f32.mxu0 0.0
  %939 = vmatmul.mubr.f32.gmra.mxu0 %v841
  %v940 = vpop.f32.mrf.mxu0
  %v941 = vadd.f32 0.0, %v940
  %v942 = vpop.f32.mrf.mxu0
  %943 = vmatprep.mubr.f32.mxu0 0.0
  %944 = vmatmul.mubr.f32.gmra.mxu0 %v844
  %v945 = vpop.f32.mrf.mxu0
  %v946 = vadd.f32 0.0, %v945
  %v947 = vpop.f32.mrf.mxu0
  %948 = vmatprep.mubr.f32.mxu0 0.0
  %949 = vmatmul.mubr.f32.gmra.mxu0 %v847
  %v950 = vpop.f32.mrf.mxu0
  %v951 = vadd.f32 0.0, %v950
  %v952 = vpop.f32.mrf.mxu0
  %953 = vdwg.mxu0
  %v954 = vmax.f32 %v916, 0.0
  %v955 = vmax.f32 %v921, 0.0
  %v956 = vmax.f32 %v926, 0.0
  %v957 = vmax.f32 %v931, 0.0
  %v958 = vmax.f32 %v936, 0.0
  %v959 = vmax.f32 %v941, 0.0
  %v960 = vmax.f32 %v946, 0.0
  %v961 = vmax.f32 %v951, 0.0
  %v962 = vmax.f32 %v954, %v956
  %v963 = vmax.f32 %v955, %v957
  %v964 = vmax.f32 %v962, %v958
  %v965 = vmax.f32 %v963, %v959
  %v966 = vmax.f32 %v964, %v960
  %v967 = vmax.f32 %v965, %v961
  %968 = vst [vmem:[#allocation3 + $0x10] sm:$0xff] %v966
  %969 = vst [vmem:[#allocation3 + $0x18] sm:$0xff] %v967
  %v970 = vld [vmem:[#allocation2 + $0x8] sm:$0xff]
  %v971 = vld [vmem:[#allocation2 + $0x10] sm:$0xff]
  %v972 = vld [vmem:[#allocation2 + $0x48] sm:$0xff]
  %v973 = vld [vmem:[#allocation2 + $0x50] sm:$0xff]
  %v974 = vld [vmem:[#allocation2 + $0x88] sm:$0xff]
  %v975 = vld [vmem:[#allocation2 + $0x90] sm:$0xff]
  %v976 = vld [vmem:[#allocation2 + $0xc8] sm:$0xff]
  %v977 = vld [vmem:[#allocation2 + $0xd0] sm:$0xff]
  %v978 = vld [vmem:[%s2] sm:$0xff]
  %v979 = vld [vmem:[%s2 + $0x8] sm:$0xff]
  %v980 = vld [vmem:[%s2 + $0x10] sm:$0xff]
  %v981 = vld [vmem:[%s2 + $0x18] sm:$0xff]
  %v982 = vld [vmem:[%s2 + $0x20] sm:$0xff]
  %v983 = vld [vmem:[%s2 + $0x28] sm:$0xff]
  %v984 = vld [vmem:[%s2 + $0x30] sm:$0xff]
  %v985 = vld [vmem:[%s2 + $0x38] sm:$0xff]
  %v987 = vsel %vm51, %v978, 0
  %v990 = vsel %vm51, %v979, 0
  %v993 = vsel %vm51, %v980, 0
  %v996 = vsel %vm51, %v981, 0
  %v999 = vsel %vm51, %v982, 0
  %v1002 = vsel %vm51, %v983, 0
  %v1005 = vsel %vm51, %v984, 0
  %v1008 = vsel %vm51, %v985, 0
  %1010 = vmatprep.subr.mxu0 0.0
  %1011 = vmatpush1.msra.mxu0 0.0
  %1012 = vmatprep.subr.mxu0 0.0
  %1013 = vmatpush1.msra.mxu0 0.0
  %1014 = vmatprep.subr.mxu0 0.0
  %1015 = vmatpush1.msra.mxu0 0.0
  %1016 = vmatprep.subr.mxu0 0.0
  %1017 = vmatpush1.msra.mxu0 0.0
  %1018 = vmatprep.subr.mxu0 0.0
  %1019 = vmatpush1.msra.mxu0 0.0
  %1020 = vmatprep.subr.mxu0 0.0
  %1021 = vmatpush1.msra.mxu0 0.0
  %1022 = vmatprep.subr.mxu0 0.0
  %1023 = vmatpush1.msra.mxu0 0.0
  %1024 = vmatprep.subr.mxu0 0.0
  %1025 = vmatpush1.msra.mxu0 %v33
  %1026 = vmatprep.subr.mxu0 0.0
  %1027 = vmatpush1.msra.mxu0 %v977
  %1028 = vmatprep.subr.mxu0 0.0
  %1029 = vmatpush1.msra.mxu0 %v976
  %1030 = vmatprep.subr.mxu0 0.0
  %1031 = vmatpush1.msra.mxu0 %v975
  %1032 = vmatprep.subr.mxu0 0.0
  %1033 = vmatpush1.msra.mxu0 %v974
  %1034 = vmatprep.subr.mxu0 0.0
  %1035 = vmatpush1.msra.mxu0 %v973
  %1036 = vmatprep.subr.mxu0 0.0
  %1037 = vmatpush1.msra.mxu0 %v972
  %1038 = vmatprep.subr.mxu0 0.0
  %1039 = vmatpush1.msra.mxu0 %v971
  %1040 = vmatprep.subr.mxu0 0.0
  %1041 = vmatpush1.msra.mxu0 %v970
  %1042 = vmatprep.subr.mxu0 0.0
  %1043 = vmatpush2.msra.mxu0 0.0
  %1044 = vmatprep.subr.mxu0 0.0
  %1045 = vmatpush2.msra.mxu0 0.0
  %1046 = vmatprep.subr.mxu0 0.0
  %1047 = vmatpush2.msra.mxu0 0.0
  %1048 = vmatprep.subr.mxu0 0.0
  %1049 = vmatpush2.msra.mxu0 0.0
  %1050 = vmatprep.subr.mxu0 0.0
  %1051 = vmatpush2.msra.mxu0 0.0
  %1052 = vmatprep.subr.mxu0 0.0
  %1053 = vmatpush2.msra.mxu0 0.0
  %1054 = vmatprep.subr.mxu0 0.0
  %1055 = vmatpush2.msra.mxu0 0.0
  %1056 = vmatprep.subr.mxu0 0.0
  %1057 = vmatpush2.msra.mxu0 0.0
  %1058 = vmatprep.subr.mxu0 0.0
  %1059 = vmatpush2.msra.mxu0 0.0
  %1060 = vmatprep.subr.mxu0 0.0
  %1061 = vmatpush2.msra.mxu0 0.0
  %1062 = vmatprep.subr.mxu0 0.0
  %1063 = vmatpush2.msra.mxu0 0.0
  %1064 = vmatprep.subr.mxu0 0.0
  %1065 = vmatpush2.msra.mxu0 0.0
  %1066 = vmatprep.subr.mxu0 0.0
  %1067 = vmatpush2.msra.mxu0 0.0
  %1068 = vmatprep.subr.mxu0 0.0
  %1069 = vmatpush2.msra.mxu0 0.0
  %1070 = vmatprep.subr.mxu0 0.0
  %1071 = vmatpush2.msra.mxu0 0.0
  %1072 = vmatprep.subr.mxu0 0.0
  %1073 = vmatpush2.msra.mxu0 0.0
  %1074 = vmatprep.mubr.f32.mxu0 0.0
  %1075 = vmatmul.mubr.f32.gmra.mxu0 %v987
  %v1076 = vpop.f32.mrf.mxu0
  %v1077 = vadd.f32 0.0, %v1076
  %v1078 = vpop.f32.mrf.mxu0
  %1079 = vmatprep.mubr.f32.mxu0 0.0
  %1080 = vmatmul.mubr.f32.gmra.mxu0 %v990
  %v1081 = vpop.f32.mrf.mxu0
  %v1082 = vadd.f32 0.0, %v1081
  %v1083 = vpop.f32.mrf.mxu0
  %1084 = vmatprep.mubr.f32.mxu0 0.0
  %1085 = vmatmul.mubr.f32.gmra.mxu0 %v993
  %v1086 = vpop.f32.mrf.mxu0
  %v1087 = vadd.f32 0.0, %v1086
  %v1088 = vpop.f32.mrf.mxu0
  %1089 = vmatprep.mubr.f32.mxu0 0.0
  %1090 = vmatmul.mubr.f32.gmra.mxu0 %v996
  %v1091 = vpop.f32.mrf.mxu0
  %v1092 = vadd.f32 0.0, %v1091
  %v1093 = vpop.f32.mrf.mxu0
  %1094 = vmatprep.mubr.f32.mxu0 0.0
  %1095 = vmatmul.mubr.f32.gmra.mxu0 %v999
  %v1096 = vpop.f32.mrf.mxu0
  %v1097 = vadd.f32 0.0, %v1096
  %v1098 = vpop.f32.mrf.mxu0
  %1099 = vmatprep.mubr.f32.mxu0 0.0
  %1100 = vmatmul.mubr.f32.gmra.mxu0 %v1002
  %v1101 = vpop.f32.mrf.mxu0
  %v1102 = vadd.f32 0.0, %v1101
  %v1103 = vpop.f32.mrf.mxu0
  %1104 = vmatprep.mubr.f32.mxu0 0.0
  %1105 = vmatmul.mubr.f32.gmra.mxu0 %v1005
  %v1106 = vpop.f32.mrf.mxu0
  %v1107 = vadd.f32 0.0, %v1106
  %v1108 = vpop.f32.mrf.mxu0
  %1109 = vmatprep.mubr.f32.mxu0 0.0
  %1110 = vmatmul.mubr.f32.gmra.mxu0 %v1008
  %v1111 = vpop.f32.mrf.mxu0
  %v1112 = vadd.f32 0.0, %v1111
  %v1113 = vpop.f32.mrf.mxu0
  %1114 = vdwg.mxu0
  %v1115 = vmax.f32 %v1077, 0.0
  %v1116 = vmax.f32 %v1082, 0.0
  %v1117 = vmax.f32 %v1087, 0.0
  %v1118 = vmax.f32 %v1092, 0.0
  %v1119 = vmax.f32 %v1097, 0.0
  %v1120 = vmax.f32 %v1102, 0.0
  %v1121 = vmax.f32 %v1107, 0.0
  %v1122 = vmax.f32 %v1112, 0.0
  %v1123 = vmax.f32 %v1115, %v1117
  %v1124 = vmax.f32 %v1116, %v1118
  %v1125 = vmax.f32 %v1123, %v1119
  %v1126 = vmax.f32 %v1124, %v1120
  %v1127 = vmax.f32 %v1125, %v1121
  %v1128 = vmax.f32 %v1126, %v1122
  %1129 = vst [vmem:[#allocation3 + $0x20] sm:$0xff] %v1127
  %1130 = vst [vmem:[#allocation3 + $0x28] sm:$0xff] %v1128
  %v1131 = vld [vmem:[%s2 + $0x40] sm:$0xff]
  %v1132 = vld [vmem:[%s2 + $0x48] sm:$0xff]
  %v1133 = vld [vmem:[%s2 + $0x50] sm:$0xff]
  %v1134 = vld [vmem:[%s2 + $0x58] sm:$0xff]
  %v1135 = vld [vmem:[%s2 + $0x60] sm:$0xff]
  %v1136 = vld [vmem:[%s2 + $0x68] sm:$0xff]
  %v1137 = vld [vmem:[%s2 + $0x70] sm:$0xff]
  %v1138 = vld [vmem:[%s2 + $0x78] sm:$0xff]
  %v1140 = vsel %vm51, %v1131, 0
  %v1143 = vsel %vm51, %v1132, 0
  %v1146 = vsel %vm51, %v1133, 0
  %v1149 = vsel %vm51, %v1134, 0
  %v1152 = vsel %vm51, %v1135, 0
  %v1155 = vsel %vm51, %v1136, 0
  %v1158 = vsel %vm51, %v1137, 0
  %v1161 = vsel %vm51, %v1138, 0
  %1163 = vmatprep.subr.mxu0 0.0
  %1164 = vmatpush1.msra.mxu0 0.0
  %1165 = vmatprep.subr.mxu0 0.0
  %1166 = vmatpush1.msra.mxu0 0.0
  %1167 = vmatprep.subr.mxu0 0.0
  %1168 = vmatpush1.msra.mxu0 0.0
  %1169 = vmatprep.subr.mxu0 0.0
  %1170 = vmatpush1.msra.mxu0 0.0
  %1171 = vmatprep.subr.mxu0 0.0
  %1172 = vmatpush1.msra.mxu0 0.0
  %1173 = vmatprep.subr.mxu0 0.0
  %1174 = vmatpush1.msra.mxu0 0.0
  %1175 = vmatprep.subr.mxu0 0.0
  %1176 = vmatpush1.msra.mxu0 0.0
  %1177 = vmatprep.subr.mxu0 0.0
  %1178 = vmatpush1.msra.mxu0 %v33
  %1179 = vmatprep.subr.mxu0 0.0
  %1180 = vmatpush1.msra.mxu0 %v977
  %1181 = vmatprep.subr.mxu0 0.0
  %1182 = vmatpush1.msra.mxu0 %v976
  %1183 = vmatprep.subr.mxu0 0.0
  %1184 = vmatpush1.msra.mxu0 %v975
  %1185 = vmatprep.subr.mxu0 0.0
  %1186 = vmatpush1.msra.mxu0 %v974
  %1187 = vmatprep.subr.mxu0 0.0
  %1188 = vmatpush1.msra.mxu0 %v973
  %1189 = vmatprep.subr.mxu0 0.0
  %1190 = vmatpush1.msra.mxu0 %v972
  %1191 = vmatprep.subr.mxu0 0.0
  %1192 = vmatpush1.msra.mxu0 %v971
  %1193 = vmatprep.subr.mxu0 0.0
  %1194 = vmatpush1.msra.mxu0 %v970
  %1195 = vmatprep.subr.mxu0 0.0
  %1196 = vmatpush2.msra.mxu0 0.0
  %1197 = vmatprep.subr.mxu0 0.0
  %1198 = vmatpush2.msra.mxu0 0.0
  %1199 = vmatprep.subr.mxu0 0.0
  %1200 = vmatpush2.msra.mxu0 0.0
  %1201 = vmatprep.subr.mxu0 0.0
  %1202 = vmatpush2.msra.mxu0 0.0
  %1203 = vmatprep.subr.mxu0 0.0
  %1204 = vmatpush2.msra.mxu0 0.0
  %1205 = vmatprep.subr.mxu0 0.0
  %1206 = vmatpush2.msra.mxu0 0.0
  %1207 = vmatprep.subr.mxu0 0.0
  %1208 = vmatpush2.msra.mxu0 0.0
  %1209 = vmatprep.subr.mxu0 0.0
  %1210 = vmatpush2.msra.mxu0 0.0
  %1211 = vmatprep.subr.mxu0 0.0
  %1212 = vmatpush2.msra.mxu0 0.0
  %1213 = vmatprep.subr.mxu0 0.0
  %1214 = vmatpush2.msra.mxu0 0.0
  %1215 = vmatprep.subr.mxu0 0.0
  %1216 = vmatpush2.msra.mxu0 0.0
  %1217 = vmatprep.subr.mxu0 0.0
  %1218 = vmatpush2.msra.mxu0 0.0
  %1219 = vmatprep.subr.mxu0 0.0
  %1220 = vmatpush2.msra.mxu0 0.0
  %1221 = vmatprep.subr.mxu0 0.0
  %1222 = vmatpush2.msra.mxu0 0.0
  %1223 = vmatprep.subr.mxu0 0.0
  %1224 = vmatpush2.msra.mxu0 0.0
  %1225 = vmatprep.subr.mxu0 0.0
  %1226 = vmatpush2.msra.mxu0 0.0
  %1227 = vmatprep.mubr.f32.mxu0 0.0
  %1228 = vmatmul.mubr.f32.gmra.mxu0 %v1140
  %v1229 = vpop.f32.mrf.mxu0
  %v1230 = vadd.f32 0.0, %v1229
  %v1231 = vpop.f32.mrf.mxu0
  %1232 = vmatprep.mubr.f32.mxu0 0.0
  %1233 = vmatmul.mubr.f32.gmra.mxu0 %v1143
  %v1234 = vpop.f32.mrf.mxu0
  %v1235 = vadd.f32 0.0, %v1234
  %v1236 = vpop.f32.mrf.mxu0
  %1237 = vmatprep.mubr.f32.mxu0 0.0
  %1238 = vmatmul.mubr.f32.gmra.mxu0 %v1146
  %v1239 = vpop.f32.mrf.mxu0
  %v1240 = vadd.f32 0.0, %v1239
  %v1241 = vpop.f32.mrf.mxu0
  %1242 = vmatprep.mubr.f32.mxu0 0.0
  %1243 = vmatmul.mubr.f32.gmra.mxu0 %v1149
  %v1244 = vpop.f32.mrf.mxu0
  %v1245 = vadd.f32 0.0, %v1244
  %v1246 = vpop.f32.mrf.mxu0
  %1247 = vmatprep.mubr.f32.mxu0 0.0
  %1248 = vmatmul.mubr.f32.gmra.mxu0 %v1152
  %v1249 = vpop.f32.mrf.mxu0
  %v1250 = vadd.f32 0.0, %v1249
  %v1251 = vpop.f32.mrf.mxu0
  %1252 = vmatprep.mubr.f32.mxu0 0.0
  %1253 = vmatmul.mubr.f32.gmra.mxu0 %v1155
  %v1254 = vpop.f32.mrf.mxu0
  %v1255 = vadd.f32 0.0, %v1254
  %v1256 = vpop.f32.mrf.mxu0
  %1257 = vmatprep.mubr.f32.mxu0 0.0
  %1258 = vmatmul.mubr.f32.gmra.mxu0 %v1158
  %v1259 = vpop.f32.mrf.mxu0
  %v1260 = vadd.f32 0.0, %v1259
  %v1261 = vpop.f32.mrf.mxu0
  %1262 = vmatprep.mubr.f32.mxu0 0.0
  %1263 = vmatmul.mubr.f32.gmra.mxu0 %v1161
  %v1264 = vpop.f32.mrf.mxu0
  %v1265 = vadd.f32 0.0, %v1264
  %v1266 = vpop.f32.mrf.mxu0
  %1267 = vdwg.mxu0
  %v1268 = vmax.f32 %v1230, 0.0
  %v1269 = vmax.f32 %v1235, 0.0
  %v1270 = vmax.f32 %v1240, 0.0
  %v1271 = vmax.f32 %v1245, 0.0
  %v1272 = vmax.f32 %v1250, 0.0
  %v1273 = vmax.f32 %v1255, 0.0
  %v1274 = vmax.f32 %v1260, 0.0
  %v1275 = vmax.f32 %v1265, 0.0
  %v1276 = vmax.f32 %v1268, %v1270
  %v1277 = vmax.f32 %v1269, %v1271
  %v1278 = vmax.f32 %v1276, %v1272
  %v1279 = vmax.f32 %v1277, %v1273
  %v1280 = vmax.f32 %v1278, %v1274
  %v1281 = vmax.f32 %v1279, %v1275
  %1282 = vst [vmem:[#allocation3 + $0x30] sm:$0xff] %v1280
  %1283 = vst [vmem:[#allocation3 + $0x38] sm:$0xff] %v1281
  %v1284 = vld [vmem:[#allocation2 + $0x10] sm:$0xff]
  %v1285 = vld [vmem:[#allocation2 + $0x18] sm:$0xff]
  %v1286 = vld [vmem:[#allocation2 + $0x50] sm:$0xff]
  %v1287 = vld [vmem:[#allocation2 + $0x58] sm:$0xff]
  %v1288 = vld [vmem:[#allocation2 + $0x90] sm:$0xff]
  %v1289 = vld [vmem:[#allocation2 + $0x98] sm:$0xff]
  %v1290 = vld [vmem:[#allocation2 + $0xd0] sm:$0xff]
  %v1291 = vld [vmem:[#allocation2 + $0xd8] sm:$0xff]
  %v1292 = vld [vmem:[%s2] sm:$0xff]
  %v1293 = vld [vmem:[%s2 + $0x8] sm:$0xff]
  %v1294 = vld [vmem:[%s2 + $0x10] sm:$0xff]
  %v1295 = vld [vmem:[%s2 + $0x18] sm:$0xff]
  %v1296 = vld [vmem:[%s2 + $0x20] sm:$0xff]
  %v1297 = vld [vmem:[%s2 + $0x28] sm:$0xff]
  %v1298 = vld [vmem:[%s2 + $0x30] sm:$0xff]
  %v1299 = vld [vmem:[%s2 + $0x38] sm:$0xff]
  %v1301 = vsel %vm51, %v1292, 0
  %v1304 = vsel %vm51, %v1293, 0
  %v1307 = vsel %vm51, %v1294, 0
  %v1310 = vsel %vm51, %v1295, 0
  %v1313 = vsel %vm51, %v1296, 0
  %v1316 = vsel %vm51, %v1297, 0
  %v1319 = vsel %vm51, %v1298, 0
  %v1322 = vsel %vm51, %v1299, 0
  %1324 = vmatprep.subr.mxu0 0.0
  %1325 = vmatpush1.msra.mxu0 0.0
  %1326 = vmatprep.subr.mxu0 0.0
  %1327 = vmatpush1.msra.mxu0 0.0
  %1328 = vmatprep.subr.mxu0 0.0
  %1329 = vmatpush1.msra.mxu0 0.0
  %1330 = vmatprep.subr.mxu0 0.0
  %1331 = vmatpush1.msra.mxu0 0.0
  %1332 = vmatprep.subr.mxu0 0.0
  %1333 = vmatpush1.msra.mxu0 0.0
  %1334 = vmatprep.subr.mxu0 0.0
  %1335 = vmatpush1.msra.mxu0 0.0
  %1336 = vmatprep.subr.mxu0 0.0
  %1337 = vmatpush1.msra.mxu0 0.0
  %1338 = vmatprep.subr.mxu0 0.0
  %1339 = vmatpush1.msra.mxu0 %v33
  %1340 = vmatprep.subr.mxu0 0.0
  %1341 = vmatpush1.msra.mxu0 %v1291
  %1342 = vmatprep.subr.mxu0 0.0
  %1343 = vmatpush1.msra.mxu0 %v1290
  %1344 = vmatprep.subr.mxu0 0.0
  %1345 = vmatpush1.msra.mxu0 %v1289
  %1346 = vmatprep.subr.mxu0 0.0
  %1347 = vmatpush1.msra.mxu0 %v1288
  %1348 = vmatprep.subr.mxu0 0.0
  %1349 = vmatpush1.msra.mxu0 %v1287
  %1350 = vmatprep.subr.mxu0 0.0
  %1351 = vmatpush1.msra.mxu0 %v1286
  %1352 = vmatprep.subr.mxu0 0.0
  %1353 = vmatpush1.msra.mxu0 %v1285
  %1354 = vmatprep.subr.mxu0 0.0
  %1355 = vmatpush1.msra.mxu0 %v1284
  %1356 = vmatprep.subr.mxu0 0.0
  %1357 = vmatpush2.msra.mxu0 0.0
  %1358 = vmatprep.subr.mxu0 0.0
  %1359 = vmatpush2.msra.mxu0 0.0
  %1360 = vmatprep.subr.mxu0 0.0
  %1361 = vmatpush2.msra.mxu0 0.0
  %1362 = vmatprep.subr.mxu0 0.0
  %1363 = vmatpush2.msra.mxu0 0.0
  %1364 = vmatprep.subr.mxu0 0.0
  %1365 = vmatpush2.msra.mxu0 0.0
  %1366 = vmatprep.subr.mxu0 0.0
  %1367 = vmatpush2.msra.mxu0 0.0
  %1368 = vmatprep.subr.mxu0 0.0
  %1369 = vmatpush2.msra.mxu0 0.0
  %1370 = vmatprep.subr.mxu0 0.0
  %1371 = vmatpush2.msra.mxu0 0.0
  %1372 = vmatprep.subr.mxu0 0.0
  %1373 = vmatpush2.msra.mxu0 0.0
  %1374 = vmatprep.subr.mxu0 0.0
  %1375 = vmatpush2.msra.mxu0 0.0
  %1376 = vmatprep.subr.mxu0 0.0
  %1377 = vmatpush2.msra.mxu0 0.0
  %1378 = vmatprep.subr.mxu0 0.0
  %1379 = vmatpush2.msra.mxu0 0.0
  %1380 = vmatprep.subr.mxu0 0.0
  %1381 = vmatpush2.msra.mxu0 0.0
  %1382 = vmatprep.subr.mxu0 0.0
  %1383 = vmatpush2.msra.mxu0 0.0
  %1384 = vmatprep.subr.mxu0 0.0
  %1385 = vmatpush2.msra.mxu0 0.0
  %1386 = vmatprep.subr.mxu0 0.0
  %1387 = vmatpush2.msra.mxu0 0.0
  %1388 = vmatprep.mubr.f32.mxu0 0.0
  %1389 = vmatmul.mubr.f32.gmra.mxu0 %v1301
  %v1390 = vpop.f32.mrf.mxu0
  %v1391 = vadd.f32 0.0, %v1390
  %v1392 = vpop.f32.mrf.mxu0
  %1393 = vmatprep.mubr.f32.mxu0 0.0
  %1394 = vmatmul.mubr.f32.gmra.mxu0 %v1304
  %v1395 = vpop.f32.mrf.mxu0
  %v1396 = vadd.f32 0.0, %v1395
  %v1397 = vpop.f32.mrf.mxu0
  %1398 = vmatprep.mubr.f32.mxu0 0.0
  %1399 = vmatmul.mubr.f32.gmra.mxu0 %v1307
  %v1400 = vpop.f32.mrf.mxu0
  %v1401 = vadd.f32 0.0, %v1400
  %v1402 = vpop.f32.mrf.mxu0
  %1403 = vmatprep.mubr.f32.mxu0 0.0
  %1404 = vmatmul.mubr.f32.gmra.mxu0 %v1310
  %v1405 = vpop.f32.mrf.mxu0
  %v1406 = vadd.f32 0.0, %v1405
  %v1407 = vpop.f32.mrf.mxu0
  %1408 = vmatprep.mubr.f32.mxu0 0.0
  %1409 = vmatmul.mubr.f32.gmra.mxu0 %v1313
  %v1410 = vpop.f32.mrf.mxu0
  %v1411 = vadd.f32 0.0, %v1410
  %v1412 = vpop.f32.mrf.mxu0
  %1413 = vmatprep.mubr.f32.mxu0 0.0
  %1414 = vmatmul.mubr.f32.gmra.mxu0 %v1316
  %v1415 = vpop.f32.mrf.mxu0
  %v1416 = vadd.f32 0.0, %v1415
  %v1417 = vpop.f32.mrf.mxu0
  %1418 = vmatprep.mubr.f32.mxu0 0.0
  %1419 = vmatmul.mubr.f32.gmra.mxu0 %v1319
  %v1420 = vpop.f32.mrf.mxu0
  %v1421 = vadd.f32 0.0, %v1420
  %v1422 = vpop.f32.mrf.mxu0
  %1423 = vmatprep.mubr.f32.mxu0 0.0
  %1424 = vmatmul.mubr.f32.gmra.mxu0 %v1322
  %v1425 = vpop.f32.mrf.mxu0
  %v1426 = vadd.f32 0.0, %v1425
  %v1427 = vpop.f32.mrf.mxu0
  %1428 = vdwg.mxu0
  %v1429 = vmax.f32 %v1391, 0.0
  %v1430 = vmax.f32 %v1396, 0.0
  %v1431 = vmax.f32 %v1401, 0.0
  %v1432 = vmax.f32 %v1406, 0.0
  %v1433 = vmax.f32 %v1411, 0.0
  %v1434 = vmax.f32 %v1416, 0.0
  %v1435 = vmax.f32 %v1421, 0.0
  %v1436 = vmax.f32 %v1426, 0.0
  %v1437 = vmax.f32 %v1429, %v1431
  %v1438 = vmax.f32 %v1430, %v1432
  %v1439 = vmax.f32 %v1437, %v1433
  %v1440 = vmax.f32 %v1438, %v1434
  %v1441 = vmax.f32 %v1439, %v1435
  %v1442 = vmax.f32 %v1440, %v1436
  %1443 = vst [vmem:[#allocation3 + $0x40] sm:$0xff] %v1441
  %1444 = vst [vmem:[#allocation3 + $0x48] sm:$0xff] %v1442
  %v1445 = vld [vmem:[%s2 + $0x40] sm:$0xff]
  %v1446 = vld [vmem:[%s2 + $0x48] sm:$0xff]
  %v1447 = vld [vmem:[%s2 + $0x50] sm:$0xff]
  %v1448 = vld [vmem:[%s2 + $0x58] sm:$0xff]
  %v1449 = vld [vmem:[%s2 + $0x60] sm:$0xff]
  %v1450 = vld [vmem:[%s2 + $0x68] sm:$0xff]
  %v1451 = vld [vmem:[%s2 + $0x70] sm:$0xff]
  %v1452 = vld [vmem:[%s2 + $0x78] sm:$0xff]
  %v1454 = vsel %vm51, %v1445, 0
  %v1457 = vsel %vm51, %v1446, 0
  %v1460 = vsel %vm51, %v1447, 0
  %v1463 = vsel %vm51, %v1448, 0
  %v1466 = vsel %vm51, %v1449, 0
  %v1469 = vsel %vm51, %v1450, 0
  %v1472 = vsel %vm51, %v1451, 0
  %v1475 = vsel %vm51, %v1452, 0
  %1477 = vmatprep.subr.mxu0 0.0
  %1478 = vmatpush1.msra.mxu0 0.0
  %1479 = vmatprep.subr.mxu0 0.0
  %1480 = vmatpush1.msra.mxu0 0.0
  %1481 = vmatprep.subr.mxu0 0.0
  %1482 = vmatpush1.msra.mxu0 0.0
  %1483 = vmatprep.subr.mxu0 0.0
  %1484 = vmatpush1.msra.mxu0 0.0
  %1485 = vmatprep.subr.mxu0 0.0
  %1486 = vmatpush1.msra.mxu0 0.0
  %1487 = vmatprep.subr.mxu0 0.0
  %1488 = vmatpush1.msra.mxu0 0.0
  %1489 = vmatprep.subr.mxu0 0.0
  %1490 = vmatpush1.msra.mxu0 0.0
  %1491 = vmatprep.subr.mxu0 0.0
  %1492 = vmatpush1.msra.mxu0 %v33
  %1493 = vmatprep.subr.mxu0 0.0
  %1494 = vmatpush1.msra.mxu0 %v1291
  %1495 = vmatprep.subr.mxu0 0.0
  %1496 = vmatpush1.msra.mxu0 %v1290
  %1497 = vmatprep.subr.mxu0 0.0
  %1498 = vmatpush1.msra.mxu0 %v1289
  %1499 = vmatprep.subr.mxu0 0.0
  %1500 = vmatpush1.msra.mxu0 %v1288
  %1501 = vmatprep.subr.mxu0 0.0
  %1502 = vmatpush1.msra.mxu0 %v1287
  %1503 = vmatprep.subr.mxu0 0.0
  %1504 = vmatpush1.msra.mxu0 %v1286
  %1505 = vmatprep.subr.mxu0 0.0
  %1506 = vmatpush1.msra.mxu0 %v1285
  %1507 = vmatprep.subr.mxu0 0.0
  %1508 = vmatpush1.msra.mxu0 %v1284
  %1509 = vmatprep.subr.mxu0 0.0
  %1510 = vmatpush2.msra.mxu0 0.0
  %1511 = vmatprep.subr.mxu0 0.0
  %1512 = vmatpush2.msra.mxu0 0.0
  %1513 = vmatprep.subr.mxu0 0.0
  %1514 = vmatpush2.msra.mxu0 0.0
  %1515 = vmatprep.subr.mxu0 0.0
  %1516 = vmatpush2.msra.mxu0 0.0
  %1517 = vmatprep.subr.mxu0 0.0
  %1518 = vmatpush2.msra.mxu0 0.0
  %1519 = vmatprep.subr.mxu0 0.0
  %1520 = vmatpush2.msra.mxu0 0.0
  %1521 = vmatprep.subr.mxu0 0.0
  %1522 = vmatpush2.msra.mxu0 0.0
  %1523 = vmatprep.subr.mxu0 0.0
  %1524 = vmatpush2.msra.mxu0 0.0
  %1525 = vmatprep.subr.mxu0 0.0
  %1526 = vmatpush2.msra.mxu0 0.0
  %1527 = vmatprep.subr.mxu0 0.0
  %1528 = vmatpush2.msra.mxu0 0.0
  %1529 = vmatprep.subr.mxu0 0.0
  %1530 = vmatpush2.msra.mxu0 0.0
  %1531 = vmatprep.subr.mxu0 0.0
  %1532 = vmatpush2.msra.mxu0 0.0
  %1533 = vmatprep.subr.mxu0 0.0
  %1534 = vmatpush2.msra.mxu0 0.0
  %1535 = vmatprep.subr.mxu0 0.0
  %1536 = vmatpush2.msra.mxu0 0.0
  %1537 = vmatprep.subr.mxu0 0.0
  %1538 = vmatpush2.msra.mxu0 0.0
  %1539 = vmatprep.subr.mxu0 0.0
  %1540 = vmatpush2.msra.mxu0 0.0
  %1541 = vmatprep.mubr.f32.mxu0 0.0
  %1542 = vmatmul.mubr.f32.gmra.mxu0 %v1454
  %v1543 = vpop.f32.mrf.mxu0
  %v1544 = vadd.f32 0.0, %v1543
  %v1545 = vpop.f32.mrf.mxu0
  %1546 = vmatprep.mubr.f32.mxu0 0.0
  %1547 = vmatmul.mubr.f32.gmra.mxu0 %v1457
  %v1548 = vpop.f32.mrf.mxu0
  %v1549 = vadd.f32 0.0, %v1548
  %v1550 = vpop.f32.mrf.mxu0
  %1551 = vmatprep.mubr.f32.mxu0 0.0
  %1552 = vmatmul.mubr.f32.gmra.mxu0 %v1460
  %v1553 = vpop.f32.mrf.mxu0
  %v1554 = vadd.f32 0.0, %v1553
  %v1555 = vpop.f32.mrf.mxu0
  %1556 = vmatprep.mubr.f32.mxu0 0.0
  %1557 = vmatmul.mubr.f32.gmra.mxu0 %v1463
  %v1558 = vpop.f32.mrf.mxu0
  %v1559 = vadd.f32 0.0, %v1558
  %v1560 = vpop.f32.mrf.mxu0
  %1561 = vmatprep.mubr.f32.mxu0 0.0
  %1562 = vmatmul.mubr.f32.gmra.mxu0 %v1466
  %v1563 = vpop.f32.mrf.mxu0
  %v1564 = vadd.f32 0.0, %v1563
  %v1565 = vpop.f32.mrf.mxu0
  %1566 = vmatprep.mubr.f32.mxu0 0.0
  %1567 = vmatmul.mubr.f32.gmra.mxu0 %v1469
  %v1568 = vpop.f32.mrf.mxu0
  %v1569 = vadd.f32 0.0, %v1568
  %v1570 = vpop.f32.mrf.mxu0
  %1571 = vmatprep.mubr.f32.mxu0 0.0
  %1572 = vmatmul.mubr.f32.gmra.mxu0 %v1472
  %v1573 = vpop.f32.mrf.mxu0
  %v1574 = vadd.f32 0.0, %v1573
  %v1575 = vpop.f32.mrf.mxu0
  %1576 = vmatprep.mubr.f32.mxu0 0.0
  %1577 = vmatmul.mubr.f32.gmra.mxu0 %v1475
  %v1578 = vpop.f32.mrf.mxu0
  %v1579 = vadd.f32 0.0, %v1578
  %v1580 = vpop.f32.mrf.mxu0
  %1581 = vdwg.mxu0
  %v1582 = vmax.f32 %v1544, 0.0
  %v1583 = vmax.f32 %v1549, 0.0
  %v1584 = vmax.f32 %v1554, 0.0
  %v1585 = vmax.f32 %v1559, 0.0
  %v1586 = vmax.f32 %v1564, 0.0
  %v1587 = vmax.f32 %v1569, 0.0
  %v1588 = vmax.f32 %v1574, 0.0
  %v1589 = vmax.f32 %v1579, 0.0
  %v1590 = vmax.f32 %v1582, %v1584
  %v1591 = vmax.f32 %v1583, %v1585
  %v1592 = vmax.f32 %v1590, %v1586
  %v1593 = vmax.f32 %v1591, %v1587
  %v1594 = vmax.f32 %v1592, %v1588
  %v1595 = vmax.f32 %v1593, %v1589
  %1596 = vst [vmem:[#allocation3 + $0x50] sm:$0xff] %v1594
  %1597 = vst [vmem:[#allocation3 + $0x58] sm:$0xff] %v1595
  %v1598 = vld [vmem:[#allocation2 + $0x18] sm:$0xff]
  %v1599 = vld [vmem:[#allocation2 + $0x20] sm:$0xff]
  %v1600 = vld [vmem:[#allocation2 + $0x58] sm:$0xff]
  %v1601 = vld [vmem:[#allocation2 + $0x60] sm:$0xff]
  %v1602 = vld [vmem:[#allocation2 + $0x98] sm:$0xff]
  %v1603 = vld [vmem:[#allocation2 + $0xa0] sm:$0xff]
  %v1604 = vld [vmem:[#allocation2 + $0xd8] sm:$0xff]
  %v1605 = vld [vmem:[#allocation2 + $0xe0] sm:$0xff]
  %v1606 = vld [vmem:[%s2] sm:$0xff]
  %v1607 = vld [vmem:[%s2 + $0x8] sm:$0xff]
  %v1608 = vld [vmem:[%s2 + $0x10] sm:$0xff]
  %v1609 = vld [vmem:[%s2 + $0x18] sm:$0xff]
  %v1610 = vld [vmem:[%s2 + $0x20] sm:$0xff]
  %v1611 = vld [vmem:[%s2 + $0x28] sm:$0xff]
  %v1612 = vld [vmem:[%s2 + $0x30] sm:$0xff]
  %v1613 = vld [vmem:[%s2 + $0x38] sm:$0xff]
  %v1615 = vsel %vm51, %v1606, 0
  %v1618 = vsel %vm51, %v1607, 0
  %v1621 = vsel %vm51, %v1608, 0
  %v1624 = vsel %vm51, %v1609, 0
  %v1627 = vsel %vm51, %v1610, 0
  %v1630 = vsel %vm51, %v1611, 0
  %v1633 = vsel %vm51, %v1612, 0
  %v1636 = vsel %vm51, %v1613, 0
  %1638 = vmatprep.subr.mxu0 0.0
  %1639 = vmatpush1.msra.mxu0 0.0
  %1640 = vmatprep.subr.mxu0 0.0
  %1641 = vmatpush1.msra.mxu0 0.0
  %1642 = vmatprep.subr.mxu0 0.0
  %1643 = vmatpush1.msra.mxu0 0.0
  %1644 = vmatprep.subr.mxu0 0.0
  %1645 = vmatpush1.msra.mxu0 0.0
  %1646 = vmatprep.subr.mxu0 0.0
  %1647 = vmatpush1.msra.mxu0 0.0
  %1648 = vmatprep.subr.mxu0 0.0
  %1649 = vmatpush1.msra.mxu0 0.0
  %1650 = vmatprep.subr.mxu0 0.0
  %1651 = vmatpush1.msra.mxu0 0.0
  %1652 = vmatprep.subr.mxu0 0.0
  %1653 = vmatpush1.msra.mxu0 %v33
  %1654 = vmatprep.subr.mxu0 0.0
  %1655 = vmatpush1.msra.mxu0 %v1605
  %1656 = vmatprep.subr.mxu0 0.0
  %1657 = vmatpush1.msra.mxu0 %v1604
  %1658 = vmatprep.subr.mxu0 0.0
  %1659 = vmatpush1.msra.mxu0 %v1603
  %1660 = vmatprep.subr.mxu0 0.0
  %1661 = vmatpush1.msra.mxu0 %v1602
  %1662 = vmatprep.subr.mxu0 0.0
  %1663 = vmatpush1.msra.mxu0 %v1601
  %1664 = vmatprep.subr.mxu0 0.0
  %1665 = vmatpush1.msra.mxu0 %v1600
  %1666 = vmatprep.subr.mxu0 0.0
  %1667 = vmatpush1.msra.mxu0 %v1599
  %1668 = vmatprep.subr.mxu0 0.0
  %1669 = vmatpush1.msra.mxu0 %v1598
  %1670 = vmatprep.subr.mxu0 0.0
  %1671 = vmatpush2.msra.mxu0 0.0
  %1672 = vmatprep.subr.mxu0 0.0
  %1673 = vmatpush2.msra.mxu0 0.0
  %1674 = vmatprep.subr.mxu0 0.0
  %1675 = vmatpush2.msra.mxu0 0.0
  %1676 = vmatprep.subr.mxu0 0.0
  %1677 = vmatpush2.msra.mxu0 0.0
  %1678 = vmatprep.subr.mxu0 0.0
  %1679 = vmatpush2.msra.mxu0 0.0
  %1680 = vmatprep.subr.mxu0 0.0
  %1681 = vmatpush2.msra.mxu0 0.0
  %1682 = vmatprep.subr.mxu0 0.0
  %1683 = vmatpush2.msra.mxu0 0.0
  %1684 = vmatprep.subr.mxu0 0.0
  %1685 = vmatpush2.msra.mxu0 0.0
  %1686 = vmatprep.subr.mxu0 0.0
  %1687 = vmatpush2.msra.mxu0 0.0
  %1688 = vmatprep.subr.mxu0 0.0
  %1689 = vmatpush2.msra.mxu0 0.0
  %1690 = vmatprep.subr.mxu0 0.0
  %1691 = vmatpush2.msra.mxu0 0.0
  %1692 = vmatprep.subr.mxu0 0.0
  %1693 = vmatpush2.msra.mxu0 0.0
  %1694 = vmatprep.subr.mxu0 0.0
  %1695 = vmatpush2.msra.mxu0 0.0
  %1696 = vmatprep.subr.mxu0 0.0
  %1697 = vmatpush2.msra.mxu0 0.0
  %1698 = vmatprep.subr.mxu0 0.0
  %1699 = vmatpush2.msra.mxu0 0.0
  %1700 = vmatprep.subr.mxu0 0.0
  %1701 = vmatpush2.msra.mxu0 0.0
  %1702 = vmatprep.mubr.f32.mxu0 0.0
  %1703 = vmatmul.mubr.f32.gmra.mxu0 %v1615
  %v1704 = vpop.f32.mrf.mxu0
  %v1705 = vadd.f32 0.0, %v1704
  %v1706 = vpop.f32.mrf.mxu0
  %1707 = vmatprep.mubr.f32.mxu0 0.0
  %1708 = vmatmul.mubr.f32.gmra.mxu0 %v1618
  %v1709 = vpop.f32.mrf.mxu0
  %v1710 = vadd.f32 0.0, %v1709
  %v1711 = vpop.f32.mrf.mxu0
  %1712 = vmatprep.mubr.f32.mxu0 0.0
  %1713 = vmatmul.mubr.f32.gmra.mxu0 %v1621
  %v1714 = vpop.f32.mrf.mxu0
  %v1715 = vadd.f32 0.0, %v1714
  %v1716 = vpop.f32.mrf.mxu0
  %1717 = vmatprep.mubr.f32.mxu0 0.0
  %1718 = vmatmul.mubr.f32.gmra.mxu0 %v1624
  %v1719 = vpop.f32.mrf.mxu0
  %v1720 = vadd.f32 0.0, %v1719
  %v1721 = vpop.f32.mrf.mxu0
  %1722 = vmatprep.mubr.f32.mxu0 0.0
  %1723 = vmatmul.mubr.f32.gmra.mxu0 %v1627
  %v1724 = vpop.f32.mrf.mxu0
  %v1725 = vadd.f32 0.0, %v1724
  %v1726 = vpop.f32.mrf.mxu0
  %1727 = vmatprep.mubr.f32.mxu0 0.0
  %1728 = vmatmul.mubr.f32.gmra.mxu0 %v1630
  %v1729 = vpop.f32.mrf.mxu0
  %v1730 = vadd.f32 0.0, %v1729
  %v1731 = vpop.f32.mrf.mxu0
  %1732 = vmatprep.mubr.f32.mxu0 0.0
  %1733 = vmatmul.mubr.f32.gmra.mxu0 %v1633
  %v1734 = vpop.f32.mrf.mxu0
  %v1735 = vadd.f32 0.0, %v1734
  %v1736 = vpop.f32.mrf.mxu0
  %1737 = vmatprep.mubr.f32.mxu0 0.0
  %1738 = vmatmul.mubr.f32.gmra.mxu0 %v1636
  %v1739 = vpop.f32.mrf.mxu0
  %v1740 = vadd.f32 0.0, %v1739
  %v1741 = vpop.f32.mrf.mxu0
  %1742 = vdwg.mxu0
  %v1743 = vmax.f32 %v1705, 0.0
  %v1744 = vmax.f32 %v1710, 0.0
  %v1745 = vmax.f32 %v1715, 0.0
  %v1746 = vmax.f32 %v1720, 0.0
  %v1747 = vmax.f32 %v1725, 0.0
  %v1748 = vmax.f32 %v1730, 0.0
  %v1749 = vmax.f32 %v1735, 0.0
  %v1750 = vmax.f32 %v1740, 0.0
  %v1751 = vmax.f32 %v1743, %v1745
  %v1752 = vmax.f32 %v1744, %v1746
  %v1753 = vmax.f32 %v1751, %v1747
  %v1754 = vmax.f32 %v1752, %v1748
  %v1755 = vmax.f32 %v1753, %v1749
  %v1756 = vmax.f32 %v1754, %v1750
  %1757 = vst [vmem:[#allocation3 + $0x60] sm:$0xff] %v1755
  %1758 = vst [vmem:[#allocation3 + $0x68] sm:$0xff] %v1756
  %v1759 = vld [vmem:[%s2 + $0x40] sm:$0xff]
  %v1760 = vld [vmem:[%s2 + $0x48] sm:$0xff]
  %v1761 = vld [vmem:[%s2 + $0x50] sm:$0xff]
  %v1762 = vld [vmem:[%s2 + $0x58] sm:$0xff]
  %v1763 = vld [vmem:[%s2 + $0x60] sm:$0xff]
  %v1764 = vld [vmem:[%s2 + $0x68] sm:$0xff]
  %v1765 = vld [vmem:[%s2 + $0x70] sm:$0xff]
  %v1766 = vld [vmem:[%s2 + $0x78] sm:$0xff]
  %v1768 = vsel %vm51, %v1759, 0
  %v1771 = vsel %vm51, %v1760, 0
  %v1774 = vsel %vm51, %v1761, 0
  %v1777 = vsel %vm51, %v1762, 0
  %v1780 = vsel %vm51, %v1763, 0
  %v1783 = vsel %vm51, %v1764, 0
  %v1786 = vsel %vm51, %v1765, 0
  %v1789 = vsel %vm51, %v1766, 0
  %1791 = vmatprep.subr.mxu0 0.0
  %1792 = vmatpush1.msra.mxu0 0.0
  %1793 = vmatprep.subr.mxu0 0.0
  %1794 = vmatpush1.msra.mxu0 0.0
  %1795 = vmatprep.subr.mxu0 0.0
  %1796 = vmatpush1.msra.mxu0 0.0
  %1797 = vmatprep.subr.mxu0 0.0
  %1798 = vmatpush1.msra.mxu0 0.0
  %1799 = vmatprep.subr.mxu0 0.0
  %1800 = vmatpush1.msra.mxu0 0.0
  %1801 = vmatprep.subr.mxu0 0.0
  %1802 = vmatpush1.msra.mxu0 0.0
  %1803 = vmatprep.subr.mxu0 0.0
  %1804 = vmatpush1.msra.mxu0 0.0
  %1805 = vmatprep.subr.mxu0 0.0
  %1806 = vmatpush1.msra.mxu0 %v33
  %1807 = vmatprep.subr.mxu0 0.0
  %1808 = vmatpush1.msra.mxu0 %v1605
  %1809 = vmatprep.subr.mxu0 0.0
  %1810 = vmatpush1.msra.mxu0 %v1604
  %1811 = vmatprep.subr.mxu0 0.0
  %1812 = vmatpush1.msra.mxu0 %v1603
  %1813 = vmatprep.subr.mxu0 0.0
  %1814 = vmatpush1.msra.mxu0 %v1602
  %1815 = vmatprep.subr.mxu0 0.0
  %1816 = vmatpush1.msra.mxu0 %v1601
  %1817 = vmatprep.subr.mxu0 0.0
  %1818 = vmatpush1.msra.mxu0 %v1600
  %1819 = vmatprep.subr.mxu0 0.0
  %1820 = vmatpush1.msra.mxu0 %v1599
  %1821 = vmatprep.subr.mxu0 0.0
  %1822 = vmatpush1.msra.mxu0 %v1598
  %1823 = vmatprep.subr.mxu0 0.0
  %1824 = vmatpush2.msra.mxu0 0.0
  %1825 = vmatprep.subr.mxu0 0.0
  %1826 = vmatpush2.msra.mxu0 0.0
  %1827 = vmatprep.subr.mxu0 0.0
  %1828 = vmatpush2.msra.mxu0 0.0
  %1829 = vmatprep.subr.mxu0 0.0
  %1830 = vmatpush2.msra.mxu0 0.0
  %1831 = vmatprep.subr.mxu0 0.0
  %1832 = vmatpush2.msra.mxu0 0.0
  %1833 = vmatprep.subr.mxu0 0.0
  %1834 = vmatpush2.msra.mxu0 0.0
  %1835 = vmatprep.subr.mxu0 0.0
  %1836 = vmatpush2.msra.mxu0 0.0
  %1837 = vmatprep.subr.mxu0 0.0
  %1838 = vmatpush2.msra.mxu0 0.0
  %1839 = vmatprep.subr.mxu0 0.0
  %1840 = vmatpush2.msra.mxu0 0.0
  %1841 = vmatprep.subr.mxu0 0.0
  %1842 = vmatpush2.msra.mxu0 0.0
  %1843 = vmatprep.subr.mxu0 0.0
  %1844 = vmatpush2.msra.mxu0 0.0
  %1845 = vmatprep.subr.mxu0 0.0
  %1846 = vmatpush2.msra.mxu0 0.0
  %1847 = vmatprep.subr.mxu0 0.0
  %1848 = vmatpush2.msra.mxu0 0.0
  %1849 = vmatprep.subr.mxu0 0.0
  %1850 = vmatpush2.msra.mxu0 0.0
  %1851 = vmatprep.subr.mxu0 0.0
  %1852 = vmatpush2.msra.mxu0 0.0
  %1853 = vmatprep.subr.mxu0 0.0
  %1854 = vmatpush2.msra.mxu0 0.0
  %1855 = vmatprep.mubr.f32.mxu0 0.0
  %1856 = vmatmul.mubr.f32.gmra.mxu0 %v1768
  %v1857 = vpop.f32.mrf.mxu0
  %v1858 = vadd.f32 0.0, %v1857
  %v1859 = vpop.f32.mrf.mxu0
  %1860 = vmatprep.mubr.f32.mxu0 0.0
  %1861 = vmatmul.mubr.f32.gmra.mxu0 %v1771
  %v1862 = vpop.f32.mrf.mxu0
  %v1863 = vadd.f32 0.0, %v1862
  %v1864 = vpop.f32.mrf.mxu0
  %1865 = vmatprep.mubr.f32.mxu0 0.0
  %1866 = vmatmul.mubr.f32.gmra.mxu0 %v1774
  %v1867 = vpop.f32.mrf.mxu0
  %v1868 = vadd.f32 0.0, %v1867
  %v1869 = vpop.f32.mrf.mxu0
  %1870 = vmatprep.mubr.f32.mxu0 0.0
  %1871 = vmatmul.mubr.f32.gmra.mxu0 %v1777
  %v1872 = vpop.f32.mrf.mxu0
  %v1873 = vadd.f32 0.0, %v1872
  %v1874 = vpop.f32.mrf.mxu0
  %1875 = vmatprep.mubr.f32.mxu0 0.0
  %1876 = vmatmul.mubr.f32.gmra.mxu0 %v1780
  %v1877 = vpop.f32.mrf.mxu0
  %v1878 = vadd.f32 0.0, %v1877
  %v1879 = vpop.f32.mrf.mxu0
  %1880 = vmatprep.mubr.f32.mxu0 0.0
  %1881 = vmatmul.mubr.f32.gmra.mxu0 %v1783
  %v1882 = vpop.f32.mrf.mxu0
  %v1883 = vadd.f32 0.0, %v1882
  %v1884 = vpop.f32.mrf.mxu0
  %1885 = vmatprep.mubr.f32.mxu0 0.0
  %1886 = vmatmul.mubr.f32.gmra.mxu0 %v1786
  %v1887 = vpop.f32.mrf.mxu0
  %v1888 = vadd.f32 0.0, %v1887
  %v1889 = vpop.f32.mrf.mxu0
  %1890 = vmatprep.mubr.f32.mxu0 0.0
  %1891 = vmatmul.mubr.f32.gmra.mxu0 %v1789
  %v1892 = vpop.f32.mrf.mxu0
  %v1893 = vadd.f32 0.0, %v1892
  %v1894 = vpop.f32.mrf.mxu0
  %1895 = vdwg.mxu0
  %v1896 = vmax.f32 %v1858, 0.0
  %v1897 = vmax.f32 %v1863, 0.0
  %v1898 = vmax.f32 %v1868, 0.0
  %v1899 = vmax.f32 %v1873, 0.0
  %v1900 = vmax.f32 %v1878, 0.0
  %v1901 = vmax.f32 %v1883, 0.0
  %v1902 = vmax.f32 %v1888, 0.0
  %v1903 = vmax.f32 %v1893, 0.0
  %v1904 = vmax.f32 %v1896, %v1898
  %v1905 = vmax.f32 %v1897, %v1899
  %v1906 = vmax.f32 %v1904, %v1900
  %v1907 = vmax.f32 %v1905, %v1901
  %v1908 = vmax.f32 %v1906, %v1902
  %v1909 = vmax.f32 %v1907, %v1903
  %1910 = vst [vmem:[#allocation3 + $0x70] sm:$0xff] %v1908
  %1911 = vst [vmem:[#allocation3 + $0x78] sm:$0xff] %v1909
  %v1912 = vld [vmem:[#allocation2 + $0x20] sm:$0xff]
  %v1913 = vld [vmem:[#allocation2 + $0x28] sm:$0xff]
  %v1914 = vld [vmem:[#allocation2 + $0x60] sm:$0xff]
  %v1915 = vld [vmem:[#allocation2 + $0x68] sm:$0xff]
  %v1916 = vld [vmem:[#allocation2 + $0xa0] sm:$0xff]
  %v1917 = vld [vmem:[#allocation2 + $0xa8] sm:$0xff]
  %v1918 = vld [vmem:[#allocation2 + $0xe0] sm:$0xff]
  %v1919 = vld [vmem:[#allocation2 + $0xe8] sm:$0xff]
  %v1920 = vld [vmem:[%s2] sm:$0xff]
  %v1921 = vld [vmem:[%s2 + $0x8] sm:$0xff]
  %v1922 = vld [vmem:[%s2 + $0x10] sm:$0xff]
  %v1923 = vld [vmem:[%s2 + $0x18] sm:$0xff]
  %v1924 = vld [vmem:[%s2 + $0x20] sm:$0xff]
  %v1925 = vld [vmem:[%s2 + $0x28] sm:$0xff]
  %v1926 = vld [vmem:[%s2 + $0x30] sm:$0xff]
  %v1927 = vld [vmem:[%s2 + $0x38] sm:$0xff]
  %v1929 = vsel %vm51, %v1920, 0
  %v1932 = vsel %vm51, %v1921, 0
  %v1935 = vsel %vm51, %v1922, 0
  %v1938 = vsel %vm51, %v1923, 0
  %v1941 = vsel %vm51, %v1924, 0
  %v1944 = vsel %vm51, %v1925, 0
  %v1947 = vsel %vm51, %v1926, 0
  %v1950 = vsel %vm51, %v1927, 0
  %1952 = vmatprep.subr.mxu0 0.0
  %1953 = vmatpush1.msra.mxu0 0.0
  %1954 = vmatprep.subr.mxu0 0.0
  %1955 = vmatpush1.msra.mxu0 0.0
  %1956 = vmatprep.subr.mxu0 0.0
  %1957 = vmatpush1.msra.mxu0 0.0
  %1958 = vmatprep.subr.mxu0 0.0
  %1959 = vmatpush1.msra.mxu0 0.0
  %1960 = vmatprep.subr.mxu0 0.0
  %1961 = vmatpush1.msra.mxu0 0.0
  %1962 = vmatprep.subr.mxu0 0.0
  %1963 = vmatpush1.msra.mxu0 0.0
  %1964 = vmatprep.subr.mxu0 0.0
  %1965 = vmatpush1.msra.mxu0 0.0
  %1966 = vmatprep.subr.mxu0 0.0
  %1967 = vmatpush1.msra.mxu0 %v33
  %1968 = vmatprep.subr.mxu0 0.0
  %1969 = vmatpush1.msra.mxu0 %v1919
  %1970 = vmatprep.subr.mxu0 0.0
  %1971 = vmatpush1.msra.mxu0 %v1918
  %1972 = vmatprep.subr.mxu0 0.0
  %1973 = vmatpush1.msra.mxu0 %v1917
  %1974 = vmatprep.subr.mxu0 0.0
  %1975 = vmatpush1.msra.mxu0 %v1916
  %1976 = vmatprep.subr.mxu0 0.0
  %1977 = vmatpush1.msra.mxu0 %v1915
  %1978 = vmatprep.subr.mxu0 0.0
  %1979 = vmatpush1.msra.mxu0 %v1914
  %1980 = vmatprep.subr.mxu0 0.0
  %1981 = vmatpush1.msra.mxu0 %v1913
  %1982 = vmatprep.subr.mxu0 0.0
  %1983 = vmatpush1.msra.mxu0 %v1912
  %1984 = vmatprep.subr.mxu0 0.0
  %1985 = vmatpush2.msra.mxu0 0.0
  %1986 = vmatprep.subr.mxu0 0.0
  %1987 = vmatpush2.msra.mxu0 0.0
  %1988 = vmatprep.subr.mxu0 0.0
  %1989 = vmatpush2.msra.mxu0 0.0
  %1990 = vmatprep.subr.mxu0 0.0
  %1991 = vmatpush2.msra.mxu0 0.0
  %1992 = vmatprep.subr.mxu0 0.0
  %1993 = vmatpush2.msra.mxu0 0.0
  %1994 = vmatprep.subr.mxu0 0.0
  %1995 = vmatpush2.msra.mxu0 0.0
  %1996 = vmatprep.subr.mxu0 0.0
  %1997 = vmatpush2.msra.mxu0 0.0
  %1998 = vmatprep.subr.mxu0 0.0
  %1999 = vmatpush2.msra.mxu0 0.0
  %2000 = vmatprep.subr.mxu0 0.0
  %2001 = vmatpush2.msra.mxu0 0.0
  %2002 = vmatprep.subr.mxu0 0.0
  %2003 = vmatpush2.msra.mxu0 0.0
  %2004 = vmatprep.subr.mxu0 0.0
  %2005 = vmatpush2.msra.mxu0 0.0
  %2006 = vmatprep.subr.mxu0 0.0
  %2007 = vmatpush2.msra.mxu0 0.0
  %2008 = vmatprep.subr.mxu0 0.0
  %2009 = vmatpush2.msra.mxu0 0.0
  %2010 = vmatprep.subr.mxu0 0.0
  %2011 = vmatpush2.msra.mxu0 0.0
  %2012 = vmatprep.subr.mxu0 0.0
  %2013 = vmatpush2.msra.mxu0 0.0
  %2014 = vmatprep.subr.mxu0 0.0
  %2015 = vmatpush2.msra.mxu0 0.0
  %2016 = vmatprep.mubr.f32.mxu0 0.0
  %2017 = vmatmul.mubr.f32.gmra.mxu0 %v1929
  %v2018 = vpop.f32.mrf.mxu0
  %v2019 = vadd.f32 0.0, %v2018
  %v2020 = vpop.f32.mrf.mxu0
  %2021 = vmatprep.mubr.f32.mxu0 0.0
  %2022 = vmatmul.mubr.f32.gmra.mxu0 %v1932
  %v2023 = vpop.f32.mrf.mxu0
  %v2024 = vadd.f32 0.0, %v2023
  %v2025 = vpop.f32.mrf.mxu0
  %2026 = vmatprep.mubr.f32.mxu0 0.0
  %2027 = vmatmul.mubr.f32.gmra.mxu0 %v1935
  %v2028 = vpop.f32.mrf.mxu0
  %v2029 = vadd.f32 0.0, %v2028
  %v2030 = vpop.f32.mrf.mxu0
  %2031 = vmatprep.mubr.f32.mxu0 0.0
  %2032 = vmatmul.mubr.f32.gmra.mxu0 %v1938
  %v2033 = vpop.f32.mrf.mxu0
  %v2034 = vadd.f32 0.0, %v2033
  %v2035 = vpop.f32.mrf.mxu0
  %2036 = vmatprep.mubr.f32.mxu0 0.0
  %2037 = vmatmul.mubr.f32.gmra.mxu0 %v1941
  %v2038 = vpop.f32.mrf.mxu0
  %v2039 = vadd.f32 0.0, %v2038
  %v2040 = vpop.f32.mrf.mxu0
  %2041 = vmatprep.mubr.f32.mxu0 0.0
  %2042 = vmatmul.mubr.f32.gmra.mxu0 %v1944
  %v2043 = vpop.f32.mrf.mxu0
  %v2044 = vadd.f32 0.0, %v2043
  %v2045 = vpop.f32.mrf.mxu0
  %2046 = vmatprep.mubr.f32.mxu0 0.0
  %2047 = vmatmul.mubr.f32.gmra.mxu0 %v1947
  %v2048 = vpop.f32.mrf.mxu0
  %v2049 = vadd.f32 0.0, %v2048
  %v2050 = vpop.f32.mrf.mxu0
  %2051 = vmatprep.mubr.f32.mxu0 0.0
  %2052 = vmatmul.mubr.f32.gmra.mxu0 %v1950
  %v2053 = vpop.f32.mrf.mxu0
  %v2054 = vadd.f32 0.0, %v2053
  %v2055 = vpop.f32.mrf.mxu0
  %2056 = vdwg.mxu0
  %v2057 = vmax.f32 %v2019, 0.0
  %v2058 = vmax.f32 %v2024, 0.0
  %v2059 = vmax.f32 %v2029, 0.0
  %v2060 = vmax.f32 %v2034, 0.0
  %v2061 = vmax.f32 %v2039, 0.0
  %v2062 = vmax.f32 %v2044, 0.0
  %v2063 = vmax.f32 %v2049, 0.0
  %v2064 = vmax.f32 %v2054, 0.0
  %v2065 = vmax.f32 %v2057, %v2059
  %v2066 = vmax.f32 %v2058, %v2060
  %v2067 = vmax.f32 %v2065, %v2061
  %v2068 = vmax.f32 %v2066, %v2062
  %v2069 = vmax.f32 %v2067, %v2063
  %v2070 = vmax.f32 %v2068, %v2064
  %2071 = vst [vmem:[#allocation3 + $0x80] sm:$0xff] %v2069
  %2072 = vst [vmem:[#allocation3 + $0x88] sm:$0xff] %v2070
  %v2073 = vld [vmem:[%s2 + $0x40] sm:$0xff]
  %v2074 = vld [vmem:[%s2 + $0x48] sm:$0xff]
  %v2075 = vld [vmem:[%s2 + $0x50] sm:$0xff]
  %v2076 = vld [vmem:[%s2 + $0x58] sm:$0xff]
  %v2077 = vld [vmem:[%s2 + $0x60] sm:$0xff]
  %v2078 = vld [vmem:[%s2 + $0x68] sm:$0xff]
  %v2079 = vld [vmem:[%s2 + $0x70] sm:$0xff]
  %v2080 = vld [vmem:[%s2 + $0x78] sm:$0xff]
  %v2082 = vsel %vm51, %v2073, 0
  %v2085 = vsel %vm51, %v2074, 0
  %v2088 = vsel %vm51, %v2075, 0
  %v2091 = vsel %vm51, %v2076, 0
  %v2094 = vsel %vm51, %v2077, 0
  %v2097 = vsel %vm51, %v2078, 0
  %v2100 = vsel %vm51, %v2079, 0
  %v2103 = vsel %vm51, %v2080, 0
  %2105 = vmatprep.subr.mxu0 0.0
  %2106 = vmatpush1.msra.mxu0 0.0
  %2107 = vmatprep.subr.mxu0 0.0
  %2108 = vmatpush1.msra.mxu0 0.0
  %2109 = vmatprep.subr.mxu0 0.0
  %2110 = vmatpush1.msra.mxu0 0.0
  %2111 = vmatprep.subr.mxu0 0.0
  %2112 = vmatpush1.msra.mxu0 0.0
  %2113 = vmatprep.subr.mxu0 0.0
  %2114 = vmatpush1.msra.mxu0 0.0
  %2115 = vmatprep.subr.mxu0 0.0
  %2116 = vmatpush1.msra.mxu0 0.0
  %2117 = vmatprep.subr.mxu0 0.0
  %2118 = vmatpush1.msra.mxu0 0.0
  %2119 = vmatprep.subr.mxu0 0.0
  %2120 = vmatpush1.msra.mxu0 %v33
  %2121 = vmatprep.subr.mxu0 0.0
  %2122 = vmatpush1.msra.mxu0 %v1919
  %2123 = vmatprep.subr.mxu0 0.0
  %2124 = vmatpush1.msra.mxu0 %v1918
  %2125 = vmatprep.subr.mxu0 0.0
  %2126 = vmatpush1.msra.mxu0 %v1917
  %2127 = vmatprep.subr.mxu0 0.0
  %2128 = vmatpush1.msra.mxu0 %v1916
  %2129 = vmatprep.subr.mxu0 0.0
  %2130 = vmatpush1.msra.mxu0 %v1915
  %2131 = vmatprep.subr.mxu0 0.0
  %2132 = vmatpush1.msra.mxu0 %v1914
  %2133 = vmatprep.subr.mxu0 0.0
  %2134 = vmatpush1.msra.mxu0 %v1913
  %2135 = vmatprep.subr.mxu0 0.0
  %2136 = vmatpush1.msra.mxu0 %v1912
  %2137 = vmatprep.subr.mxu0 0.0
  %2138 = vmatpush2.msra.mxu0 0.0
  %2139 = vmatprep.subr.mxu0 0.0
  %2140 = vmatpush2.msra.mxu0 0.0
  %2141 = vmatprep.subr.mxu0 0.0
  %2142 = vmatpush2.msra.mxu0 0.0
  %2143 = vmatprep.subr.mxu0 0.0
  %2144 = vmatpush2.msra.mxu0 0.0
  %2145 = vmatprep.subr.mxu0 0.0
  %2146 = vmatpush2.msra.mxu0 0.0
  %2147 = vmatprep.subr.mxu0 0.0
  %2148 = vmatpush2.msra.mxu0 0.0
  %2149 = vmatprep.subr.mxu0 0.0
  %2150 = vmatpush2.msra.mxu0 0.0
  %2151 = vmatprep.subr.mxu0 0.0
  %2152 = vmatpush2.msra.mxu0 0.0
  %2153 = vmatprep.subr.mxu0 0.0
  %2154 = vmatpush2.msra.mxu0 0.0
  %2155 = vmatprep.subr.mxu0 0.0
  %2156 = vmatpush2.msra.mxu0 0.0
  %2157 = vmatprep.subr.mxu0 0.0
  %2158 = vmatpush2.msra.mxu0 0.0
  %2159 = vmatprep.subr.mxu0 0.0
  %2160 = vmatpush2.msra.mxu0 0.0
  %2161 = vmatprep.subr.mxu0 0.0
  %2162 = vmatpush2.msra.mxu0 0.0
  %2163 = vmatprep.subr.mxu0 0.0
  %2164 = vmatpush2.msra.mxu0 0.0
  %2165 = vmatprep.subr.mxu0 0.0
  %2166 = vmatpush2.msra.mxu0 0.0
  %2167 = vmatprep.subr.mxu0 0.0
  %2168 = vmatpush2.msra.mxu0 0.0
  %2169 = vmatprep.mubr.f32.mxu0 0.0
  %2170 = vmatmul.mubr.f32.gmra.mxu0 %v2082
  %v2171 = vpop.f32.mrf.mxu0
  %v2172 = vadd.f32 0.0, %v2171
  %v2173 = vpop.f32.mrf.mxu0
  %2174 = vmatprep.mubr.f32.mxu0 0.0
  %2175 = vmatmul.mubr.f32.gmra.mxu0 %v2085
  %v2176 = vpop.f32.mrf.mxu0
  %v2177 = vadd.f32 0.0, %v2176
  %v2178 = vpop.f32.mrf.mxu0
  %2179 = vmatprep.mubr.f32.mxu0 0.0
  %2180 = vmatmul.mubr.f32.gmra.mxu0 %v2088
  %v2181 = vpop.f32.mrf.mxu0
  %v2182 = vadd.f32 0.0, %v2181
  %v2183 = vpop.f32.mrf.mxu0
  %2184 = vmatprep.mubr.f32.mxu0 0.0
  %2185 = vmatmul.mubr.f32.gmra.mxu0 %v2091
  %v2186 = vpop.f32.mrf.mxu0
  %v2187 = vadd.f32 0.0, %v2186
  %v2188 = vpop.f32.mrf.mxu0
  %2189 = vmatprep.mubr.f32.mxu0 0.0
  %2190 = vmatmul.mubr.f32.gmra.mxu0 %v2094
  %v2191 = vpop.f32.mrf.mxu0
  %v2192 = vadd.f32 0.0, %v2191
  %v2193 = vpop.f32.mrf.mxu0
  %2194 = vmatprep.mubr.f32.mxu0 0.0
  %2195 = vmatmul.mubr.f32.gmra.mxu0 %v2097
  %v2196 = vpop.f32.mrf.mxu0
  %v2197 = vadd.f32 0.0, %v2196
  %v2198 = vpop.f32.mrf.mxu0
  %2199 = vmatprep.mubr.f32.mxu0 0.0
  %2200 = vmatmul.mubr.f32.gmra.mxu0 %v2100
  %v2201 = vpop.f32.mrf.mxu0
  %v2202 = vadd.f32 0.0, %v2201
  %v2203 = vpop.f32.mrf.mxu0
  %2204 = vmatprep.mubr.f32.mxu0 0.0
  %2205 = vmatmul.mubr.f32.gmra.mxu0 %v2103
  %v2206 = vpop.f32.mrf.mxu0
  %v2207 = vadd.f32 0.0, %v2206
  %v2208 = vpop.f32.mrf.mxu0
  %2209 = vdwg.mxu0
  %v2210 = vmax.f32 %v2172, 0.0
  %v2211 = vmax.f32 %v2177, 0.0
  %v2212 = vmax.f32 %v2182, 0.0
  %v2213 = vmax.f32 %v2187, 0.0
  %v2214 = vmax.f32 %v2192, 0.0
  %v2215 = vmax.f32 %v2197, 0.0
  %v2216 = vmax.f32 %v2202, 0.0
  %v2217 = vmax.f32 %v2207, 0.0
  %v2218 = vmax.f32 %v2210, %v2212
  %v2219 = vmax.f32 %v2211, %v2213
  %v2220 = vmax.f32 %v2218, %v2214
  %v2221 = vmax.f32 %v2219, %v2215
  %v2222 = vmax.f32 %v2220, %v2216
  %v2223 = vmax.f32 %v2221, %v2217
  %2224 = vst [vmem:[#allocation3 + $0x90] sm:$0xff] %v2222
  %2225 = vst [vmem:[#allocation3 + $0x98] sm:$0xff] %v2223
  %v2226 = vld [vmem:[#allocation2 + $0x28] sm:$0xff]
  %v2227 = vld [vmem:[#allocation2 + $0x30] sm:$0xff]
  %v2228 = vld [vmem:[#allocation2 + $0x68] sm:$0xff]
  %v2229 = vld [vmem:[#allocation2 + $0x70] sm:$0xff]
  %v2230 = vld [vmem:[#allocation2 + $0xa8] sm:$0xff]
  %v2231 = vld [vmem:[#allocation2 + $0xb0] sm:$0xff]
  %v2232 = vld [vmem:[#allocation2 + $0xe8] sm:$0xff]
  %v2233 = vld [vmem:[#allocation2 + $0xf0] sm:$0xff]
  %v2234 = vld [vmem:[%s2] sm:$0xff]
  %v2235 = vld [vmem:[%s2 + $0x8] sm:$0xff]
  %v2236 = vld [vmem:[%s2 + $0x10] sm:$0xff]
  %v2237 = vld [vmem:[%s2 + $0x18] sm:$0xff]
  %v2238 = vld [vmem:[%s2 + $0x20] sm:$0xff]
  %v2239 = vld [vmem:[%s2 + $0x28] sm:$0xff]
  %v2240 = vld [vmem:[%s2 + $0x30] sm:$0xff]
  %v2241 = vld [vmem:[%s2 + $0x38] sm:$0xff]
  %v2243 = vsel %vm51, %v2234, 0
  %v2246 = vsel %vm51, %v2235, 0
  %v2249 = vsel %vm51, %v2236, 0
  %v2252 = vsel %vm51, %v2237, 0
  %v2255 = vsel %vm51, %v2238, 0
  %v2258 = vsel %vm51, %v2239, 0
  %v2261 = vsel %vm51, %v2240, 0
  %v2264 = vsel %vm51, %v2241, 0
  %2266 = vmatprep.subr.mxu0 0.0
  %2267 = vmatpush1.msra.mxu0 0.0
  %2268 = vmatprep.subr.mxu0 0.0
  %2269 = vmatpush1.msra.mxu0 0.0
  %2270 = vmatprep.subr.mxu0 0.0
  %2271 = vmatpush1.msra.mxu0 0.0
  %2272 = vmatprep.subr.mxu0 0.0
  %2273 = vmatpush1.msra.mxu0 0.0
  %2274 = vmatprep.subr.mxu0 0.0
  %2275 = vmatpush1.msra.mxu0 0.0
  %2276 = vmatprep.subr.mxu0 0.0
  %2277 = vmatpush1.msra.mxu0 0.0
  %2278 = vmatprep.subr.mxu0 0.0
  %2279 = vmatpush1.msra.mxu0 0.0
  %2280 = vmatprep.subr.mxu0 0.0
  %2281 = vmatpush1.msra.mxu0 %v33
  %2282 = vmatprep.subr.mxu0 0.0
  %2283 = vmatpush1.msra.mxu0 %v2233
  %2284 = vmatprep.subr.mxu0 0.0
  %2285 = vmatpush1.msra.mxu0 %v2232
  %2286 = vmatprep.subr.mxu0 0.0
  %2287 = vmatpush1.msra.mxu0 %v2231
  %2288 = vmatprep.subr.mxu0 0.0
  %2289 = vmatpush1.msra.mxu0 %v2230
  %2290 = vmatprep.subr.mxu0 0.0
  %2291 = vmatpush1.msra.mxu0 %v2229
  %2292 = vmatprep.subr.mxu0 0.0
  %2293 = vmatpush1.msra.mxu0 %v2228
  %2294 = vmatprep.subr.mxu0 0.0
  %2295 = vmatpush1.msra.mxu0 %v2227
  %2296 = vmatprep.subr.mxu0 0.0
  %2297 = vmatpush1.msra.mxu0 %v2226
  %2298 = vmatprep.subr.mxu0 0.0
  %2299 = vmatpush2.msra.mxu0 0.0
  %2300 = vmatprep.subr.mxu0 0.0
  %2301 = vmatpush2.msra.mxu0 0.0
  %2302 = vmatprep.subr.mxu0 0.0
  %2303 = vmatpush2.msra.mxu0 0.0
  %2304 = vmatprep.subr.mxu0 0.0
  %2305 = vmatpush2.msra.mxu0 0.0
  %2306 = vmatprep.subr.mxu0 0.0
  %2307 = vmatpush2.msra.mxu0 0.0
  %2308 = vmatprep.subr.mxu0 0.0
  %2309 = vmatpush2.msra.mxu0 0.0
  %2310 = vmatprep.subr.mxu0 0.0
  %2311 = vmatpush2.msra.mxu0 0.0
  %2312 = vmatprep.subr.mxu0 0.0
  %2313 = vmatpush2.msra.mxu0 0.0
  %2314 = vmatprep.subr.mxu0 0.0
  %2315 = vmatpush2.msra.mxu0 0.0
  %2316 = vmatprep.subr.mxu0 0.0
  %2317 = vmatpush2.msra.mxu0 0.0
  %2318 = vmatprep.subr.mxu0 0.0
  %2319 = vmatpush2.msra.mxu0 0.0
  %2320 = vmatprep.subr.mxu0 0.0
  %2321 = vmatpush2.msra.mxu0 0.0
  %2322 = vmatprep.subr.mxu0 0.0
  %2323 = vmatpush2.msra.mxu0 0.0
  %2324 = vmatprep.subr.mxu0 0.0
  %2325 = vmatpush2.msra.mxu0 0.0
  %2326 = vmatprep.subr.mxu0 0.0
  %2327 = vmatpush2.msra.mxu0 0.0
  %2328 = vmatprep.subr.mxu0 0.0
  %2329 = vmatpush2.msra.mxu0 0.0
  %2330 = vmatprep.mubr.f32.mxu0 0.0
  %2331 = vmatmul.mubr.f32.gmra.mxu0 %v2243
  %v2332 = vpop.f32.mrf.mxu0
  %v2333 = vadd.f32 0.0, %v2332
  %v2334 = vpop.f32.mrf.mxu0
  %2335 = vmatprep.mubr.f32.mxu0 0.0
  %2336 = vmatmul.mubr.f32.gmra.mxu0 %v2246
  %v2337 = vpop.f32.mrf.mxu0
  %v2338 = vadd.f32 0.0, %v2337
  %v2339 = vpop.f32.mrf.mxu0
  %2340 = vmatprep.mubr.f32.mxu0 0.0
  %2341 = vmatmul.mubr.f32.gmra.mxu0 %v2249
  %v2342 = vpop.f32.mrf.mxu0
  %v2343 = vadd.f32 0.0, %v2342
  %v2344 = vpop.f32.mrf.mxu0
  %2345 = vmatprep.mubr.f32.mxu0 0.0
  %2346 = vmatmul.mubr.f32.gmra.mxu0 %v2252
  %v2347 = vpop.f32.mrf.mxu0
  %v2348 = vadd.f32 0.0, %v2347
  %v2349 = vpop.f32.mrf.mxu0
  %2350 = vmatprep.mubr.f32.mxu0 0.0
  %2351 = vmatmul.mubr.f32.gmra.mxu0 %v2255
  %v2352 = vpop.f32.mrf.mxu0
  %v2353 = vadd.f32 0.0, %v2352
  %v2354 = vpop.f32.mrf.mxu0
  %2355 = vmatprep.mubr.f32.mxu0 0.0
  %2356 = vmatmul.mubr.f32.gmra.mxu0 %v2258
  %v2357 = vpop.f32.mrf.mxu0
  %v2358 = vadd.f32 0.0, %v2357
  %v2359 = vpop.f32.mrf.mxu0
  %2360 = vmatprep.mubr.f32.mxu0 0.0
  %2361 = vmatmul.mubr.f32.gmra.mxu0 %v2261
  %v2362 = vpop.f32.mrf.mxu0
  %v2363 = vadd.f32 0.0, %v2362
  %v2364 = vpop.f32.mrf.mxu0
  %2365 = vmatprep.mubr.f32.mxu0 0.0
  %2366 = vmatmul.mubr.f32.gmra.mxu0 %v2264
  %v2367 = vpop.f32.mrf.mxu0
  %v2368 = vadd.f32 0.0, %v2367
  %v2369 = vpop.f32.mrf.mxu0
  %2370 = vdwg.mxu0
  %v2371 = vmax.f32 %v2333, 0.0
  %v2372 = vmax.f32 %v2338, 0.0
  %v2373 = vmax.f32 %v2343, 0.0
  %v2374 = vmax.f32 %v2348, 0.0
  %v2375 = vmax.f32 %v2353, 0.0
  %v2376 = vmax.f32 %v2358, 0.0
  %v2377 = vmax.f32 %v2363, 0.0
  %v2378 = vmax.f32 %v2368, 0.0
  %v2379 = vmax.f32 %v2371, %v2373
  %v2380 = vmax.f32 %v2372, %v2374
  %v2381 = vmax.f32 %v2379, %v2375
  %v2382 = vmax.f32 %v2380, %v2376
  %v2383 = vmax.f32 %v2381, %v2377
  %v2384 = vmax.f32 %v2382, %v2378
  %2385 = vst [vmem:[#allocation3 + $0xa0] sm:$0xff] %v2383
  %2386 = vst [vmem:[#allocation3 + $0xa8] sm:$0xff] %v2384
  %v2387 = vld [vmem:[%s2 + $0x40] sm:$0xff]
  %v2388 = vld [vmem:[%s2 + $0x48] sm:$0xff]
  %v2389 = vld [vmem:[%s2 + $0x50] sm:$0xff]
  %v2390 = vld [vmem:[%s2 + $0x58] sm:$0xff]
  %v2391 = vld [vmem:[%s2 + $0x60] sm:$0xff]
  %v2392 = vld [vmem:[%s2 + $0x68] sm:$0xff]
  %v2393 = vld [vmem:[%s2 + $0x70] sm:$0xff]
  %v2394 = vld [vmem:[%s2 + $0x78] sm:$0xff]
  %v2396 = vsel %vm51, %v2387, 0
  %v2399 = vsel %vm51, %v2388, 0
  %v2402 = vsel %vm51, %v2389, 0
  %v2405 = vsel %vm51, %v2390, 0
  %v2408 = vsel %vm51, %v2391, 0
  %v2411 = vsel %vm51, %v2392, 0
  %v2414 = vsel %vm51, %v2393, 0
  %v2417 = vsel %vm51, %v2394, 0
  %2419 = vmatprep.subr.mxu0 0.0
  %2420 = vmatpush1.msra.mxu0 0.0
  %2421 = vmatprep.subr.mxu0 0.0
  %2422 = vmatpush1.msra.mxu0 0.0
  %2423 = vmatprep.subr.mxu0 0.0
  %2424 = vmatpush1.msra.mxu0 0.0
  %2425 = vmatprep.subr.mxu0 0.0
  %2426 = vmatpush1.msra.mxu0 0.0
  %2427 = vmatprep.subr.mxu0 0.0
  %2428 = vmatpush1.msra.mxu0 0.0
  %2429 = vmatprep.subr.mxu0 0.0
  %2430 = vmatpush1.msra.mxu0 0.0
  %2431 = vmatprep.subr.mxu0 0.0
  %2432 = vmatpush1.msra.mxu0 0.0
  %2433 = vmatprep.subr.mxu0 0.0
  %2434 = vmatpush1.msra.mxu0 %v33
  %2435 = vmatprep.subr.mxu0 0.0
  %2436 = vmatpush1.msra.mxu0 %v2233
  %2437 = vmatprep.subr.mxu0 0.0
  %2438 = vmatpush1.msra.mxu0 %v2232
  %2439 = vmatprep.subr.mxu0 0.0
  %2440 = vmatpush1.msra.mxu0 %v2231
  %2441 = vmatprep.subr.mxu0 0.0
  %2442 = vmatpush1.msra.mxu0 %v2230
  %2443 = vmatprep.subr.mxu0 0.0
  %2444 = vmatpush1.msra.mxu0 %v2229
  %2445 = vmatprep.subr.mxu0 0.0
  %2446 = vmatpush1.msra.mxu0 %v2228
  %2447 = vmatprep.subr.mxu0 0.0
  %2448 = vmatpush1.msra.mxu0 %v2227
  %2449 = vmatprep.subr.mxu0 0.0
  %2450 = vmatpush1.msra.mxu0 %v2226
  %2451 = vmatprep.subr.mxu0 0.0
  %2452 = vmatpush2.msra.mxu0 0.0
  %2453 = vmatprep.subr.mxu0 0.0
  %2454 = vmatpush2.msra.mxu0 0.0
  %2455 = vmatprep.subr.mxu0 0.0
  %2456 = vmatpush2.msra.mxu0 0.0
  %2457 = vmatprep.subr.mxu0 0.0
  %2458 = vmatpush2.msra.mxu0 0.0
  %2459 = vmatprep.subr.mxu0 0.0
  %2460 = vmatpush2.msra.mxu0 0.0
  %2461 = vmatprep.subr.mxu0 0.0
  %2462 = vmatpush2.msra.mxu0 0.0
  %2463 = vmatprep.subr.mxu0 0.0
  %2464 = vmatpush2.msra.mxu0 0.0
  %2465 = vmatprep.subr.mxu0 0.0
  %2466 = vmatpush2.msra.mxu0 0.0
  %2467 = vmatprep.subr.mxu0 0.0
  %2468 = vmatpush2.msra.mxu0 0.0
  %2469 = vmatprep.subr.mxu0 0.0
  %2470 = vmatpush2.msra.mxu0 0.0
  %2471 = vmatprep.subr.mxu0 0.0
  %2472 = vmatpush2.msra.mxu0 0.0
  %2473 = vmatprep.subr.mxu0 0.0
  %2474 = vmatpush2.msra.mxu0 0.0
  %2475 = vmatprep.subr.mxu0 0.0
  %2476 = vmatpush2.msra.mxu0 0.0
  %2477 = vmatprep.subr.mxu0 0.0
  %2478 = vmatpush2.msra.mxu0 0.0
  %2479 = vmatprep.subr.mxu0 0.0
  %2480 = vmatpush2.msra.mxu0 0.0
  %2481 = vmatprep.subr.mxu0 0.0
  %2482 = vmatpush2.msra.mxu0 0.0
  %2483 = vmatprep.mubr.f32.mxu0 0.0
  %2484 = vmatmul.mubr.f32.gmra.mxu0 %v2396
  %v2485 = vpop.f32.mrf.mxu0
  %v2486 = vadd.f32 0.0, %v2485
  %v2487 = vpop.f32.mrf.mxu0
  %2488 = vmatprep.mubr.f32.mxu0 0.0
  %2489 = vmatmul.mubr.f32.gmra.mxu0 %v2399
  %v2490 = vpop.f32.mrf.mxu0
  %v2491 = vadd.f32 0.0, %v2490
  %v2492 = vpop.f32.mrf.mxu0
  %2493 = vmatprep.mubr.f32.mxu0 0.0
  %2494 = vmatmul.mubr.f32.gmra.mxu0 %v2402
  %v2495 = vpop.f32.mrf.mxu0
  %v2496 = vadd.f32 0.0, %v2495
  %v2497 = vpop.f32.mrf.mxu0
  %2498 = vmatprep.mubr.f32.mxu0 0.0
  %2499 = vmatmul.mubr.f32.gmra.mxu0 %v2405
  %v2500 = vpop.f32.mrf.mxu0
  %v2501 = vadd.f32 0.0, %v2500
  %v2502 = vpop.f32.mrf.mxu0
  %2503 = vmatprep.mubr.f32.mxu0 0.0
  %2504 = vmatmul.mubr.f32.gmra.mxu0 %v2408
  %v2505 = vpop.f32.mrf.mxu0
  %v2506 = vadd.f32 0.0, %v2505
  %v2507 = vpop.f32.mrf.mxu0
  %2508 = vmatprep.mubr.f32.mxu0 0.0
  %2509 = vmatmul.mubr.f32.gmra.mxu0 %v2411
  %v2510 = vpop.f32.mrf.mxu0
  %v2511 = vadd.f32 0.0, %v2510
  %v2512 = vpop.f32.mrf.mxu0
  %2513 = vmatprep.mubr.f32.mxu0 0.0
  %2514 = vmatmul.mubr.f32.gmra.mxu0 %v2414
  %v2515 = vpop.f32.mrf.mxu0
  %v2516 = vadd.f32 0.0, %v2515
  %v2517 = vpop.f32.mrf.mxu0
  %2518 = vmatprep.mubr.f32.mxu0 0.0
  %2519 = vmatmul.mubr.f32.gmra.mxu0 %v2417
  %v2520 = vpop.f32.mrf.mxu0
  %v2521 = vadd.f32 0.0, %v2520
  %v2522 = vpop.f32.mrf.mxu0
  %2523 = vdwg.mxu0
  %v2524 = vmax.f32 %v2486, 0.0
  %v2525 = vmax.f32 %v2491, 0.0
  %v2526 = vmax.f32 %v2496, 0.0
  %v2527 = vmax.f32 %v2501, 0.0
  %v2528 = vmax.f32 %v2506, 0.0
  %v2529 = vmax.f32 %v2511, 0.0
  %v2530 = vmax.f32 %v2516, 0.0
  %v2531 = vmax.f32 %v2521, 0.0
  %v2532 = vmax.f32 %v2524, %v2526
  %v2533 = vmax.f32 %v2525, %v2527
  %v2534 = vmax.f32 %v2532, %v2528
  %v2535 = vmax.f32 %v2533, %v2529
  %v2536 = vmax.f32 %v2534, %v2530
  %v2537 = vmax.f32 %v2535, %v2531
  %2538 = vst [vmem:[#allocation3 + $0xb0] sm:$0xff] %v2536
  %2539 = vst [vmem:[#allocation3 + $0xb8] sm:$0xff] %v2537
  %2540 = vst [vmem:[#allocation3 + $0xc0] sm:$0xff] %v33
  %v2541 = vld [vmem:[%s3] sm:$0xff]
  %v2542 = vld [vmem:[%s3 + $0x8] sm:$0xff]
  %v2543 = vld [vmem:[%s3 + $0x10] sm:$0xff]
  %v2544 = vld [vmem:[%s3 + $0x18] sm:$0xff]
  %v2545 = vld [vmem:[%s3 + $0x20] sm:$0xff]
  %v2546 = vld [vmem:[%s3 + $0x28] sm:$0xff]
  %v2547 = vld [vmem:[%s3 + $0x30] sm:$0xff]
  %v2548 = vld [vmem:[%s3 + $0x38] sm:$0xff]
  %v2549 = vld [vmem:[%s3 + $0x40] sm:$0xff]
  %v2550 = vld [vmem:[%s3 + $0x48] sm:$0xff]
  %v2551 = vld [vmem:[%s3 + $0x50] sm:$0xff]
  %v2552 = vld [vmem:[%s3 + $0x58] sm:$0xff]
  %v2553 = vld [vmem:[%s3 + $0x60] sm:$0xff]
  %v2554 = vld [vmem:[%s3 + $0x68] sm:$0xff]
  %v2555 = vld [vmem:[%s3 + $0x70] sm:$0xff]
  %v2556 = vld [vmem:[%s3 + $0x78] sm:$0xff]
  %v2557 = vld [vmem:[#allocation3] sm:$0xff]
  %v2558 = vld [vmem:[#allocation3 + $0x8] sm:$0xff]
  %v2559 = vld [vmem:[#allocation3 + $0x10] sm:$0xff]
  %v2560 = vld [vmem:[#allocation3 + $0x18] sm:$0xff]
  %v2561 = vld [vmem:[#allocation3 + $0x20] sm:$0xff]
  %v2562 = vld [vmem:[#allocation3 + $0x28] sm:$0xff]
  %v2563 = vld [vmem:[#allocation3 + $0x30] sm:$0xff]
  %v2564 = vld [vmem:[#allocation3 + $0x38] sm:$0xff]
  %v2565 = vld [vmem:[#allocation3 + $0x40] sm:$0xff]
  %v2566 = vld [vmem:[#allocation3 + $0x48] sm:$0xff]
  %v2567 = vld [vmem:[#allocation3 + $0x50] sm:$0xff]
  %v2568 = vld [vmem:[#allocation3 + $0x58] sm:$0xff]
  %v2569 = vld [vmem:[#allocation3 + $0x60] sm:$0xff]
  %v2570 = vld [vmem:[#allocation3 + $0x68] sm:$0xff]
  %v2571 = vld [vmem:[#allocation3 + $0x70] sm:$0xff]
  %v2572 = vld [vmem:[#allocation3 + $0x78] sm:$0xff]
  %v2573 = vld [vmem:[#allocation3 + $0x80] sm:$0xff]
  %v2574 = vld [vmem:[#allocation3 + $0x88] sm:$0xff]
  %v2575 = vld [vmem:[#allocation3 + $0x90] sm:$0xff]
  %v2576 = vld [vmem:[#allocation3 + $0x98] sm:$0xff]
  %v2577 = vld [vmem:[#allocation3 + $0xa0] sm:$0xff]
  %v2578 = vld [vmem:[#allocation3 + $0xa8] sm:$0xff]
  %v2579 = vld [vmem:[#allocation3 + $0xb0] sm:$0xff]
  %v2580 = vld [vmem:[#allocation3 + $0xb8] sm:$0xff]
  %v2581 = vld [vmem:[#allocation3 + $0xc0] sm:$0xff]
  %v2583 = vsel %vm51, %v2542, 0
  %v2586 = vsel %vm51, %v2544, 0
  %v2589 = vsel %vm51, %v2546, 0
  %v2592 = vsel %vm51, %v2548, 0
  %v2595 = vsel %vm51, %v2550, 0
  %v2598 = vsel %vm51, %v2552, 0
  %v2601 = vsel %vm51, %v2554, 0
  %v2604 = vsel %vm51, %v2556, 0
  %2606 = vmatprep.subr.mxu0 0.0
  %2607 = vmatpush1.msra.mxu0 %v2572
  %2608 = vmatprep.subr.mxu0 0.0
  %2609 = vmatpush1.msra.mxu0 %v2571
  %2610 = vmatprep.subr.mxu0 0.0
  %2611 = vmatpush1.msra.mxu0 %v2570
  %2612 = vmatprep.subr.mxu0 0.0
  %2613 = vmatpush1.msra.mxu0 %v2569
  %2614 = vmatprep.subr.mxu0 0.0
  %2615 = vmatpush1.msra.mxu0 %v2568
  %2616 = vmatprep.subr.mxu0 0.0
  %2617 = vmatpush1.msra.mxu0 %v2567
  %2618 = vmatprep.subr.mxu0 0.0
  %2619 = vmatpush1.msra.mxu0 %v2566
  %2620 = vmatprep.subr.mxu0 0.0
  %2621 = vmatpush1.msra.mxu0 %v2565
  %2622 = vmatprep.subr.mxu0 0.0
  %2623 = vmatpush1.msra.mxu0 %v2564
  %2624 = vmatprep.subr.mxu0 0.0
  %2625 = vmatpush1.msra.mxu0 %v2563
  %2626 = vmatprep.subr.mxu0 0.0
  %2627 = vmatpush1.msra.mxu0 %v2562
  %2628 = vmatprep.subr.mxu0 0.0
  %2629 = vmatpush1.msra.mxu0 %v2561
  %2630 = vmatprep.subr.mxu0 0.0
  %2631 = vmatpush1.msra.mxu0 %v2560
  %2632 = vmatprep.subr.mxu0 0.0
  %2633 = vmatpush1.msra.mxu0 %v2559
  %2634 = vmatprep.subr.mxu0 0.0
  %2635 = vmatpush1.msra.mxu0 %v2558
  %2636 = vmatprep.subr.mxu0 0.0
  %2637 = vmatpush1.msra.mxu0 %v2557
  %2638 = vmatprep.subr.mxu0 0.0
  %2639 = vmatpush2.msra.mxu0 0.0
  %2640 = vmatprep.subr.mxu0 0.0
  %2641 = vmatpush2.msra.mxu0 0.0
  %2642 = vmatprep.subr.mxu0 0.0
  %2643 = vmatpush2.msra.mxu0 0.0
  %2644 = vmatprep.subr.mxu0 0.0
  %2645 = vmatpush2.msra.mxu0 0.0
  %2646 = vmatprep.subr.mxu0 0.0
  %2647 = vmatpush2.msra.mxu0 0.0
  %2648 = vmatprep.subr.mxu0 0.0
  %2649 = vmatpush2.msra.mxu0 0.0
  %2650 = vmatprep.subr.mxu0 0.0
  %2651 = vmatpush2.msra.mxu0 0.0
  %2652 = vmatprep.subr.mxu0 0.0
  %2653 = vmatpush2.msra.mxu0 %v2581
  %2654 = vmatprep.subr.mxu0 0.0
  %2655 = vmatpush2.msra.mxu0 %v2580
  %2656 = vmatprep.subr.mxu0 0.0
  %2657 = vmatpush2.msra.mxu0 %v2579
  %2658 = vmatprep.subr.mxu0 0.0
  %2659 = vmatpush2.msra.mxu0 %v2578
  %2660 = vmatprep.subr.mxu0 0.0
  %2661 = vmatpush2.msra.mxu0 %v2577
  %2662 = vmatprep.subr.mxu0 0.0
  %2663 = vmatpush2.msra.mxu0 %v2576
  %2664 = vmatprep.subr.mxu0 0.0
  %2665 = vmatpush2.msra.mxu0 %v2575
  %2666 = vmatprep.subr.mxu0 0.0
  %2667 = vmatpush2.msra.mxu0 %v2574
  %2668 = vmatprep.subr.mxu0 0.0
  %2669 = vmatpush2.msra.mxu0 %v2573
  %2670 = vmatprep.mubr.f32.mxu0 %v2583
  %2671 = vmatmul.mubr.f32.gmra.mxu0 %v2541
  %v2672 = vpop.f32.mrf.mxu0
  %v2673 = vadd.f32 0.0, %v2672
  %v2674 = vpop.f32.mrf.mxu0
  %2675 = vmatprep.mubr.f32.mxu0 %v2586
  %2676 = vmatmul.mubr.f32.gmra.mxu0 %v2543
  %v2677 = vpop.f32.mrf.mxu0
  %v2678 = vadd.f32 0.0, %v2677
  %v2679 = vpop.f32.mrf.mxu0
  %2680 = vmatprep.mubr.f32.mxu0 %v2589
  %2681 = vmatmul.mubr.f32.gmra.mxu0 %v2545
  %v2682 = vpop.f32.mrf.mxu0
  %v2683 = vadd.f32 0.0, %v2682
  %v2684 = vpop.f32.mrf.mxu0
  %2685 = vmatprep.mubr.f32.mxu0 %v2592
  %2686 = vmatmul.mubr.f32.gmra.mxu0 %v2547
  %v2687 = vpop.f32.mrf.mxu0
  %v2688 = vadd.f32 0.0, %v2687
  %v2689 = vpop.f32.mrf.mxu0
  %2690 = vmatprep.mubr.f32.mxu0 %v2595
  %2691 = vmatmul.mubr.f32.gmra.mxu0 %v2549
  %v2692 = vpop.f32.mrf.mxu0
  %v2693 = vadd.f32 0.0, %v2692
  %v2694 = vpop.f32.mrf.mxu0
  %2695 = vmatprep.mubr.f32.mxu0 %v2598
  %2696 = vmatmul.mubr.f32.gmra.mxu0 %v2551
  %v2697 = vpop.f32.mrf.mxu0
  %v2698 = vadd.f32 0.0, %v2697
  %v2699 = vpop.f32.mrf.mxu0
  %2700 = vmatprep.mubr.f32.mxu0 %v2601
  %2701 = vmatmul.mubr.f32.gmra.mxu0 %v2553
  %v2702 = vpop.f32.mrf.mxu0
  %v2703 = vadd.f32 0.0, %v2702
  %v2704 = vpop.f32.mrf.mxu0
  %2705 = vmatprep.mubr.f32.mxu0 %v2604
  %2706 = vmatmul.mubr.f32.gmra.mxu0 %v2555
  %v2707 = vpop.f32.mrf.mxu0
  %v2708 = vadd.f32 0.0, %v2707
  %v2709 = vpop.f32.mrf.mxu0
  %2710 = vdwg.mxu0
  %v2711 = vmax.f32 %v2673, 0.0
  %v2712 = vmax.f32 %v2678, 0.0
  %v2713 = vmax.f32 %v2683, 0.0
  %v2714 = vmax.f32 %v2688, 0.0
  %v2715 = vmax.f32 %v2693, 0.0
  %v2716 = vmax.f32 %v2698, 0.0
  %v2717 = vmax.f32 %v2703, 0.0
  %v2718 = vmax.f32 %v2708, 0.0
  %v2719 = vld [vmem:[%s4] sm:$0xff]
  %v2720 = vld [vmem:[%s4 + $0x8] sm:$0xff]
  %v2721 = vld [vmem:[%s4 + $0x10] sm:$0xff]
  %v2722 = vld [vmem:[%s4 + $0x18] sm:$0xff]
  %v2723 = vld [vmem:[%s5] sm:$0xff]
  %v2724 = vld [vmem:[%s5 + $0x8] sm:$0xff]
  %v2725 = vld [vmem:[%s5 + $0x10] sm:$0xff]
  %v2726 = vld [vmem:[%s5 + $0x18] sm:$0xff]
  %2728 = vset.pattern.permute.xlu0 0
  %2729 = vperm.xlu0 %2728, %v2723
  %v2730 = vpop.permute.xlu0 %2729
  %2733 = vset.pattern.permute.xlu0 0
  %2734 = vperm.xlu0 %2733, %v2724
  %v2735 = vpop.permute.xlu0 %2734
  %2738 = vset.pattern.permute.xlu0 0
  %2739 = vperm.xlu0 %2738, %v2725
  %v2740 = vpop.permute.xlu0 %2739
  %2743 = vset.pattern.permute.xlu0 0
  %2744 = vperm.xlu0 %2743, %v2726
  %v2745 = vpop.permute.xlu0 %2744
  %vm2747 = vcmask 523264
  %v2749 = vsel %vm2747, %v2719, 0
  %v2752 = vsel %vm2747, %v2720, 0
  %v2755 = vsel %vm2747, %v2721, 0
  %v2758 = vsel %vm2747, %v2722, 0
  %2760 = vmatprep.subr.mxu0 0.0
  %2761 = vmatpush1.msra.mxu0 0.0
  %2762 = vmatprep.subr.mxu0 0.0
  %2763 = vmatpush1.msra.mxu0 0.0
  %2764 = vmatprep.subr.mxu0 0.0
  %2765 = vmatpush1.msra.mxu0 0.0
  %2766 = vmatprep.subr.mxu0 0.0
  %2767 = vmatpush1.msra.mxu0 0.0
  %2768 = vmatprep.subr.mxu0 0.0
  %2769 = vmatpush1.msra.mxu0 0.0
  %2770 = vmatprep.subr.mxu0 0.0
  %2771 = vmatpush1.msra.mxu0 0.0
  %2772 = vmatprep.subr.mxu0 0.0
  %2773 = vmatpush1.msra.mxu0 0.0
  %2774 = vmatprep.subr.mxu0 0.0
  %2775 = vmatpush1.msra.mxu0 0.0
  %2776 = vmatprep.subr.mxu0 0.0
  %2777 = vmatpush1.msra.mxu0 %v2718
  %2778 = vmatprep.subr.mxu0 0.0
  %2779 = vmatpush1.msra.mxu0 %v2717
  %2780 = vmatprep.subr.mxu0 0.0
  %2781 = vmatpush1.msra.mxu0 %v2716
  %2782 = vmatprep.subr.mxu0 0.0
  %2783 = vmatpush1.msra.mxu0 %v2715
  %2784 = vmatprep.subr.mxu0 0.0
  %2785 = vmatpush1.msra.mxu0 %v2714
  %2786 = vmatprep.subr.mxu0 0.0
  %2787 = vmatpush1.msra.mxu0 %v2713
  %2788 = vmatprep.subr.mxu0 0.0
  %2789 = vmatpush1.msra.mxu0 %v2712
  %2790 = vmatprep.subr.mxu0 0.0
  %2791 = vmatpush1.msra.mxu0 %v2711
  %2792 = vmatprep.subr.mxu0 0.0
  %2793 = vmatpush2.msra.mxu0 0.0
  %2794 = vmatprep.subr.mxu0 0.0
  %2795 = vmatpush2.msra.mxu0 0.0
  %2796 = vmatprep.subr.mxu0 0.0
  %2797 = vmatpush2.msra.mxu0 0.0
  %2798 = vmatprep.subr.mxu0 0.0
  %2799 = vmatpush2.msra.mxu0 0.0
  %2800 = vmatprep.subr.mxu0 0.0
  %2801 = vmatpush2.msra.mxu0 0.0
  %2802 = vmatprep.subr.mxu0 0.0
  %2803 = vmatpush2.msra.mxu0 0.0
  %2804 = vmatprep.subr.mxu0 0.0
  %2805 = vmatpush2.msra.mxu0 0.0
  %2806 = vmatprep.subr.mxu0 0.0
  %2807 = vmatpush2.msra.mxu0 0.0
  %2808 = vmatprep.subr.mxu0 0.0
  %2809 = vmatpush2.msra.mxu0 0.0
  %2810 = vmatprep.subr.mxu0 0.0
  %2811 = vmatpush2.msra.mxu0 0.0
  %2812 = vmatprep.subr.mxu0 0.0
  %2813 = vmatpush2.msra.mxu0 0.0
  %2814 = vmatprep.subr.mxu0 0.0
  %2815 = vmatpush2.msra.mxu0 0.0
  %2816 = vmatprep.subr.mxu0 0.0
  %2817 = vmatpush2.msra.mxu0 0.0
  %2818 = vmatprep.subr.mxu0 0.0
  %2819 = vmatpush2.msra.mxu0 0.0
  %2820 = vmatprep.subr.mxu0 0.0
  %2821 = vmatpush2.msra.mxu0 0.0
  %2822 = vmatprep.subr.mxu0 0.0
  %2823 = vmatpush2.msra.mxu0 0.0
  %2824 = vmatprep.mubr.f32.mxu0 0.0
  %2825 = vmatmul.mubr.f32.gmra.mxu0 %v2749
  %v2826 = vpop.f32.mrf.mxu0
  %v2827 = vadd.f32 %v2730, %v2826
  %v2828 = vpop.f32.mrf.mxu0
  %2829 = vmatprep.mubr.f32.mxu0 0.0
  %2830 = vmatmul.mubr.f32.gmra.mxu0 %v2752
  %v2831 = vpop.f32.mrf.mxu0
  %v2832 = vadd.f32 %v2735, %v2831
  %v2833 = vpop.f32.mrf.mxu0
  %2834 = vmatprep.mubr.f32.mxu0 0.0
  %2835 = vmatmul.mubr.f32.gmra.mxu0 %v2755
  %v2836 = vpop.f32.mrf.mxu0
  %v2837 = vadd.f32 %v2740, %v2836
  %v2838 = vpop.f32.mrf.mxu0
  %2839 = vmatprep.mubr.f32.mxu0 0.0
  %2840 = vmatmul.mubr.f32.gmra.mxu0 %v2758
  %v2841 = vpop.f32.mrf.mxu0
  %v2842 = vadd.f32 %v2745, %v2841
  %v2843 = vpop.f32.mrf.mxu0
  %2844 = vdwg.mxu0
  %v2845 = vmax.f32 %v2827, 0.0
  %v2846 = vmax.f32 %v2832, 0.0
  %v2847 = vmax.f32 %v2837, 0.0
  %v2848 = vmax.f32 %v2842, 0.0
  %v2849 = vld [vmem:[%s6] sm:$0xff]
  %v2850 = vld [vmem:[%s7] sm:$0xff]
  %2852 = vset.pattern.permute.xlu0 0
  %2853 = vperm.xlu0 %2852, %v2850
  %v2854 = vpop.permute.xlu0 %2853
  %vm2856 = vcmask 261120
  %v2858 = vsel %vm2856, %v2849, 0
  %2860 = vmatprep.subr.mxu0 0.0
  %2861 = vmatpush1.msra.mxu0 0.0
  %2862 = vmatprep.subr.mxu0 0.0
  %2863 = vmatpush1.msra.mxu0 0.0
  %2864 = vmatprep.subr.mxu0 0.0
  %2865 = vmatpush1.msra.mxu0 0.0
  %2866 = vmatprep.subr.mxu0 0.0
  %2867 = vmatpush1.msra.mxu0 0.0
  %2868 = vmatprep.subr.mxu0 0.0
  %2869 = vmatpush1.msra.mxu0 0.0
  %2870 = vmatprep.subr.mxu0 0.0
  %2871 = vmatpush1.msra.mxu0 0.0
  %2872 = vmatprep.subr.mxu0 0.0
  %2873 = vmatpush1.msra.mxu0 0.0
  %2874 = vmatprep.subr.mxu0 0.0
  %2875 = vmatpush1.msra.mxu0 0.0
  %2876 = vmatprep.subr.mxu0 0.0
  %2877 = vmatpush1.msra.mxu0 0.0
  %2878 = vmatprep.subr.mxu0 0.0
  %2879 = vmatpush1.msra.mxu0 0.0
  %2880 = vmatprep.subr.mxu0 0.0
  %2881 = vmatpush1.msra.mxu0 0.0
  %2882 = vmatprep.subr.mxu0 0.0
  %2883 = vmatpush1.msra.mxu0 0.0
  %2884 = vmatprep.subr.mxu0 0.0
  %2885 = vmatpush1.msra.mxu0 %v2848
  %2886 = vmatprep.subr.mxu0 0.0
  %2887 = vmatpush1.msra.mxu0 %v2847
  %2888 = vmatprep.subr.mxu0 0.0
  %2889 = vmatpush1.msra.mxu0 %v2846
  %2890 = vmatprep.subr.mxu0 0.0
  %2891 = vmatpush1.msra.mxu0 %v2845
  %2892 = vmatprep.subr.mxu0 0.0
  %2893 = vmatpush2.msra.mxu0 0.0
  %2894 = vmatprep.subr.mxu0 0.0
  %2895 = vmatpush2.msra.mxu0 0.0
  %2896 = vmatprep.subr.mxu0 0.0
  %2897 = vmatpush2.msra.mxu0 0.0
  %2898 = vmatprep.subr.mxu0 0.0
  %2899 = vmatpush2.msra.mxu0 0.0
  %2900 = vmatprep.subr.mxu0 0.0
  %2901 = vmatpush2.msra.mxu0 0.0
  %2902 = vmatprep.subr.mxu0 0.0
  %2903 = vmatpush2.msra.mxu0 0.0
  %2904 = vmatprep.subr.mxu0 0.0
  %2905 = vmatpush2.msra.mxu0 0.0
  %2906 = vmatprep.subr.mxu0 0.0
  %2907 = vmatpush2.msra.mxu0 0.0
  %2908 = vmatprep.subr.mxu0 0.0
  %2909 = vmatpush2.msra.mxu0 0.0
  %2910 = vmatprep.subr.mxu0 0.0
  %2911 = vmatpush2.msra.mxu0 0.0
  %2912 = vmatprep.subr.mxu0 0.0
  %2913 = vmatpush2.msra.mxu0 0.0
  %2914 = vmatprep.subr.mxu0 0.0
  %2915 = vmatpush2.msra.mxu0 0.0
  %2916 = vmatprep.subr.mxu0 0.0
  %2917 = vmatpush2.msra.mxu0 0.0
  %2918 = vmatprep.subr.mxu0 0.0
  %2919 = vmatpush2.msra.mxu0 0.0
  %2920 = vmatprep.subr.mxu0 0.0
  %2921 = vmatpush2.msra.mxu0 0.0
  %2922 = vmatprep.subr.mxu0 0.0
  %2923 = vmatpush2.msra.mxu0 0.0
  %2924 = vmatprep.mubr.f32.mxu0 0.0
  %2925 = vmatmul.mubr.f32.gmra.mxu0 %v2858
  %v2926 = vpop.f32.mrf.mxu0
  %v2927 = vadd.f32 %v2854, %v2926
  %v2928 = vpop.f32.mrf.mxu0
  %2929 = vdwg.mxu0
  %2930 = vst [vmem:[%s8] sm:$0xff] %v2927
  // Predicated region
  $region34: #{starnet_forward.1} parent=0 // pred_check
    _
  $region35: #{starnet_forward.1} parent=0 // pred_check_branch
    %2932 = sbr.rel (0) target = $region37
  $region36: #{starnet_forward.1} parent=0 // pred_region
    _
  $region37: #{starnet_forward.1} parent=0 // pred_fallthru
    _
  // Predicated region
  $region38: #{starnet_forward.1} parent=0 // pred_check
    _
  $region39: #{starnet_forward.1} parent=0 // pred_check_branch
    %2934 = sbr.rel (0) target = $region41
  $region40: #{starnet_forward.1} parent=0 // pred_region
    _
  $region41: #{starnet_forward.1} parent=0 // pred_fallthru
    _

</llo_original>
